<compile_context>
chip_gen: v7x
topology: tpu7x:2x2x1
jax: 0.10.0
libtpu: 0.0.40
codegen_flags: <defaults>
</compile_context>

<pallas_src>
import functools

import jax
import jax.numpy as jnp
from jax.experimental import pallas as pl
from jax.experimental.pallas import tpu as pltpu


def _basic_block_kernel(x_ref, w1_ref, w2_ref, b1_ref, b2_ref, mask_ref, o_ref,
                        *, shifts, fuse_taps):
    """One batch element: out = relu(conv2(relu(conv1(x)+b1)*mask) + b2 + x).

    x_ref:    (1, Cp, L) f32  halo-padded, lane-padded input (residual source)
    w*_ref:   fused:    (Cp, 9*Cp) bf16  tap-major folded conv+BN weights
              fallback: (9, Cp, Cp) bf16
    b*_ref:   (Cp, 1)  f32  folded BN shifts
    mask_ref: (1, L)   f32  1.0 at real image pixels, 0.0 in halo / lane tail
    o_ref:    (1, Cp, L) f32
    """
    f32 = jnp.float32
    x = x_ref[0]                                   # (Cp, L) f32
    L = x.shape[-1]
    mask = mask_ref[...]                           # (1, L) f32

    def conv3x3(z, w_ref):
        # 9 spatial shifts = XLU lane rolls of the flat halo-padded image
        # (host padding guarantees interior outputs never read a wrapped value).
        rolled = [z if s == 0 else pltpu.roll(z, shift=(-s) % L, axis=1)
                  for s in shifts]
        if fuse_taps:
            # Single MXU contraction, K = 9*Cp (tap axis folded into K).
            stacked = jnp.concatenate(rolled, axis=0).astype(w_ref.dtype)
            return jnp.dot(w_ref[...], stacked, preferred_element_type=f32)
        # Fallback: per-tap matmuls; accumulator initialized with the center tap.
        acc = jnp.dot(w_ref[4], rolled[4].astype(w_ref.dtype),
                      preferred_element_type=f32)
        for t in range(9):
            if t == 4:
                continue
            acc = acc + jnp.dot(w_ref[t], rolled[t].astype(w_ref.dtype),
                                preferred_element_type=f32)
        return acc

    y = conv3x3(x, w1_ref)
    y = jnp.maximum(y + b1_ref[...], 0.0) * mask   # folded BN1 + ReLU, re-zero halo
    y = conv3x3(y, w2_ref)
    y = y + b2_ref[...] + x                        # folded BN2 + residual (f32)
    o_ref[0] = jnp.maximum(y, 0.0)                 # final ReLU


def basic_block(x_nchw, w1, bn1, w2, bn2, *, dilation=1, eps=1e-5):
    """BasicBlock forward (stride=1, residual=x, inference BatchNorm).

    x_nchw: (N, C, H, W) f32
    w1, w2: (C, C, 3, 3) conv weights (PyTorch OIHW, bias=False)
    bn1, bn2: tuples (gamma, beta, running_mean, running_var), each (C,)
    """
    gamma1, beta1, mean1, var1 = bn1
    gamma2, beta2, mean2, var2 = bn2
    N, C, H, W = x_nchw.shape
    f32, bf16 = jnp.float32, jnp.bfloat16

    p = dilation
    Hp, Wp = H + 2 * p, W + 2 * p
    HWp = Hp * Wp
    L = ((HWp + 127) // 128) * 128            # lane-dense flat spatial length
    Cp = max(8, ((C + 7) // 8) * 8)           # pad channels to the sublane granule

    # ---- fold BatchNorm (inference) into conv weights + per-channel shifts ------
    s1 = (gamma1 / jnp.sqrt(var1 + eps)).astype(f32)
    s2 = (gamma2 / jnp.sqrt(var2 + eps)).astype(f32)
    b1 = jnp.pad((beta1 - mean1 * s1).astype(f32), (0, Cp - C)).reshape(Cp, 1)
    b2 = jnp.pad((beta2 - mean2 * s2).astype(f32), (0, Cp - C)).reshape(Cp, 1)
    w1s = jnp.pad(w1.astype(f32) * s1[:, None, None, None],
                  ((0, Cp - C), (0, Cp - C), (0, 0), (0, 0)))    # (Cp, Cp, 3, 3)
    w2s = jnp.pad(w2.astype(f32) * s2[:, None, None, None],
                  ((0, Cp - C), (0, Cp - C), (0, 0), (0, 0)))

    # Fused layout (Cp, 9*Cp): column block t = ky*3+kx holds W[:, :, ky, kx].
    w1_fused = jnp.transpose(w1s, (0, 2, 3, 1)).reshape(Cp, 9 * Cp).astype(bf16)
    w2_fused = jnp.transpose(w2s, (0, 2, 3, 1)).reshape(Cp, 9 * Cp).astype(bf16)
    # Fallback per-tap layout (9, Cp, Cp).
    w1_tap = jnp.transpose(w1s, (2, 3, 0, 1)).reshape(9, Cp, Cp).astype(bf16)
    w2_tap = jnp.transpose(w2s, (2, 3, 0, 1)).reshape(9, Cp, Cp).astype(bf16)

    # ---- host-side conv zero padding + lane-dense flattening --------------------
    # TODO(synk): on the memory-bound v5e path, store x/out in HBM as bf16 (the
    #             residual add would then be bf16-rounded).
    xpad = jnp.pad(x_nchw.astype(f32),
                   ((0, 0), (0, Cp - C), (p, p), (p, p)))        # (N, Cp, Hp, Wp)
    xflat = jnp.pad(xpad.reshape(N, Cp, HWp), ((0, 0), (0, 0), (0, L - HWp)))

    hh = jnp.arange(Hp)
    ww = jnp.arange(Wp)
    interior = (((hh >= p) & (hh < Hp - p))[:, None] &
                ((ww >= p) & (ww < Wp - p))[None, :])            # (Hp, Wp) bool
    mask = jnp.pad(interior.reshape(1, HWp).astype(f32),
                   ((0, 0), (0, L - HWp)))                        # (1, L)

    # Flat lane shift of tap t = ky*3 + kx inside the halo-padded image.
    shifts = tuple((ky - 1) * dilation * Wp + (kx - 1) * dilation
                   for ky in range(3) for kx in range(3))

    # TODO(synk): large H*W needs an HW-tiled grid axis with a dilation-pixel halo
    #             and per-generation VMEM tile budgets (esp. v7x's 64 MiB); full-image
    #             (1, Cp, L) blocks are used here.
    def launch(fuse_taps, single_buffer_consts):
        w1k = w1_fused if fuse_taps else w1_tap
        w2k = w2_fused if fuse_taps else w2_tap

        def const_spec(arr):
            nd = arr.ndim
            index_map = lambda n: (0,) * nd
            if single_buffer_consts:
                # Block index is constant across the batch grid -> single buffer,
                # returning the second buffer's VMEM to the activation tiles.
                return pl.BlockSpec(arr.shape, index_map,
                                    pipeline_mode=pl.Buffered(1))
            return pl.BlockSpec(arr.shape, index_map)

        kernel = functools.partial(_basic_block_kernel, shifts=shifts,
                                   fuse_taps=fuse_taps)
        return pl.pallas_call(
            kernel,
            out_shape=jax.ShapeDtypeStruct((N, Cp, L), f32),
            grid_spec=pltpu.PrefetchScalarGridSpec(
                num_scalar_prefetch=0,
                grid=(N,),
                in_specs=[
                    pl.BlockSpec((1, Cp, L), lambda n: (n, 0, 0)),   # x
                    const_spec(w1k), const_spec(w2k),                # folded weights
                    const_spec(b1), const_spec(b2),                  # folded BN shifts
                    const_spec(mask),                                # interior mask
                ],
                out_specs=pl.BlockSpec((1, Cp, L), lambda n: (n, 0, 0)),
            ),
            compiler_params=pltpu.CompilerParams(
                dimension_semantics=("parallel",),
                vmem_limit_bytes=64 * 1024 * 1024),
        )(xflat, w1k, w2k, b1, b2, mask)

    # Fast path: fused-tap MXU contraction + single-buffered constants.
    # Fall back gracefully if a fast-path feature is unavailable.
    out = None
    last_err = None
    for fuse_taps, single_buffer in ((True, True), (True, False), (False, False)):
        try:
            out = launch(fuse_taps, single_buffer)
            break
        except Exception as err:   # capability probe; both paths are numerically equal
            last_err = err
    if out is None:
        raise last_err

    # Crop: drop the lane tail, the spatial halo and the channel padding.
    out = out[:, :C, :HWp].reshape(N, C, Hp, Wp)[:, :, p:p + H, p:p + W]
    return out


def _reference(x, w1, bn1, w2, bn2, *, dilation=1, eps=1e-5):
    """Pure-JAX reference mirroring the PyTorch BasicBlock.forward (eval mode)."""
    gamma1, beta1, mean1, var1 = bn1
    gamma2, beta2, mean2, var2 = bn2
    dn = ("NCHW", "OIHW", "NCHW")
    p = dilation

    def conv(z, w):
        return jax.lax.conv_general_dilated(
            z, w, window_strides=(1, 1), padding=[(p, p), (p, p)],
            rhs_dilation=(dilation, dilation), dimension_numbers=dn,
            precision=jax.lax.Precision.HIGHEST)

    def bn(z, g, b, m, v):
        inv = g / jnp.sqrt(v + eps)
        return z * inv[None, :, None, None] + (b - m * inv)[None, :, None, None]

    y = jnp.maximum(bn(conv(x, w1), gamma1, beta1, mean1, var1), 0.0)
    y = bn(conv(y, w2), gamma2, beta2, mean2, var2)
    return jnp.maximum(y + x, 0.0)


if __name__ == "__main__":
    key = jax.random.PRNGKey(0)
    N, C, H, W = 2, 4, 16, 16
    ks = jax.random.split(key, 11)

    x = jax.random.normal(ks[0], (N, C, H, W), dtype=jnp.float32)

    bound = 1.0 / ((C * 9) ** 0.5)
    w1 = jax.random.uniform(ks[1], (C, C, 3, 3), minval=-bound, maxval=bound,
                            dtype=jnp.float32)
    w2 = jax.random.uniform(ks[2], (C, C, 3, 3), minval=-bound, maxval=bound,
                            dtype=jnp.float32)
    bn1 = (jax.random.uniform(ks[3], (C,), minval=0.5, maxval=1.5),
           0.1 * jax.random.normal(ks[4], (C,)),
           0.1 * jax.random.normal(ks[5], (C,)),
           jax.random.uniform(ks[6], (C,), minval=0.5, maxval=1.5))
    bn2 = (jax.random.uniform(ks[7], (C,), minval=0.5, maxval=1.5),
           0.1 * jax.random.normal(ks[8], (C,)),
           0.1 * jax.random.normal(ks[9], (C,)),
           jax.random.uniform(ks[10], (C,), minval=0.5, maxval=1.5))

    out = basic_block(x, w1, bn1, w2, bn2)
    out = jax.block_until_ready(out)

    ref = _reference(x, w1, bn1, w2, bn2)
    assert out.shape == (N, C, H, W)
    max_err = float(jnp.max(jnp.abs(out - ref)))
    # bf16 matmul operands (f32 accumulation) against an f32 reference.
    assert max_err < 5e-2, f"mismatch, max_err={max_err}"

    print("KERNEL_OK")
</pallas_src>

<mosaic_0001>
module attributes {stable_mosaic.version = 11 : i64} {
  func.func @_basic_block_kernel(%arg0: i32, %arg1: memref<1x8x384xf32, #tpu.memory_space<vmem>>, %arg2: memref<8x72xbf16, #tpu.memory_space<vmem>>, %arg3: memref<8x72xbf16, #tpu.memory_space<vmem>>, %arg4: memref<8x1xf32, #tpu.memory_space<vmem>>, %arg5: memref<8x1xf32, #tpu.memory_space<vmem>>, %arg6: memref<1x384xf32, #tpu.memory_space<vmem>>, %arg7: memref<1x8x384xf32, #tpu.memory_space<vmem>>) attributes {dimension_semantics = [#tpu.dimension_semantics<parallel>], iteration_bounds = array<i64: 2>, scalar_prefetch = 0 : i64, scratch_operands = 0 : i64, tpu.core_type = #tpu.core_type<tc>, window_params = [{transform_indices = @transform_0, window_bounds = array<i64: 1, 8, 384>}, {pipeline_mode = #tpu.pipeline_mode<synchronous>, transform_indices = @transform_1, window_bounds = array<i64: 8, 72>}, {pipeline_mode = #tpu.pipeline_mode<synchronous>, transform_indices = @transform_2, window_bounds = array<i64: 8, 72>}, {pipeline_mode = #tpu.pipeline_mode<synchronous>, transform_indices = @transform_3, window_bounds = array<i64: 8, 1>}, {pipeline_mode = #tpu.pipeline_mode<synchronous>, transform_indices = @transform_4, window_bounds = array<i64: 8, 1>}, {pipeline_mode = #tpu.pipeline_mode<synchronous>, transform_indices = @transform_5, window_bounds = array<i64: 1, 384>}, {transform_indices = @transform_6, window_bounds = array<i64: 1, 8, 384>}]} {
    %c0 = arith.constant 0 : index
    %c0_0 = arith.constant 0 : index
    %c0_1 = arith.constant 0 : index
    %0 = vector.load %arg1[%c0, %c0_0, %c0_1] : memref<1x8x384xf32, #tpu.memory_space<vmem>>, vector<1x8x384xf32>
    %1 = vector.shape_cast %0 : vector<1x8x384xf32> to vector<8x384xf32>
    %c0_2 = arith.constant 0 : index
    %c0_3 = arith.constant 0 : index
    %2 = vector.load %arg6[%c0_2, %c0_3] : memref<1x384xf32, #tpu.memory_space<vmem>>, vector<1x384xf32>
    %c19_i32 = arith.constant 19 : i32
    %3 = tpu.dynamic_rotate %1 by %c19_i32 dim 1 : vector<8x384xf32>, i32 -> vector<8x384xf32>
    %c18_i32 = arith.constant 18 : i32
    %4 = tpu.dynamic_rotate %1 by %c18_i32 dim 1 : vector<8x384xf32>, i32 -> vector<8x384xf32>
    %c17_i32 = arith.constant 17 : i32
    %5 = tpu.dynamic_rotate %1 by %c17_i32 dim 1 : vector<8x384xf32>, i32 -> vector<8x384xf32>
    %c1_i32 = arith.constant 1 : i32
    %6 = tpu.dynamic_rotate %1 by %c1_i32 dim 1 : vector<8x384xf32>, i32 -> vector<8x384xf32>
    %c383_i32 = arith.constant 383 : i32
    %7 = tpu.dynamic_rotate %1 by %c383_i32 dim 1 : vector<8x384xf32>, i32 -> vector<8x384xf32>
    %c367_i32 = arith.constant 367 : i32
    %8 = tpu.dynamic_rotate %1 by %c367_i32 dim 1 : vector<8x384xf32>, i32 -> vector<8x384xf32>
    %c366_i32 = arith.constant 366 : i32
    %9 = tpu.dynamic_rotate %1 by %c366_i32 dim 1 : vector<8x384xf32>, i32 -> vector<8x384xf32>
    %c365_i32 = arith.constant 365 : i32
    %10 = tpu.dynamic_rotate %1 by %c365_i32 dim 1 : vector<8x384xf32>, i32 -> vector<8x384xf32>
    %11 = tpu.concatenate %3, %4, %5, %6, %1, %7, %8, %9, %10 in 0 : vector<8x384xf32>, vector<8x384xf32>, vector<8x384xf32>, vector<8x384xf32>, vector<8x384xf32>, vector<8x384xf32>, vector<8x384xf32>, vector<8x384xf32>, vector<8x384xf32> -> vector<72x384xf32>
    %12 = arith.truncf %11 : vector<72x384xf32> to vector<72x384xbf16>
    %c0_4 = arith.constant 0 : index
    %c0_5 = arith.constant 0 : index
    %13 = vector.load %arg2[%c0_4, %c0_5] : memref<8x72xbf16, #tpu.memory_space<vmem>>, vector<8x72xbf16>
    %cst = arith.constant dense<0.000000e+00> : vector<8x384xf32>
    %14 = tpu.matmul %13, %12, %cst {dimension_numbers = #tpu.dot_dimension_numbers<[1], [0], [0], [1], [0, 0, 1, 1], [], []>} : vector<8x72xbf16>, vector<72x384xbf16>, vector<8x384xf32> -> vector<8x384xf32>
    %c0_6 = arith.constant 0 : index
    %c0_7 = arith.constant 0 : index
    %15 = vector.load %arg4[%c0_6, %c0_7] : memref<8x1xf32, #tpu.memory_space<vmem>>, vector<8x1xf32>
    %16 = vector.broadcast %15 : vector<8x1xf32> to vector<8x384xf32>
    %17 = arith.addf %14, %16 : vector<8x384xf32>
    %cst_8 = arith.constant 0.000000e+00 : f32
    %18 = vector.broadcast %cst_8 : f32 to vector<8x384xf32>
    %19 = arith.maximumf %17, %18 : vector<8x384xf32>
    %20 = vector.broadcast %2 : vector<1x384xf32> to vector<8x384xf32>
    %21 = arith.mulf %19, %20 : vector<8x384xf32>
    %c19_i32_9 = arith.constant 19 : i32
    %22 = tpu.dynamic_rotate %21 by %c19_i32_9 dim 1 : vector<8x384xf32>, i32 -> vector<8x384xf32>
    %c18_i32_10 = arith.constant 18 : i32
    %23 = tpu.dynamic_rotate %21 by %c18_i32_10 dim 1 : vector<8x384xf32>, i32 -> vector<8x384xf32>
    %c17_i32_11 = arith.constant 17 : i32
    %24 = tpu.dynamic_rotate %21 by %c17_i32_11 dim 1 : vector<8x384xf32>, i32 -> vector<8x384xf32>
    %c1_i32_12 = arith.constant 1 : i32
    %25 = tpu.dynamic_rotate %21 by %c1_i32_12 dim 1 : vector<8x384xf32>, i32 -> vector<8x384xf32>
    %c383_i32_13 = arith.constant 383 : i32
    %26 = tpu.dynamic_rotate %21 by %c383_i32_13 dim 1 : vector<8x384xf32>, i32 -> vector<8x384xf32>
    %c367_i32_14 = arith.constant 367 : i32
    %27 = tpu.dynamic_rotate %21 by %c367_i32_14 dim 1 : vector<8x384xf32>, i32 -> vector<8x384xf32>
    %c366_i32_15 = arith.constant 366 : i32
    %28 = tpu.dynamic_rotate %21 by %c366_i32_15 dim 1 : vector<8x384xf32>, i32 -> vector<8x384xf32>
    %c365_i32_16 = arith.constant 365 : i32
    %29 = tpu.dynamic_rotate %21 by %c365_i32_16 dim 1 : vector<8x384xf32>, i32 -> vector<8x384xf32>
    %30 = tpu.concatenate %22, %23, %24, %25, %21, %26, %27, %28, %29 in 0 : vector<8x384xf32>, vector<8x384xf32>, vector<8x384xf32>, vector<8x384xf32>, vector<8x384xf32>, vector<8x384xf32>, vector<8x384xf32>, vector<8x384xf32>, vector<8x384xf32> -> vector<72x384xf32>
    %31 = arith.truncf %30 : vector<72x384xf32> to vector<72x384xbf16>
    %c0_17 = arith.constant 0 : index
    %c0_18 = arith.constant 0 : index
    %32 = vector.load %arg3[%c0_17, %c0_18] : memref<8x72xbf16, #tpu.memory_space<vmem>>, vector<8x72xbf16>
    %cst_19 = arith.constant dense<0.000000e+00> : vector<8x384xf32>
    %33 = tpu.matmul %32, %31, %cst_19 {dimension_numbers = #tpu.dot_dimension_numbers<[1], [0], [0], [1], [0, 0, 1, 1], [], []>} : vector<8x72xbf16>, vector<72x384xbf16>, vector<8x384xf32> -> vector<8x384xf32>
    %c0_20 = arith.constant 0 : index
    %c0_21 = arith.constant 0 : index
    %34 = vector.load %arg5[%c0_20, %c0_21] : memref<8x1xf32, #tpu.memory_space<vmem>>, vector<8x1xf32>
    %35 = vector.broadcast %34 : vector<8x1xf32> to vector<8x384xf32>
    %36 = arith.addf %33, %35 : vector<8x384xf32>
    %37 = arith.addf %36, %1 : vector<8x384xf32>
    %cst_22 = arith.constant 0.000000e+00 : f32
    %38 = vector.broadcast %cst_22 : f32 to vector<8x384xf32>
    %39 = arith.maximumf %37, %38 : vector<8x384xf32>
    %c0_23 = arith.constant 0 : index
    %c0_24 = arith.constant 0 : index
    %c0_25 = arith.constant 0 : index
    %40 = vector.load %arg7[%c0_23, %c0_24, %c0_25] : memref<1x8x384xf32, #tpu.memory_space<vmem>>, vector<1x8x384xf32>
    %41 = vector.shape_cast %40 : vector<1x8x384xf32> to vector<8x384xf32>
    %42 = vector.shape_cast %39 : vector<8x384xf32> to vector<1x8x384xf32>
    tpu.vector_store %arg7[%c0_23, %c0_24, %c0_25], %42 {strides = array<i32>} : memref<1x8x384xf32, #tpu.memory_space<vmem>>, vector<1x8x384xf32>,
    return
  }
  func.func @transform_0(%arg0: i32) -> (i32, i32, i32) {
    %c0_i32 = arith.constant 0 : i32
    %c0_i32_0 = arith.constant 0 : i32
    %c0_i32_1 = arith.constant 0 : i32
    return %arg0, %c0_i32, %c0_i32_0 : i32, i32, i32
  }
  func.func @transform_1(%arg0: i32) -> (i32, i32) {
    %c0_i32 = arith.constant 0 : i32
    %c0_i32_0 = arith.constant 0 : i32
    %c0_i32_1 = arith.constant 0 : i32
    return %c0_i32, %c0_i32_0 : i32, i32
  }
  func.func @transform_2(%arg0: i32) -> (i32, i32) {
    %c0_i32 = arith.constant 0 : i32
    %c0_i32_0 = arith.constant 0 : i32
    %c0_i32_1 = arith.constant 0 : i32
    return %c0_i32, %c0_i32_0 : i32, i32
  }
  func.func @transform_3(%arg0: i32) -> (i32, i32) {
    %c0_i32 = arith.constant 0 : i32
    %c0_i32_0 = arith.constant 0 : i32
    %c0_i32_1 = arith.constant 0 : i32
    return %c0_i32, %c0_i32_0 : i32, i32
  }
  func.func @transform_4(%arg0: i32) -> (i32, i32) {
    %c0_i32 = arith.constant 0 : i32
    %c0_i32_0 = arith.constant 0 : i32
    %c0_i32_1 = arith.constant 0 : i32
    return %c0_i32, %c0_i32_0 : i32, i32
  }
  func.func @transform_5(%arg0: i32) -> (i32, i32) {
    %c0_i32 = arith.constant 0 : i32
    %c0_i32_0 = arith.constant 0 : i32
    %c0_i32_1 = arith.constant 0 : i32
    return %c0_i32, %c0_i32_0 : i32, i32
  }
  func.func @transform_6(%arg0: i32) -> (i32, i32, i32) {
    %c0_i32 = arith.constant 0 : i32
    %c0_i32_0 = arith.constant 0 : i32
    %c0_i32_1 = arith.constant 0 : i32
    return %arg0, %c0_i32, %c0_i32_0 : i32, i32, i32
  }
}

module attributes {stable_mosaic.version = 11 : i64} {
  func.func @_basic_block_kernel(%arg0: i32, %arg1: memref<1x8x384xf32, #tpu.memory_space<vmem>>, %arg2: memref<8x72xbf16, #tpu.memory_space<vmem>>, %arg3: memref<8x72xbf16, #tpu.memory_space<vmem>>, %arg4: memref<8x1xf32, #tpu.memory_space<vmem>>, %arg5: memref<8x1xf32, #tpu.memory_space<vmem>>, %arg6: memref<1x384xf32, #tpu.memory_space<vmem>>, %arg7: memref<1x8x384xf32, #tpu.memory_space<vmem>>) attributes {dimension_semantics = [#tpu.dimension_semantics<parallel>], iteration_bounds = array<i64: 2>, scalar_prefetch = 0 : i64, scratch_operands = 0 : i64, tpu.core_type = #tpu.core_type<tc>, window_params = [{transform_indices = @transform_0, window_bounds = array<i64: 1, 8, 384>}, {pipeline_mode = #tpu.pipeline_mode<synchronous>, transform_indices = @transform_1, window_bounds = array<i64: 8, 72>}, {pipeline_mode = #tpu.pipeline_mode<synchronous>, transform_indices = @transform_2, window_bounds = array<i64: 8, 72>}, {pipeline_mode = #tpu.pipeline_mode<synchronous>, transform_indices = @transform_3, window_bounds = array<i64: 8, 1>}, {pipeline_mode = #tpu.pipeline_mode<synchronous>, transform_indices = @transform_4, window_bounds = array<i64: 8, 1>}, {pipeline_mode = #tpu.pipeline_mode<synchronous>, transform_indices = @transform_5, window_bounds = array<i64: 1, 384>}, {transform_indices = @transform_6, window_bounds = array<i64: 1, 8, 384>}]} {
    %c0 = arith.constant 0 : index
    %c0_0 = arith.constant 0 : index
    %c0_1 = arith.constant 0 : index
    %0 = vector.load %arg1[%c0, %c0_0, %c0_1] : memref<1x8x384xf32, #tpu.memory_space<vmem>>, vector<1x8x384xf32>
    %1 = vector.shape_cast %0 : vector<1x8x384xf32> to vector<8x384xf32>
    %c0_2 = arith.constant 0 : index
    %c0_3 = arith.constant 0 : index
    %2 = vector.load %arg6[%c0_2, %c0_3] : memref<1x384xf32, #tpu.memory_space<vmem>>, vector<1x384xf32>
    %c19_i32 = arith.constant 19 : i32
    %3 = tpu.dynamic_rotate %1 by %c19_i32 dim 1 : vector<8x384xf32>, i32 -> vector<8x384xf32>
    %c18_i32 = arith.constant 18 : i32
    %4 = tpu.dynamic_rotate %1 by %c18_i32 dim 1 : vector<8x384xf32>, i32 -> vector<8x384xf32>
    %c17_i32 = arith.constant 17 : i32
    %5 = tpu.dynamic_rotate %1 by %c17_i32 dim 1 : vector<8x384xf32>, i32 -> vector<8x384xf32>
    %c1_i32 = arith.constant 1 : i32
    %6 = tpu.dynamic_rotate %1 by %c1_i32 dim 1 : vector<8x384xf32>, i32 -> vector<8x384xf32>
    %c383_i32 = arith.constant 383 : i32
    %7 = tpu.dynamic_rotate %1 by %c383_i32 dim 1 : vector<8x384xf32>, i32 -> vector<8x384xf32>
    %c367_i32 = arith.constant 367 : i32
    %8 = tpu.dynamic_rotate %1 by %c367_i32 dim 1 : vector<8x384xf32>, i32 -> vector<8x384xf32>
    %c366_i32 = arith.constant 366 : i32
    %9 = tpu.dynamic_rotate %1 by %c366_i32 dim 1 : vector<8x384xf32>, i32 -> vector<8x384xf32>
    %c365_i32 = arith.constant 365 : i32
    %10 = tpu.dynamic_rotate %1 by %c365_i32 dim 1 : vector<8x384xf32>, i32 -> vector<8x384xf32>
    %11 = tpu.concatenate %3, %4, %5, %6, %1, %7, %8, %9, %10 in 0 : vector<8x384xf32>, vector<8x384xf32>, vector<8x384xf32>, vector<8x384xf32>, vector<8x384xf32>, vector<8x384xf32>, vector<8x384xf32>, vector<8x384xf32>, vector<8x384xf32> -> vector<72x384xf32>
    %12 = arith.truncf %11 : vector<72x384xf32> to vector<72x384xbf16>
    %c0_4 = arith.constant 0 : index
    %c0_5 = arith.constant 0 : index
    %13 = vector.load %arg2[%c0_4, %c0_5] : memref<8x72xbf16, #tpu.memory_space<vmem>>, vector<8x72xbf16>
    %cst = arith.constant dense<0.000000e+00> : vector<8x384xf32>
    %14 = tpu.matmul %13, %12, %cst {dimension_numbers = #tpu.dot_dimension_numbers<[1], [0], [0], [1], [0, 0, 1, 1], [], []>} : vector<8x72xbf16>, vector<72x384xbf16>, vector<8x384xf32> -> vector<8x384xf32>
    %c0_6 = arith.constant 0 : index
    %c0_7 = arith.constant 0 : index
    %15 = vector.load %arg4[%c0_6, %c0_7] : memref<8x1xf32, #tpu.memory_space<vmem>>, vector<8x1xf32>
    %16 = vector.broadcast %15 : vector<8x1xf32> to vector<8x384xf32>
    %17 = arith.addf %14, %16 : vector<8x384xf32>
    %cst_8 = arith.constant 0.000000e+00 : f32
    %18 = vector.broadcast %cst_8 : f32 to vector<8x384xf32>
    %19 = arith.maximumf %17, %18 : vector<8x384xf32>
    %20 = vector.broadcast %2 : vector<1x384xf32> to vector<8x384xf32>
    %21 = arith.mulf %19, %20 : vector<8x384xf32>
    %c19_i32_9 = arith.constant 19 : i32
    %22 = tpu.dynamic_rotate %21 by %c19_i32_9 dim 1 : vector<8x384xf32>, i32 -> vector<8x384xf32>
    %c18_i32_10 = arith.constant 18 : i32
    %23 = tpu.dynamic_rotate %21 by %c18_i32_10 dim 1 : vector<8x384xf32>, i32 -> vector<8x384xf32>
    %c17_i32_11 = arith.constant 17 : i32
    %24 = tpu.dynamic_rotate %21 by %c17_i32_11 dim 1 : vector<8x384xf32>, i32 -> vector<8x384xf32>
    %c1_i32_12 = arith.constant 1 : i32
    %25 = tpu.dynamic_rotate %21 by %c1_i32_12 dim 1 : vector<8x384xf32>, i32 -> vector<8x384xf32>
    %c383_i32_13 = arith.constant 383 : i32
    %26 = tpu.dynamic_rotate %21 by %c383_i32_13 dim 1 : vector<8x384xf32>, i32 -> vector<8x384xf32>
    %c367_i32_14 = arith.constant 367 : i32
    %27 = tpu.dynamic_rotate %21 by %c367_i32_14 dim 1 : vector<8x384xf32>, i32 -> vector<8x384xf32>
    %c366_i32_15 = arith.constant 366 : i32
    %28 = tpu.dynamic_rotate %21 by %c366_i32_15 dim 1 : vector<8x384xf32>, i32 -> vector<8x384xf32>
    %c365_i32_16 = arith.constant 365 : i32
    %29 = tpu.dynamic_rotate %21 by %c365_i32_16 dim 1 : vector<8x384xf32>, i32 -> vector<8x384xf32>
    %30 = tpu.concatenate %22, %23, %24, %25, %21, %26, %27, %28, %29 in 0 : vector<8x384xf32>, vector<8x384xf32>, vector<8x384xf32>, vector<8x384xf32>, vector<8x384xf32>, vector<8x384xf32>, vector<8x384xf32>, vector<8x384xf32>, vector<8x384xf32> -> vector<72x384xf32>
    %31 = arith.truncf %30 : vector<72x384xf32> to vector<72x384xbf16>
    %c0_17 = arith.constant 0 : index
    %c0_18 = arith.constant 0 : index
    %32 = vector.load %arg3[%c0_17, %c0_18] : memref<8x72xbf16, #tpu.memory_space<vmem>>, vector<8x72xbf16>
    %cst_19 = arith.constant dense<0.000000e+00> : vector<8x384xf32>
    %33 = tpu.matmul %32, %31, %cst_19 {dimension_numbers = #tpu.dot_dimension_numbers<[1], [0], [0], [1], [0, 0, 1, 1], [], []>} : vector<8x72xbf16>, vector<72x384xbf16>, vector<8x384xf32> -> vector<8x384xf32>
    %c0_20 = arith.constant 0 : index
    %c0_21 = arith.constant 0 : index
    %34 = vector.load %arg5[%c0_20, %c0_21] : memref<8x1xf32, #tpu.memory_space<vmem>>, vector<8x1xf32>
    %35 = vector.broadcast %34 : vector<8x1xf32> to vector<8x384xf32>
    %36 = arith.addf %33, %35 : vector<8x384xf32>
    %37 = arith.addf %36, %1 : vector<8x384xf32>
    %cst_22 = arith.constant 0.000000e+00 : f32
    %38 = vector.broadcast %cst_22 : f32 to vector<8x384xf32>
    %39 = arith.maximumf %37, %38 : vector<8x384xf32>
    %c0_23 = arith.constant 0 : index
    %c0_24 = arith.constant 0 : index
    %c0_25 = arith.constant 0 : index
    %40 = vector.load %arg7[%c0_23, %c0_24, %c0_25] : memref<1x8x384xf32, #tpu.memory_space<vmem>>, vector<1x8x384xf32>
    %41 = vector.shape_cast %40 : vector<1x8x384xf32> to vector<8x384xf32>
    %42 = vector.shape_cast %39 : vector<8x384xf32> to vector<1x8x384xf32>
    tpu.vector_store %arg7[%c0_23, %c0_24, %c0_25], %42 {strides = array<i32>} : memref<1x8x384xf32, #tpu.memory_space<vmem>>, vector<1x8x384xf32>,
    return
  }
  func.func @transform_0(%arg0: i32) -> (i32, i32, i32) {
    %c0_i32 = arith.constant 0 : i32
    %c0_i32_0 = arith.constant 0 : i32
    %c0_i32_1 = arith.constant 0 : i32
    return %arg0, %c0_i32, %c0_i32_0 : i32, i32, i32
  }
  func.func @transform_1(%arg0: i32) -> (i32, i32) {
    %c0_i32 = arith.constant 0 : i32
    %c0_i32_0 = arith.constant 0 : i32
    %c0_i32_1 = arith.constant 0 : i32
    return %c0_i32, %c0_i32_0 : i32, i32
  }
  func.func @transform_2(%arg0: i32) -> (i32, i32) {
    %c0_i32 = arith.constant 0 : i32
    %c0_i32_0 = arith.constant 0 : i32
    %c0_i32_1 = arith.constant 0 : i32
    return %c0_i32, %c0_i32_0 : i32, i32
  }
  func.func @transform_3(%arg0: i32) -> (i32, i32) {
    %c0_i32 = arith.constant 0 : i32
    %c0_i32_0 = arith.constant 0 : i32
    %c0_i32_1 = arith.constant 0 : i32
    return %c0_i32, %c0_i32_0 : i32, i32
  }
  func.func @transform_4(%arg0: i32) -> (i32, i32) {
    %c0_i32 = arith.constant 0 : i32
    %c0_i32_0 = arith.constant 0 : i32
    %c0_i32_1 = arith.constant 0 : i32
    return %c0_i32, %c0_i32_0 : i32, i32
  }
  func.func @transform_5(%arg0: i32) -> (i32, i32) {
    %c0_i32 = arith.constant 0 : i32
    %c0_i32_0 = arith.constant 0 : i32
    %c0_i32_1 = arith.constant 0 : i32
    return %c0_i32, %c0_i32_0 : i32, i32
  }
  func.func @transform_6(%arg0: i32) -> (i32, i32, i32) {
    %c0_i32 = arith.constant 0 : i32
    %c0_i32_0 = arith.constant 0 : i32
    %c0_i32_1 = arith.constant 0 : i32
    return %arg0, %c0_i32, %c0_i32_0 : i32, i32, i32
  }
}

module attributes {stable_mosaic.version = 11 : i64} {
  func.func @_basic_block_kernel(%arg0: i32, %arg1: memref<1x8x384xf32, #tpu.memory_space<vmem>>, %arg2: memref<9x8x8xbf16, #tpu.memory_space<vmem>>, %arg3: memref<9x8x8xbf16, #tpu.memory_space<vmem>>, %arg4: memref<8x1xf32, #tpu.memory_space<vmem>>, %arg5: memref<8x1xf32, #tpu.memory_space<vmem>>, %arg6: memref<1x384xf32, #tpu.memory_space<vmem>>, %arg7: memref<1x8x384xf32, #tpu.memory_space<vmem>>) attributes {dimension_semantics = [#tpu.dimension_semantics<parallel>], iteration_bounds = array<i64: 2>, scalar_prefetch = 0 : i64, scratch_operands = 0 : i64, tpu.core_type = #tpu.core_type<tc>, window_params = [{transform_indices = @transform_0, window_bounds = array<i64: 1, 8, 384>}, {pipeline_mode = #tpu.pipeline_mode<synchronous>, transform_indices = @transform_1, window_bounds = array<i64: 9, 8, 8>}, {pipeline_mode = #tpu.pipeline_mode<synchronous>, transform_indices = @transform_2, window_bounds = array<i64: 9, 8, 8>}, {pipeline_mode = #tpu.pipeline_mode<synchronous>, transform_indices = @transform_3, window_bounds = array<i64: 8, 1>}, {pipeline_mode = #tpu.pipeline_mode<synchronous>, transform_indices = @transform_4, window_bounds = array<i64: 8, 1>}, {pipeline_mode = #tpu.pipeline_mode<synchronous>, transform_indices = @transform_5, window_bounds = array<i64: 1, 384>}, {transform_indices = @transform_6, window_bounds = array<i64: 1, 8, 384>}]} {
    %c0 = arith.constant 0 : index
    %c0_0 = arith.constant 0 : index
    %c0_1 = arith.constant 0 : index
    %0 = vector.load %arg1[%c0, %c0_0, %c0_1] : memref<1x8x384xf32, #tpu.memory_space<vmem>>, vector<1x8x384xf32>
    %1 = vector.shape_cast %0 : vector<1x8x384xf32> to vector<8x384xf32>
    %c0_2 = arith.constant 0 : index
    %c0_3 = arith.constant 0 : index
    %2 = vector.load %arg6[%c0_2, %c0_3] : memref<1x384xf32, #tpu.memory_space<vmem>>, vector<1x384xf32>
    %c19_i32 = arith.constant 19 : i32
    %3 = tpu.dynamic_rotate %1 by %c19_i32 dim 1 : vector<8x384xf32>, i32 -> vector<8x384xf32>
    %c18_i32 = arith.constant 18 : i32
    %4 = tpu.dynamic_rotate %1 by %c18_i32 dim 1 : vector<8x384xf32>, i32 -> vector<8x384xf32>
    %c17_i32 = arith.constant 17 : i32
    %5 = tpu.dynamic_rotate %1 by %c17_i32 dim 1 : vector<8x384xf32>, i32 -> vector<8x384xf32>
    %c1_i32 = arith.constant 1 : i32
    %6 = tpu.dynamic_rotate %1 by %c1_i32 dim 1 : vector<8x384xf32>, i32 -> vector<8x384xf32>
    %c383_i32 = arith.constant 383 : i32
    %7 = tpu.dynamic_rotate %1 by %c383_i32 dim 1 : vector<8x384xf32>, i32 -> vector<8x384xf32>
    %c367_i32 = arith.constant 367 : i32
    %8 = tpu.dynamic_rotate %1 by %c367_i32 dim 1 : vector<8x384xf32>, i32 -> vector<8x384xf32>
    %c366_i32 = arith.constant 366 : i32
    %9 = tpu.dynamic_rotate %1 by %c366_i32 dim 1 : vector<8x384xf32>, i32 -> vector<8x384xf32>
    %c365_i32 = arith.constant 365 : i32
    %10 = tpu.dynamic_rotate %1 by %c365_i32 dim 1 : vector<8x384xf32>, i32 -> vector<8x384xf32>
    %c4 = arith.constant 4 : index
    %c0_4 = arith.constant 0 : index
    %c0_5 = arith.constant 0 : index
    %11 = vector.load %arg2[%c4, %c0_4, %c0_5] : memref<9x8x8xbf16, #tpu.memory_space<vmem>>, vector<1x8x8xbf16>
    %12 = vector.shape_cast %11 : vector<1x8x8xbf16> to vector<8x8xbf16>
    %13 = arith.truncf %1 : vector<8x384xf32> to vector<8x384xbf16>
    %cst = arith.constant dense<0.000000e+00> : vector<8x384xf32>
    %14 = tpu.matmul %12, %13, %cst {dimension_numbers = #tpu.dot_dimension_numbers<[1], [0], [0], [1], [0, 0, 1, 1], [], []>} : vector<8x8xbf16>, vector<8x384xbf16>, vector<8x384xf32> -> vector<8x384xf32>
    %c0_6 = arith.constant 0 : index
    %c0_7 = arith.constant 0 : index
    %c0_8 = arith.constant 0 : index
    %15 = vector.load %arg2[%c0_6, %c0_7, %c0_8] : memref<9x8x8xbf16, #tpu.memory_space<vmem>>, vector<1x8x8xbf16>
    %16 = vector.shape_cast %15 : vector<1x8x8xbf16> to vector<8x8xbf16>
    %17 = arith.truncf %3 : vector<8x384xf32> to vector<8x384xbf16>
    %cst_9 = arith.constant dense<0.000000e+00> : vector<8x384xf32>
    %18 = tpu.matmul %16, %17, %cst_9 {dimension_numbers = #tpu.dot_dimension_numbers<[1], [0], [0], [1], [0, 0, 1, 1], [], []>} : vector<8x8xbf16>, vector<8x384xbf16>, vector<8x384xf32> -> vector<8x384xf32>
    %19 = arith.addf %14, %18 : vector<8x384xf32>
    %c1 = arith.constant 1 : index
    %c0_10 = arith.constant 0 : index
    %c0_11 = arith.constant 0 : index
    %20 = vector.load %arg2[%c1, %c0_10, %c0_11] : memref<9x8x8xbf16, #tpu.memory_space<vmem>>, vector<1x8x8xbf16>
    %21 = vector.shape_cast %20 : vector<1x8x8xbf16> to vector<8x8xbf16>
    %22 = arith.truncf %4 : vector<8x384xf32> to vector<8x384xbf16>
    %cst_12 = arith.constant dense<0.000000e+00> : vector<8x384xf32>
    %23 = tpu.matmul %21, %22, %cst_12 {dimension_numbers = #tpu.dot_dimension_numbers<[1], [0], [0], [1], [0, 0, 1, 1], [], []>} : vector<8x8xbf16>, vector<8x384xbf16>, vector<8x384xf32> -> vector<8x384xf32>
    %24 = arith.addf %19, %23 : vector<8x384xf32>
    %c2 = arith.constant 2 : index
    %c0_13 = arith.constant 0 : index
    %c0_14 = arith.constant 0 : index
    %25 = vector.load %arg2[%c2, %c0_13, %c0_14] : memref<9x8x8xbf16, #tpu.memory_space<vmem>>, vector<1x8x8xbf16>
    %26 = vector.shape_cast %25 : vector<1x8x8xbf16> to vector<8x8xbf16>
    %27 = arith.truncf %5 : vector<8x384xf32> to vector<8x384xbf16>
    %cst_15 = arith.constant dense<0.000000e+00> : vector<8x384xf32>
    %28 = tpu.matmul %26, %27, %cst_15 {dimension_numbers = #tpu.dot_dimension_numbers<[1], [0], [0], [1], [0, 0, 1, 1], [], []>} : vector<8x8xbf16>, vector<8x384xbf16>, vector<8x384xf32> -> vector<8x384xf32>
    %29 = arith.addf %24, %28 : vector<8x384xf32>
    %c3 = arith.constant 3 : index
    %c0_16 = arith.constant 0 : index
    %c0_17 = arith.constant 0 : index
    %30 = vector.load %arg2[%c3, %c0_16, %c0_17] : memref<9x8x8xbf16, #tpu.memory_space<vmem>>, vector<1x8x8xbf16>
    %31 = vector.shape_cast %30 : vector<1x8x8xbf16> to vector<8x8xbf16>
    %32 = arith.truncf %6 : vector<8x384xf32> to vector<8x384xbf16>
    %cst_18 = arith.constant dense<0.000000e+00> : vector<8x384xf32>
    %33 = tpu.matmul %31, %32, %cst_18 {dimension_numbers = #tpu.dot_dimension_numbers<[1], [0], [0], [1], [0, 0, 1, 1], [], []>} : vector<8x8xbf16>, vector<8x384xbf16>, vector<8x384xf32> -> vector<8x384xf32>
    %34 = arith.addf %29, %33 : vector<8x384xf32>
    %c5 = arith.constant 5 : index
    %c0_19 = arith.constant 0 : index
    %c0_20 = arith.constant 0 : index
    %35 = vector.load %arg2[%c5, %c0_19, %c0_20] : memref<9x8x8xbf16, #tpu.memory_space<vmem>>, vector<1x8x8xbf16>
    %36 = vector.shape_cast %35 : vector<1x8x8xbf16> to vector<8x8xbf16>
    %37 = arith.truncf %7 : vector<8x384xf32> to vector<8x384xbf16>
    %cst_21 = arith.constant dense<0.000000e+00> : vector<8x384xf32>
    %38 = tpu.matmul %36, %37, %cst_21 {dimension_numbers = #tpu.dot_dimension_numbers<[1], [0], [0], [1], [0, 0, 1, 1], [], []>} : vector<8x8xbf16>, vector<8x384xbf16>, vector<8x384xf32> -> vector<8x384xf32>
    %39 = arith.addf %34, %38 : vector<8x384xf32>
    %c6 = arith.constant 6 : index
    %c0_22 = arith.constant 0 : index
    %c0_23 = arith.constant 0 : index
    %40 = vector.load %arg2[%c6, %c0_22, %c0_23] : memref<9x8x8xbf16, #tpu.memory_space<vmem>>, vector<1x8x8xbf16>
    %41 = vector.shape_cast %40 : vector<1x8x8xbf16> to vector<8x8xbf16>
    %42 = arith.truncf %8 : vector<8x384xf32> to vector<8x384xbf16>
    %cst_24 = arith.constant dense<0.000000e+00> : vector<8x384xf32>
    %43 = tpu.matmul %41, %42, %cst_24 {dimension_numbers = #tpu.dot_dimension_numbers<[1], [0], [0], [1], [0, 0, 1, 1], [], []>} : vector<8x8xbf16>, vector<8x384xbf16>, vector<8x384xf32> -> vector<8x384xf32>
    %44 = arith.addf %39, %43 : vector<8x384xf32>
    %c7 = arith.constant 7 : index
    %c0_25 = arith.constant 0 : index
    %c0_26 = arith.constant 0 : index
    %45 = vector.load %arg2[%c7, %c0_25, %c0_26] : memref<9x8x8xbf16, #tpu.memory_space<vmem>>, vector<1x8x8xbf16>
    %46 = vector.shape_cast %45 : vector<1x8x8xbf16> to vector<8x8xbf16>
    %47 = arith.truncf %9 : vector<8x384xf32> to vector<8x384xbf16>
    %cst_27 = arith.constant dense<0.000000e+00> : vector<8x384xf32>
    %48 = tpu.matmul %46, %47, %cst_27 {dimension_numbers = #tpu.dot_dimension_numbers<[1], [0], [0], [1], [0, 0, 1, 1], [], []>} : vector<8x8xbf16>, vector<8x384xbf16>, vector<8x384xf32> -> vector<8x384xf32>
    %49 = arith.addf %44, %48 : vector<8x384xf32>
    %c8 = arith.constant 8 : index
    %c0_28 = arith.constant 0 : index
    %c0_29 = arith.constant 0 : index
    %50 = vector.load %arg2[%c8, %c0_28, %c0_29] : memref<9x8x8xbf16, #tpu.memory_space<vmem>>, vector<1x8x8xbf16>
    %51 = vector.shape_cast %50 : vector<1x8x8xbf16> to vector<8x8xbf16>
    %52 = arith.truncf %10 : vector<8x384xf32> to vector<8x384xbf16>
    %cst_30 = arith.constant dense<0.000000e+00> : vector<8x384xf32>
    %53 = tpu.matmul %51, %52, %cst_30 {dimension_numbers = #tpu.dot_dimension_numbers<[1], [0], [0], [1], [0, 0, 1, 1], [], []>} : vector<8x8xbf16>, vector<8x384xbf16>, vector<8x384xf32> -> vector<8x384xf32>
    %54 = arith.addf %49, %53 : vector<8x384xf32>
    %c0_31 = arith.constant 0 : index
    %c0_32 = arith.constant 0 : index
    %55 = vector.load %arg4[%c0_31, %c0_32] : memref<8x1xf32, #tpu.memory_space<vmem>>, vector<8x1xf32>
    %56 = vector.broadcast %55 : vector<8x1xf32> to vector<8x384xf32>
    %57 = arith.addf %54, %56 : vector<8x384xf32>
    %cst_33 = arith.constant 0.000000e+00 : f32
    %58 = vector.broadcast %cst_33 : f32 to vector<8x384xf32>
    %59 = arith.maximumf %57, %58 : vector<8x384xf32>
    %60 = vector.broadcast %2 : vector<1x384xf32> to vector<8x384xf32>
    %61 = arith.mulf %59, %60 : vector<8x384xf32>
    %c19_i32_34 = arith.constant 19 : i32
    %62 = tpu.dynamic_rotate %61 by %c19_i32_34 dim 1 : vector<8x384xf32>, i32 -> vector<8x384xf32>
    %c18_i32_35 = arith.constant 18 : i32
    %63 = tpu.dynamic_rotate %61 by %c18_i32_35 dim 1 : vector<8x384xf32>, i32 -> vector<8x384xf32>
    %c17_i32_36 = arith.constant 17 : i32
    %64 = tpu.dynamic_rotate %61 by %c17_i32_36 dim 1 : vector<8x384xf32>, i32 -> vector<8x384xf32>
    %c1_i32_37 = arith.constant 1 : i32
    %65 = tpu.dynamic_rotate %61 by %c1_i32_37 dim 1 : vector<8x384xf32>, i32 -> vector<8x384xf32>
    %c383_i32_38 = arith.constant 383 : i32
    %66 = tpu.dynamic_rotate %61 by %c383_i32_38 dim 1 : vector<8x384xf32>, i32 -> vector<8x384xf32>
    %c367_i32_39 = arith.constant 367 : i32
    %67 = tpu.dynamic_rotate %61 by %c367_i32_39 dim 1 : vector<8x384xf32>, i32 -> vector<8x384xf32>
    %c366_i32_40 = arith.constant 366 : i32
    %68 = tpu.dynamic_rotate %61 by %c366_i32_40 dim 1 : vector<8x384xf32>, i32 -> vector<8x384xf32>
    %c365_i32_41 = arith.constant 365 : i32
    %69 = tpu.dynamic_rotate %61 by %c365_i32_41 dim 1 : vector<8x384xf32>, i32 -> vector<8x384xf32>
    %c4_42 = arith.constant 4 : index
    %c0_43 = arith.constant 0 : index
    %c0_44 = arith.constant 0 : index
    %70 = vector.load %arg3[%c4_42, %c0_43, %c0_44] : memref<9x8x8xbf16, #tpu.memory_space<vmem>>, vector<1x8x8xbf16>
    %71 = vector.shape_cast %70 : vector<1x8x8xbf16> to vector<8x8xbf16>
    %72 = arith.truncf %61 : vector<8x384xf32> to vector<8x384xbf16>
    %cst_45 = arith.constant dense<0.000000e+00> : vector<8x384xf32>
    %73 = tpu.matmul %71, %72, %cst_45 {dimension_numbers = #tpu.dot_dimension_numbers<[1], [0], [0], [1], [0, 0, 1, 1], [], []>} : vector<8x8xbf16>, vector<8x384xbf16>, vector<8x384xf32> -> vector<8x384xf32>
    %c0_46 = arith.constant 0 : index
    %c0_47 = arith.constant 0 : index
    %c0_48 = arith.constant 0 : index
    %74 = vector.load %arg3[%c0_46, %c0_47, %c0_48] : memref<9x8x8xbf16, #tpu.memory_space<vmem>>, vector<1x8x8xbf16>
    %75 = vector.shape_cast %74 : vector<1x8x8xbf16> to vector<8x8xbf16>
    %76 = arith.truncf %62 : vector<8x384xf32> to vector<8x384xbf16>
    %cst_49 = arith.constant dense<0.000000e+00> : vector<8x384xf32>
    %77 = tpu.matmul %75, %76, %cst_49 {dimension_numbers = #tpu.dot_dimension_numbers<[1], [0], [0], [1], [0, 0, 1, 1], [], []>} : vector<8x8xbf16>, vector<8x384xbf16>, vector<8x384xf32> -> vector<8x384xf32>
    %78 = arith.addf %73, %77 : vector<8x384xf32>
    %c1_50 = arith.constant 1 : index
    %c0_51 = arith.constant 0 : index
    %c0_52 = arith.constant 0 : index
    %79 = vector.load %arg3[%c1_50, %c0_51, %c0_52] : memref<9x8x8xbf16, #tpu.memory_space<vmem>>, vector<1x8x8xbf16>
    %80 = vector.shape_cast %79 : vector<1x8x8xbf16> to vector<8x8xbf16>
    %81 = arith.truncf %63 : vector<8x384xf32> to vector<8x384xbf16>
    %cst_53 = arith.constant dense<0.000000e+00> : vector<8x384xf32>
    %82 = tpu.matmul %80, %81, %cst_53 {dimension_numbers = #tpu.dot_dimension_numbers<[1], [0], [0], [1], [0, 0, 1, 1], [], []>} : vector<8x8xbf16>, vector<8x384xbf16>, vector<8x384xf32> -> vector<8x384xf32>
    %83 = arith.addf %78, %82 : vector<8x384xf32>
    %c2_54 = arith.constant 2 : index
    %c0_55 = arith.constant 0 : index
    %c0_56 = arith.constant 0 : index
    %84 = vector.load %arg3[%c2_54, %c0_55, %c0_56] : memref<9x8x8xbf16, #tpu.memory_space<vmem>>, vector<1x8x8xbf16>
    %85 = vector.shape_cast %84 : vector<1x8x8xbf16> to vector<8x8xbf16>
    %86 = arith.truncf %64 : vector<8x384xf32> to vector<8x384xbf16>
    %cst_57 = arith.constant dense<0.000000e+00> : vector<8x384xf32>
    %87 = tpu.matmul %85, %86, %cst_57 {dimension_numbers = #tpu.dot_dimension_numbers<[1], [0], [0], [1], [0, 0, 1, 1], [], []>} : vector<8x8xbf16>, vector<8x384xbf16>, vector<8x384xf32> -> vector<8x384xf32>
    %88 = arith.addf %83, %87 : vector<8x384xf32>
    %c3_58 = arith.constant 3 : index
    %c0_59 = arith.constant 0 : index
    %c0_60 = arith.constant 0 : index
    %89 = vector.load %arg3[%c3_58, %c0_59, %c0_60] : memref<9x8x8xbf16, #tpu.memory_space<vmem>>, vector<1x8x8xbf16>
    %90 = vector.shape_cast %89 : vector<1x8x8xbf16> to vector<8x8xbf16>
    %91 = arith.truncf %65 : vector<8x384xf32> to vector<8x384xbf16>
    %cst_61 = arith.constant dense<0.000000e+00> : vector<8x384xf32>
    %92 = tpu.matmul %90, %91, %cst_61 {dimension_numbers = #tpu.dot_dimension_numbers<[1], [0], [0], [1], [0, 0, 1, 1], [], []>} : vector<8x8xbf16>, vector<8x384xbf16>, vector<8x384xf32> -> vector<8x384xf32>
    %93 = arith.addf %88, %92 : vector<8x384xf32>
    %c5_62 = arith.constant 5 : index
    %c0_63 = arith.constant 0 : index
    %c0_64 = arith.constant 0 : index
    %94 = vector.load %arg3[%c5_62, %c0_63, %c0_64] : memref<9x8x8xbf16, #tpu.memory_space<vmem>>, vector<1x8x8xbf16>
    %95 = vector.shape_cast %94 : vector<1x8x8xbf16> to vector<8x8xbf16>
    %96 = arith.truncf %66 : vector<8x384xf32> to vector<8x384xbf16>
    %cst_65 = arith.constant dense<0.000000e+00> : vector<8x384xf32>
    %97 = tpu.matmul %95, %96, %cst_65 {dimension_numbers = #tpu.dot_dimension_numbers<[1], [0], [0], [1], [0, 0, 1, 1], [], []>} : vector<8x8xbf16>, vector<8x384xbf16>, vector<8x384xf32> -> vector<8x384xf32>
    %98 = arith.addf %93, %97 : vector<8x384xf32>
    %c6_66 = arith.constant 6 : index
    %c0_67 = arith.constant 0 : index
    %c0_68 = arith.constant 0 : index
    %99 = vector.load %arg3[%c6_66, %c0_67, %c0_68] : memref<9x8x8xbf16, #tpu.memory_space<vmem>>, vector<1x8x8xbf16>
    %100 = vector.shape_cast %99 : vector<1x8x8xbf16> to vector<8x8xbf16>
    %101 = arith.truncf %67 : vector<8x384xf32> to vector<8x384xbf16>
    %cst_69 = arith.constant dense<0.000000e+00> : vector<8x384xf32>
    %102 = tpu.matmul %100, %101, %cst_69 {dimension_numbers = #tpu.dot_dimension_numbers<[1], [0], [0], [1], [0, 0, 1, 1], [], []>} : vector<8x8xbf16>, vector<8x384xbf16>, vector<8x384xf32> -> vector<8x384xf32>
    %103 = arith.addf %98, %102 : vector<8x384xf32>
    %c7_70 = arith.constant 7 : index
    %c0_71 = arith.constant 0 : index
    %c0_72 = arith.constant 0 : index
    %104 = vector.load %arg3[%c7_70, %c0_71, %c0_72] : memref<9x8x8xbf16, #tpu.memory_space<vmem>>, vector<1x8x8xbf16>
    %105 = vector.shape_cast %104 : vector<1x8x8xbf16> to vector<8x8xbf16>
    %106 = arith.truncf %68 : vector<8x384xf32> to vector<8x384xbf16>
    %cst_73 = arith.constant dense<0.000000e+00> : vector<8x384xf32>
    %107 = tpu.matmul %105, %106, %cst_73 {dimension_numbers = #tpu.dot_dimension_numbers<[1], [0], [0], [1], [0, 0, 1, 1], [], []>} : vector<8x8xbf16>, vector<8x384xbf16>, vector<8x384xf32> -> vector<8x384xf32>
    %108 = arith.addf %103, %107 : vector<8x384xf32>
    %c8_74 = arith.constant 8 : index
    %c0_75 = arith.constant 0 : index
    %c0_76 = arith.constant 0 : index
    %109 = vector.load %arg3[%c8_74, %c0_75, %c0_76] : memref<9x8x8xbf16, #tpu.memory_space<vmem>>, vector<1x8x8xbf16>
    %110 = vector.shape_cast %109 : vector<1x8x8xbf16> to vector<8x8xbf16>
    %111 = arith.truncf %69 : vector<8x384xf32> to vector<8x384xbf16>
    %cst_77 = arith.constant dense<0.000000e+00> : vector<8x384xf32>
    %112 = tpu.matmul %110, %111, %cst_77 {dimension_numbers = #tpu.dot_dimension_numbers<[1], [0], [0], [1], [0, 0, 1, 1], [], []>} : vector<8x8xbf16>, vector<8x384xbf16>, vector<8x384xf32> -> vector<8x384xf32>
    %113 = arith.addf %108, %112 : vector<8x384xf32>
    %c0_78 = arith.constant 0 : index
    %c0_79 = arith.constant 0 : index
    %114 = vector.load %arg5[%c0_78, %c0_79] : memref<8x1xf32, #tpu.memory_space<vmem>>, vector<8x1xf32>
    %115 = vector.broadcast %114 : vector<8x1xf32> to vector<8x384xf32>
    %116 = arith.addf %113, %115 : vector<8x384xf32>
    %117 = arith.addf %116, %1 : vector<8x384xf32>
    %cst_80 = arith.constant 0.000000e+00 : f32
    %118 = vector.broadcast %cst_80 : f32 to vector<8x384xf32>
    %119 = arith.maximumf %117, %118 : vector<8x384xf32>
    %c0_81 = arith.constant 0 : index
    %c0_82 = arith.constant 0 : index
    %c0_83 = arith.constant 0 : index
    %120 = vector.load %arg7[%c0_81, %c0_82, %c0_83] : memref<1x8x384xf32, #tpu.memory_space<vmem>>, vector<1x8x384xf32>
    %121 = vector.shape_cast %120 : vector<1x8x384xf32> to vector<8x384xf32>
    %122 = vector.shape_cast %119 : vector<8x384xf32> to vector<1x8x384xf32>
    tpu.vector_store %arg7[%c0_81, %c0_82, %c0_83], %122 {strides = array<i32>} : memref<1x8x384xf32, #tpu.memory_space<vmem>>, vector<1x8x384xf32>,
    return
  }
  func.func @transform_0(%arg0: i32) -> (i32, i32, i32) {
    %c0_i32 = arith.constant 0 : i32
    %c0_i32_0 = arith.constant 0 : i32
    %c0_i32_1 = arith.constant 0 : i32
    return %arg0, %c0_i32, %c0_i32_0 : i32, i32, i32
  }
  func.func @transform_1(%arg0: i32) -> (i32, i32, i32) {
    %c0_i32 = arith.constant 0 : i32
    %c0_i32_0 = arith.constant 0 : i32
    %c0_i32_1 = arith.constant 0 : i32
    %c0_i32_2 = arith.constant 0 : i32
    return %c0_i32, %c0_i32_0, %c0_i32_1 : i32, i32, i32
  }
  func.func @transform_2(%arg0: i32) -> (i32, i32, i32) {
    %c0_i32 = arith.constant 0 : i32
    %c0_i32_0 = arith.constant 0 : i32
    %c0_i32_1 = arith.constant 0 : i32
    %c0_i32_2 = arith.constant 0 : i32
    return %c0_i32, %c0_i32_0, %c0_i32_1 : i32, i32, i32
  }
  func.func @transform_3(%arg0: i32) -> (i32, i32) {
    %c0_i32 = arith.constant 0 : i32
    %c0_i32_0 = arith.constant 0 : i32
    %c0_i32_1 = arith.constant 0 : i32
    return %c0_i32, %c0_i32_0 : i32, i32
  }
  func.func @transform_4(%arg0: i32) -> (i32, i32) {
    %c0_i32 = arith.constant 0 : i32
    %c0_i32_0 = arith.constant 0 : i32
    %c0_i32_1 = arith.constant 0 : i32
    return %c0_i32, %c0_i32_0 : i32, i32
  }
  func.func @transform_5(%arg0: i32) -> (i32, i32) {
    %c0_i32 = arith.constant 0 : i32
    %c0_i32_0 = arith.constant 0 : i32
    %c0_i32_1 = arith.constant 0 : i32
    return %c0_i32, %c0_i32_0 : i32, i32
  }
  func.func @transform_6(%arg0: i32) -> (i32, i32, i32) {
    %c0_i32 = arith.constant 0 : i32
    %c0_i32_0 = arith.constant 0 : i32
    %c0_i32_1 = arith.constant 0 : i32
    return %arg0, %c0_i32, %c0_i32_0 : i32, i32, i32
  }
}

</mosaic_0001>

<llo_original>
// kernel: tpu_custom_call.1
$region0: #{tpu_custom_call.1}
  #allocation0 [shape = 'u32[]', space=smem, size = 0x4, offset = 0x4, fixed_abs, tag = 'smem constant byte address 0x4 - core index']
  #allocation1 [shape = 'u32[144,128]{1,0:T(1,128)}', space=vmem, size = 0x12000, scoped, tag = 'internal scratch']
  %s0 = inlined_call_operand.hbm [shape: f32[2,8,384], index: 0, kind: input, shape index: {}]
  %s1 = inlined_call_operand.hbm [shape: bf16[8,72], index: 1, kind: input, shape index: {}]
  %s2 = inlined_call_operand.hbm [shape: bf16[8,72], index: 2, kind: input, shape index: {}]
  %s3 = inlined_call_operand.hbm [shape: f32[8,1], index: 3, kind: input, shape index: {}]
  %s4 = inlined_call_operand.hbm [shape: f32[8,1], index: 4, kind: input, shape index: {}]
  %s5 = inlined_call_operand.hbm [shape: f32[1,384], index: 5, kind: input, shape index: {}]
  %s6 = inlined_call_operand.hbm [shape: f32[2,8,384], index: 6, kind: output, shape index: {}]
  %s7 = sld [smem:[#allocation0]]
  $region81: #{tpu_custom_call.1} parent=0
    _
  %s9 = ssub.s32 1, %s7
  %s10 = scalar_select 0, %s9, %s7
  $region1: #{tpu_custom_call.1} parent=0
    #allocation2 [shape = 'u8[24576]{0}', space=vmem, size = 0x6000, scoped, tag = 'input window, operand 0']
    #allocation3 [shape = 's32[2]{0}', space=sflag, size = 0x8, scoped, tag = 'scoped memory for tpu_custom_call.1']
    #allocation4 [shape = 's32[2]{0}', space=sflag, size = 0x8, scoped, tag = 'scoped memory for tpu_custom_call.1']
    #allocation5 [shape = 'u8[2048]{0}', space=vmem, size = 0x800, scoped, tag = 'input window, operand 1, single buffered']
    #allocation6 [shape = 's32[1]{0}', space=sflag, size = 0x4, scoped, tag = 'scoped memory for tpu_custom_call.1']
    #allocation7 [shape = 'u8[2048]{0}', space=vmem, size = 0x800, scoped, tag = 'input window, operand 2, single buffered']
    #allocation8 [shape = 'u8[4096]{0}', space=vmem, size = 0x1000, scoped, tag = 'input window, operand 3, single buffered']
    #allocation9 [shape = 's32[1]{0}', space=sflag, size = 0x4, scoped, tag = 'scoped memory for tpu_custom_call.1']
    #allocation10 [shape = 'u8[4096]{0}', space=vmem, size = 0x1000, scoped, tag = 'input window, operand 4, single buffered']
    #allocation11 [shape = 'u8[1536]{0}', space=vmem, size = 0x800, scoped, tag = 'input window, operand 5, single buffered']
    #allocation12 [shape = 's32[1]{0}', space=sflag, size = 0x4, scoped, tag = 'scoped memory for tpu_custom_call.1']
    #allocation13 [shape = 'u8[24576]{0}', space=vmem, size = 0x6000, scoped, tag = 'output window, operand 0']
    %11 = vsyncpa [#allocation3], 0
    %s12 = scalar_lea.sflag [#allocation3], 1
    %13 = vsyncpa %s12, 0
    %14 = vsyncpa [#allocation6], 0
    %15 = vsyncpa [#allocation9], 0
    %16 = vsyncpa [#allocation12], 0
    %17 = vsyncpa [#allocation4], 0
    %s18 = scalar_lea.sflag [#allocation4], 1
    %19 = vsyncpa %s18, 0
    loop: start=0, step=1, limit=4
    $region2: #{tpu_custom_call.1} parent=1 // loop_pre_header
      _
    $region3: #{tpu_custom_call.1} parent=1 // loop_header
      %s21 = sphi 0, %s25
      %p22 = scmp.ge.s32.totalorder %s21, 4
      %s31 = sphi 0, %s33
      %s34 = sphi 0, %s31
      %s35 = sphi 0, %s34
      %s51 = sphi 0, %s35
      %s55 = sphi 0, %s55
      %s57 = sphi 0, %s55
      %s58 = sphi 0, %s57
      %s72 = sphi 0, %s58
      %s76 = sphi 0, %s76
      %s78 = sphi 0, %s76
      %s79 = sphi 0, %s78
      %s93 = sphi 0, %s79
      %s97 = sphi 0, %s97
      %s99 = sphi 0, %s97
      %s100 = sphi 0, %s99
      %s114 = sphi 0, %s100
      %s118 = sphi 0, %s118
      %s120 = sphi 0, %s118
      %s121 = sphi 0, %s120
      %s135 = sphi 0, %s121
      %s139 = sphi 0, %s139
      %s141 = sphi 0, %s139
      %s142 = sphi 0, %s141
      %s156 = sphi 0, %s142
      %s162 = sphi 0, %s164
      %s165 = sphi 0, %s162
      %s166 = sphi 0, %s165
      %s182 = sphi 0, %s166
    $region4: #{tpu_custom_call.1} parent=1 // loop_header_branch
      %24 = sbr.rel (%p22) target = $region8
    $region5: #{tpu_custom_call.1} parent=1 // loop_body
      %s26 = ssub.s32 %s21, 1
      %s27 = ssub.s32 %s21, 2
      %s28 = sadd.s32 %s21, 1
      %s29 = ssub.s32 %s21, %s28
      %p30 = scmp.eq.s32.totalorder %s29, 0
      %s32 = sadd.s32 %s31, 1
      %s33 = scalar_select %p30, %s31, %s32
      %p36 = pneg %p30
      %p37 = scmp.eq.s32.totalorder %s21, 1
      %p38 = por %p36, %p37
      %p39 = scmp.ne.s32.totalorder %s31, %s34
      %p40 = scmp.eq.s32.totalorder %s21, 0
      %p41 = por %p39, %p40
      %p42 = scmp.ne.s32.totalorder %s31, %s34
      %p43 = scmp.eq.s32.totalorder %s26, 1
      %p44 = por %p42, %p43
      %p45 = scmp.ne.s32.totalorder %s34, %s35
      %p46 = scmp.eq.s32.totalorder %s26, 0
      %p47 = por %p45, %p46
      %p48 = scmp.ne.s32.totalorder %s34, %s35
      %p49 = scmp.eq.s32.totalorder %s27, 1
      %p50 = por %p48, %p49
      %p52 = scmp.ne.s32.totalorder %s35, %s51
      %p53 = scmp.eq.s32.totalorder %s27, 0
      %p54 = por %p52, %p53
      %s56 = sadd.s32 %s55, 1
      %p59 = scmp.eq.s32.totalorder %s21, 1
      %p60 = scmp.ne.s32.totalorder %s55, %s57
      %p61 = scmp.eq.s32.totalorder %s21, 0
      %p62 = por %p60, %p61
      %p63 = scmp.ne.s32.totalorder %s55, %s57
      %p64 = scmp.eq.s32.totalorder %s26, 1
      %p65 = por %p63, %p64
      %p66 = scmp.ne.s32.totalorder %s57, %s58
      %p67 = scmp.eq.s32.totalorder %s26, 0
      %p68 = por %p66, %p67
      %p69 = scmp.ne.s32.totalorder %s57, %s58
      %p70 = scmp.eq.s32.totalorder %s27, 1
      %p71 = por %p69, %p70
      %p73 = scmp.ne.s32.totalorder %s58, %s72
      %p74 = scmp.eq.s32.totalorder %s27, 0
      %p75 = por %p73, %p74
      %s77 = sadd.s32 %s76, 1
      %p80 = scmp.eq.s32.totalorder %s21, 1
      %p81 = scmp.ne.s32.totalorder %s76, %s78
      %p82 = scmp.eq.s32.totalorder %s21, 0
      %p83 = por %p81, %p82
      %p84 = scmp.ne.s32.totalorder %s76, %s78
      %p85 = scmp.eq.s32.totalorder %s26, 1
      %p86 = por %p84, %p85
      %p87 = scmp.ne.s32.totalorder %s78, %s79
      %p88 = scmp.eq.s32.totalorder %s26, 0
      %p89 = por %p87, %p88
      %p90 = scmp.ne.s32.totalorder %s78, %s79
      %p91 = scmp.eq.s32.totalorder %s27, 1
      %p92 = por %p90, %p91
      %p94 = scmp.ne.s32.totalorder %s79, %s93
      %p95 = scmp.eq.s32.totalorder %s27, 0
      %p96 = por %p94, %p95
      %s98 = sadd.s32 %s97, 1
      %p101 = scmp.eq.s32.totalorder %s21, 1
      %p102 = scmp.ne.s32.totalorder %s97, %s99
      %p103 = scmp.eq.s32.totalorder %s21, 0
      %p104 = por %p102, %p103
      %p105 = scmp.ne.s32.totalorder %s97, %s99
      %p106 = scmp.eq.s32.totalorder %s26, 1
      %p107 = por %p105, %p106
      %p108 = scmp.ne.s32.totalorder %s99, %s100
      %p109 = scmp.eq.s32.totalorder %s26, 0
      %p110 = por %p108, %p109
      %p111 = scmp.ne.s32.totalorder %s99, %s100
      %p112 = scmp.eq.s32.totalorder %s27, 1
      %p113 = por %p111, %p112
      %p115 = scmp.ne.s32.totalorder %s100, %s114
      %p116 = scmp.eq.s32.totalorder %s27, 0
      %p117 = por %p115, %p116
      %s119 = sadd.s32 %s118, 1
      %p122 = scmp.eq.s32.totalorder %s21, 1
      %p123 = scmp.ne.s32.totalorder %s118, %s120
      %p124 = scmp.eq.s32.totalorder %s21, 0
      %p125 = por %p123, %p124
      %p126 = scmp.ne.s32.totalorder %s118, %s120
      %p127 = scmp.eq.s32.totalorder %s26, 1
      %p128 = por %p126, %p127
      %p129 = scmp.ne.s32.totalorder %s120, %s121
      %p130 = scmp.eq.s32.totalorder %s26, 0
      %p131 = por %p129, %p130
      %p132 = scmp.ne.s32.totalorder %s120, %s121
      %p133 = scmp.eq.s32.totalorder %s27, 1
      %p134 = por %p132, %p133
      %p136 = scmp.ne.s32.totalorder %s121, %s135
      %p137 = scmp.eq.s32.totalorder %s27, 0
      %p138 = por %p136, %p137
      %s140 = sadd.s32 %s139, 1
      %p143 = scmp.eq.s32.totalorder %s21, 1
      %p144 = scmp.ne.s32.totalorder %s139, %s141
      %p145 = scmp.eq.s32.totalorder %s21, 0
      %p146 = por %p144, %p145
      %p147 = scmp.ne.s32.totalorder %s139, %s141
      %p148 = scmp.eq.s32.totalorder %s26, 1
      %p149 = por %p147, %p148
      %p150 = scmp.ne.s32.totalorder %s141, %s142
      %p151 = scmp.eq.s32.totalorder %s26, 0
      %p152 = por %p150, %p151
      %p153 = scmp.ne.s32.totalorder %s141, %s142
      %p154 = scmp.eq.s32.totalorder %s27, 1
      %p155 = por %p153, %p154
      %p157 = scmp.ne.s32.totalorder %s142, %s156
      %p158 = scmp.eq.s32.totalorder %s27, 0
      %p159 = por %p157, %p158
      %s160 = ssub.s32 %s21, %s28
      %p161 = scmp.eq.s32.totalorder %s160, 0
      %s163 = sadd.s32 %s162, 1
      %s164 = scalar_select %p161, %s162, %s163
      %p167 = pneg %p161
      %p168 = scmp.eq.s32.totalorder %s21, 1
      %p169 = por %p167, %p168
      %p170 = scmp.ne.s32.totalorder %s162, %s165
      %p171 = scmp.eq.s32.totalorder %s21, 0
      %p172 = por %p170, %p171
      %p173 = scmp.ne.s32.totalorder %s162, %s165
      %p174 = scmp.eq.s32.totalorder %s26, 1
      %p175 = por %p173, %p174
      %p176 = scmp.ne.s32.totalorder %s165, %s166
      %p177 = scmp.eq.s32.totalorder %s26, 0
      %p178 = por %p176, %p177
      %p179 = scmp.ne.s32.totalorder %s165, %s166
      %p180 = scmp.eq.s32.totalorder %s27, 1
      %p181 = por %p179, %p180
      %p183 = scmp.ne.s32.totalorder %s166, %s182
      %p184 = scmp.eq.s32.totalorder %s27, 0
      %p185 = por %p183, %p184
      %p186 = scmp.le.s32.totalorder 1, %s21
      %p187 = scmp.lt.s32.totalorder %s21, 3
      %p188 = pnand %p186, %p187
      %p189 = pneg %p188
      // Predicated region
      $region9: #{tpu_custom_call.1} parent=5 // pred_check
        _
      $region10: #{tpu_custom_call.1} parent=5 // pred_check_branch
        %191 = sbr.rel (%p188) target = $region12
      $region11: #{tpu_custom_call.1} parent=5 // pred_region
        %s192 = ssub.s32 %s21, 1
        // Predicated region
        $region13: #{tpu_custom_call.1} parent=11 // pred_check
          %p193 = pneg %p68
        $region14: #{tpu_custom_call.1} parent=11 // pred_check_branch
          %195 = sbr.rel (%p193) target = $region16
        $region15: #{tpu_custom_call.1} parent=11 // pred_region
          %s197 = ssub.s32 64, 64
          %198 = vsyncadd [#allocation6], %s197
          %s200 = sshll.u32 [#allocation5], 4
          %s201 = int_to_ptr.vmem [resolvable:$true] %s200
          %203 = dma.hbm_to_vmem [thread:$0]  %s1, 64, %s201, [#allocation6]
        $region16: #{tpu_custom_call.1} parent=11 // pred_fallthru
          _
        // Predicated region
        $region17: #{tpu_custom_call.1} parent=11 // pred_check
          %p204 = pneg %p89
        $region18: #{tpu_custom_call.1} parent=11 // pred_check_branch
          %206 = sbr.rel (%p204) target = $region20
        $region19: #{tpu_custom_call.1} parent=11 // pred_region
          %s208 = ssub.s32 64, 64
          %209 = vsyncadd [#allocation6], %s208
          %s211 = sshll.u32 [#allocation7], 4
          %s212 = int_to_ptr.vmem [resolvable:$true] %s211
          %214 = dma.hbm_to_vmem [thread:$0]  %s2, 64, %s212, [#allocation6]
        $region20: #{tpu_custom_call.1} parent=11 // pred_fallthru
          _
        // Predicated region
        $region21: #{tpu_custom_call.1} parent=11 // pred_check
          %p215 = pneg %p110
        $region22: #{tpu_custom_call.1} parent=11 // pred_check_branch
          %217 = sbr.rel (%p215) target = $region24
        $region23: #{tpu_custom_call.1} parent=11 // pred_region
          %s219 = ssub.s32 128, 128
          %220 = vsyncadd [#allocation9], %s219
          %s222 = sshll.u32 [#allocation8], 4
          %s223 = int_to_ptr.vmem [resolvable:$true] %s222
          %225 = dma.hbm_to_vmem [thread:$0]  %s3, 128, %s223, [#allocation9]
        $region24: #{tpu_custom_call.1} parent=11 // pred_fallthru
          _
        // Predicated region
        $region25: #{tpu_custom_call.1} parent=11 // pred_check
          %p226 = pneg %p131
        $region26: #{tpu_custom_call.1} parent=11 // pred_check_branch
          %228 = sbr.rel (%p226) target = $region28
        $region27: #{tpu_custom_call.1} parent=11 // pred_region
          %s230 = ssub.s32 128, 128
          %231 = vsyncadd [#allocation9], %s230
          %s233 = sshll.u32 [#allocation10], 4
          %s234 = int_to_ptr.vmem [resolvable:$true] %s233
          %236 = dma.hbm_to_vmem [thread:$0]  %s4, 128, %s234, [#allocation9]
        $region28: #{tpu_custom_call.1} parent=11 // pred_fallthru
          _
        // Predicated region
        $region29: #{tpu_custom_call.1} parent=11 // pred_check
          %p237 = pneg %p152
        $region30: #{tpu_custom_call.1} parent=11 // pred_check_branch
          %239 = sbr.rel (%p237) target = $region32
        $region31: #{tpu_custom_call.1} parent=11 // pred_region
          %s241 = ssub.s32 48, 48
          %242 = vsyncadd [#allocation12], %s241
          %s244 = sshll.u32 [#allocation11], 4
          %s245 = int_to_ptr.vmem [resolvable:$true] %s244
          %247 = dma.hbm_to_vmem [thread:$0]  %s5, 48, %s245, [#allocation12]
        $region32: #{tpu_custom_call.1} parent=11 // pred_fallthru
          _
      $region12: #{tpu_custom_call.1} parent=5 // pred_fallthru
        _
      %p248 = scmp.lt.s32.totalorder %s21, 2
      // Predicated region
      $region33: #{tpu_custom_call.1} parent=5 // pred_check
        %p249 = pneg %p248
      $region34: #{tpu_custom_call.1} parent=5 // pred_check_branch
        %251 = sbr.rel (%p249) target = $region36
      $region35: #{tpu_custom_call.1} parent=5 // pred_region
        // Predicated region
        $region37: #{tpu_custom_call.1} parent=35 // pred_check
          %p252 = pneg %p41
        $region38: #{tpu_custom_call.1} parent=35 // pred_check_branch
          %254 = sbr.rel (%p252) target = $region40
        $region39: #{tpu_custom_call.1} parent=35 // pred_region
          %s255 = sand.u32 %s31, 1
          %s256 = scalar_lea.sflag [#allocation3], %s255
          %s257 = sand.u32 %s31, 1
          %s258 = smul.addr %s257, 24
          %s259 = scalar_lea.vmem [#allocation2], %s258
          %s261 = ssub.s32 384, 384
          %262 = vsyncadd %s256, %s261
          %s263 = smul.addr %s21, 3
          %s264 = smul.addr %s263, 128
          %s265 = scalar_lea.hbm %s0, %s264
          %s267 = sshll.u32 %s259, 4
          %s268 = int_to_ptr.vmem [resolvable:$true] %s267
          %270 = dma.hbm_to_vmem [thread:$0]  %s265, 384, %s268, %s256
        $region40: #{tpu_custom_call.1} parent=35 // pred_fallthru
          _
      $region36: #{tpu_custom_call.1} parent=5 // pred_fallthru
        _
      %p271 = scmp.le.s32.totalorder 1, %s21
      %p272 = scmp.lt.s32.totalorder %s21, 3
      %p273 = pnand %p271, %p272
      %p274 = pneg %p273
      // Predicated region
      $region41: #{tpu_custom_call.1} parent=5 // pred_check
        _
      $region42: #{tpu_custom_call.1} parent=5 // pred_check_branch
        %276 = sbr.rel (%p273) target = $region44
      $region43: #{tpu_custom_call.1} parent=5 // pred_region
        %s277 = ssub.s32 %s21, 1
        %s278 = sand.u32 %s34, 1
        %s279 = scalar_lea.sflag [#allocation3], %s278
        %s280 = sand.u32 %s34, 1
        %s281 = smul.addr %s280, 24
        %s282 = scalar_lea.vmem [#allocation2], %s281
        // Predicated region
        $region45: #{tpu_custom_call.1} parent=43 // pred_check
          %p283 = pneg %p47
        $region46: #{tpu_custom_call.1} parent=43 // pred_check_branch
          %285 = sbr.rel (%p283) target = $region48
        $region47: #{tpu_custom_call.1} parent=43 // pred_region
          %286 = dma.done %s279, 384
        $region48: #{tpu_custom_call.1} parent=43 // pred_fallthru
          _
        // Predicated region
        $region49: #{tpu_custom_call.1} parent=43 // pred_check
          %p287 = pneg %p68
        $region50: #{tpu_custom_call.1} parent=43 // pred_check_branch
          %289 = sbr.rel (%p287) target = $region52
        $region51: #{tpu_custom_call.1} parent=43 // pred_region
          %290 = dma.done [#allocation6], 64
        $region52: #{tpu_custom_call.1} parent=43 // pred_fallthru
          _
        // Predicated region
        $region53: #{tpu_custom_call.1} parent=43 // pred_check
          %p291 = pneg %p89
        $region54: #{tpu_custom_call.1} parent=43 // pred_check_branch
          %293 = sbr.rel (%p291) target = $region56
        $region55: #{tpu_custom_call.1} parent=43 // pred_region
          %294 = dma.done [#allocation6], 64
        $region56: #{tpu_custom_call.1} parent=43 // pred_fallthru
          _
        // Predicated region
        $region57: #{tpu_custom_call.1} parent=43 // pred_check
          %p295 = pneg %p110
        $region58: #{tpu_custom_call.1} parent=43 // pred_check_branch
          %297 = sbr.rel (%p295) target = $region60
        $region59: #{tpu_custom_call.1} parent=43 // pred_region
          %298 = dma.done [#allocation9], 128
        $region60: #{tpu_custom_call.1} parent=43 // pred_fallthru
          _
        // Predicated region
        $region61: #{tpu_custom_call.1} parent=43 // pred_check
          %p299 = pneg %p131
        $region62: #{tpu_custom_call.1} parent=43 // pred_check_branch
          %301 = sbr.rel (%p299) target = $region64
        $region63: #{tpu_custom_call.1} parent=43 // pred_region
          %302 = dma.done [#allocation9], 128
        $region64: #{tpu_custom_call.1} parent=43 // pred_fallthru
          _
        // Predicated region
        $region65: #{tpu_custom_call.1} parent=43 // pred_check
          %p303 = pneg %p152
        $region66: #{tpu_custom_call.1} parent=43 // pred_check_branch
          %305 = sbr.rel (%p303) target = $region68
        $region67: #{tpu_custom_call.1} parent=43 // pred_region
          %306 = dma.done [#allocation12], 48
        $region68: #{tpu_custom_call.1} parent=43 // pred_fallthru
          _
        %s307 = sand.u32 %s34, 1
        %s308 = scalar_lea.sflag [#allocation3], %s307
        %s309 = sand.u32 %s34, 1
        %s310 = smul.addr %s309, 24
        %s311 = scalar_lea.vmem [#allocation2], %s310
        %p312 = pneg %p47
        %p313 = pneg %p44
        %p314 = pneg %p68
        %p315 = pneg %p65
        %p316 = pneg %p89
        %p317 = pneg %p86
        %p318 = pneg %p110
        %p319 = pneg %p107
        %p320 = pneg %p131
        %p321 = pneg %p128
        %p322 = pneg %p152
        %p323 = pneg %p149
        %p324 = pneg %p178
        %p325 = pneg %p175
        %s326 = sand.u32 %s165, 1
        %s327 = scalar_lea.sflag [#allocation4], %s326
        %s328 = sand.u32 %s165, 1
        %s329 = smul.addr %s328, 24
        %s330 = scalar_lea.vmem [#allocation13], %s329
        %v332 = vld [vmem:[%s282] sm:$0xff]
        %v333 = vld [vmem:[%s282 + $0x8] sm:$0xff]
        %v334 = vld [vmem:[%s282 + $0x10] sm:$0xff]
        %v335 = vld [vmem:[#allocation11] sm:$0x7]
        %336 = vrot.lane.b32.xlu0 %v332, 19
        %v337 = vpop.permute.xlu0 %336
        %338 = vrot.lane.b32.xlu0 %v333, 19
        %v339 = vpop.permute.xlu0 %338
        %340 = vrot.lane.b32.xlu0 %v334, 19
        %v341 = vpop.permute.xlu0 %340
        %v342 = vlaneseq
        %v343 = vand.u32 %v342, 127
        %vm344 = vcmp.lt.s32.totalorder %v343, 19
        %v345 = vsel %vm344, %v339, %v341
        %v346 = vsel %vm344, %v337, %v339
        %v347 = vsel %vm344, %v341, %v337
        %348 = vrot.lane.b32.xlu0 %v332, 18
        %v349 = vpop.permute.xlu0 %348
        %350 = vrot.lane.b32.xlu0 %v333, 18
        %v351 = vpop.permute.xlu0 %350
        %352 = vrot.lane.b32.xlu0 %v334, 18
        %v353 = vpop.permute.xlu0 %352
        %vm354 = vcmp.lt.s32.totalorder %v343, 18
        %v355 = vsel %vm354, %v351, %v353
        %v356 = vsel %vm354, %v349, %v351
        %v357 = vsel %vm354, %v353, %v349
        %358 = vrot.lane.b32.xlu0 %v332, 17
        %v359 = vpop.permute.xlu0 %358
        %360 = vrot.lane.b32.xlu0 %v333, 17
        %v361 = vpop.permute.xlu0 %360
        %362 = vrot.lane.b32.xlu0 %v334, 17
        %v363 = vpop.permute.xlu0 %362
        %vm364 = vcmp.lt.s32.totalorder %v343, 17
        %v365 = vsel %vm364, %v361, %v363
        %v366 = vsel %vm364, %v359, %v361
        %v367 = vsel %vm364, %v363, %v359
        %368 = vrot.lane.b32.xlu0 %v332, 1
        %v369 = vpop.permute.xlu0 %368
        %370 = vrot.lane.b32.xlu0 %v333, 1
        %v371 = vpop.permute.xlu0 %370
        %372 = vrot.lane.b32.xlu0 %v334, 1
        %v373 = vpop.permute.xlu0 %372
        %vm374 = vcmp.lt.s32.totalorder %v343, 1
        %v375 = vsel %vm374, %v371, %v373
        %v376 = vsel %vm374, %v369, %v371
        %v377 = vsel %vm374, %v373, %v369
        %378 = vrot.lane.b32.xlu0 %v332, 127
        %v379 = vpop.permute.xlu0 %378
        %380 = vrot.lane.b32.xlu0 %v333, 127
        %v381 = vpop.permute.xlu0 %380
        %382 = vrot.lane.b32.xlu0 %v334, 127
        %v383 = vpop.permute.xlu0 %382
        %vm384 = vcmp.lt.s32.totalorder %v343, 127
        %v385 = vsel %vm384, %v381, %v383
        %v386 = vsel %vm384, %v379, %v381
        %v387 = vsel %vm384, %v383, %v379
        %388 = vrot.lane.b32.xlu0 %v332, 111
        %v389 = vpop.permute.xlu0 %388
        %390 = vrot.lane.b32.xlu0 %v333, 111
        %v391 = vpop.permute.xlu0 %390
        %392 = vrot.lane.b32.xlu0 %v334, 111
        %v393 = vpop.permute.xlu0 %392
        %vm394 = vcmp.lt.s32.totalorder %v343, 111
        %v395 = vsel %vm394, %v391, %v393
        %v396 = vsel %vm394, %v389, %v391
        %v397 = vsel %vm394, %v393, %v389
        %398 = vrot.lane.b32.xlu0 %v332, 110
        %v399 = vpop.permute.xlu0 %398
        %400 = vrot.lane.b32.xlu0 %v333, 110
        %v401 = vpop.permute.xlu0 %400
        %402 = vrot.lane.b32.xlu0 %v334, 110
        %v403 = vpop.permute.xlu0 %402
        %vm404 = vcmp.lt.s32.totalorder %v343, 110
        %v405 = vsel %vm404, %v401, %v403
        %v406 = vsel %vm404, %v399, %v401
        %v407 = vsel %vm404, %v403, %v399
        %408 = vrot.lane.b32.xlu0 %v332, 109
        %v409 = vpop.permute.xlu0 %408
        %410 = vrot.lane.b32.xlu0 %v333, 109
        %v411 = vpop.permute.xlu0 %410
        %412 = vrot.lane.b32.xlu0 %v334, 109
        %v413 = vpop.permute.xlu0 %412
        %vm414 = vcmp.lt.s32.totalorder %v343, 109
        %v415 = vsel %vm414, %v411, %v413
        %v416 = vsel %vm414, %v409, %v411
        %v417 = vsel %vm414, %v413, %v409
        %v418 = vpack.c.bf16 %v357, %v347
        %v419 = vpack.c.bf16 %v356, %v346
        %v420 = vpack.c.bf16 %v355, %v345
        %v421 = vpack.c.bf16 %v377, %v367
        %v422 = vpack.c.bf16 %v376, %v366
        %v423 = vpack.c.bf16 %v375, %v365
        %v424 = vpack.c.bf16 %v386, %v332
        %v425 = vpack.c.bf16 %v385, %v333
        %v426 = vpack.c.bf16 %v387, %v334
        %v427 = vpack.c.bf16 %v406, %v396
        %v428 = vpack.c.bf16 %v405, %v395
        %v429 = vpack.c.bf16 %v407, %v397
        %v430 = vpack.c.bf16 %v416, %v416
        %v431 = vpack.c.bf16 %v415, %v415
        %v432 = vpack.c.bf16 %v417, %v417
        %v433 = vld [vmem:[#allocation5] sm:$0xf]
        %v434 = vld [vmem:[#allocation8] sm:$0xff]
        %436 = vset.pattern.permute.xlu0 0
        %437 = vperm.xlu0 %436, %v434
        %v438 = vpop.permute.xlu0 %437
        %vm440 = vcmask 588800
        %v442 = vsel %vm440, %v433, 0
        %vm444 = vcmask 1043456
        %v446 = vsel %vm444, %v430, 0
        %v449 = vsel %vm444, %v431, 0
        %v452 = vsel %vm444, %v432, 0
        %454 = vmatprep.subr.bf16.mxu0 %v419
        %455 = vmatpush1.bf16.msra.mxu0 %v418
        %456 = vmatprep.subr.bf16.mxu0 %v422
        %457 = vmatpush1.bf16.msra.mxu0 %v421
        %458 = vmatprep.subr.bf16.mxu0 %v425
        %459 = vmatpush1.bf16.msra.mxu0 %v424
        %460 = vmatprep.subr.bf16.mxu0 %v428
        %461 = vmatpush1.bf16.msra.mxu0 %v427
        %462 = vmatprep.subr.bf16.mxu0 %v449
        %463 = vmatpush1.bf16.msra.mxu0 %v446
        %464 = vmatprep.subr.bf16.mxu0 0
        %465 = vmatpush1.bf16.msra.mxu0 0
        %466 = vmatprep.subr.bf16.mxu0 0
        %467 = vmatpush1.bf16.msra.mxu0 0
        %468 = vmatprep.subr.bf16.mxu0 0
        %469 = vmatpush1.bf16.msra.mxu0 0
        %470 = vmatprep.subr.bf16.mxu0 0
        %471 = vmatpush1.bf16.msra.mxu0 0
        %472 = vmatprep.subr.bf16.mxu0 0
        %473 = vmatpush1.bf16.msra.mxu0 0
        %474 = vmatprep.subr.bf16.mxu0 0
        %475 = vmatpush1.bf16.msra.mxu0 0
        %476 = vmatprep.subr.bf16.mxu0 0
        %477 = vmatpush1.bf16.msra.mxu0 0
        %478 = vmatprep.subr.bf16.mxu0 0
        %479 = vmatpush1.bf16.msra.mxu0 0
        %480 = vmatprep.subr.bf16.mxu0 0
        %481 = vmatpush1.bf16.msra.mxu0 0
        %482 = vmatprep.subr.bf16.mxu0 0
        %483 = vmatpush1.bf16.msra.mxu0 0
        %484 = vmatprep.subr.bf16.mxu0 0
        %485 = vmatpush1.bf16.msra.mxu0 0
        %486 = vmatprep.mubr.bf16.mxu0 0
        %487 = vmatmul.mubr.bf16.gmra.mrb[0].mxu0 %v442
        %v488 = vpop.f32.mrb[0].mxu0
        %v489 = vadd.f32 %v438, %v488
        %v490 = vpop.f32.mrb[0].mxu0
        %v491 = vadd.f32 %v438, %v490
        %v492 = vpop.f32.mrb[0].mxu0
        %v493 = vpop.f32.mrb[0].mxu0
        %494 = vdwg.mxu0
        %495 = vmatprep.subr.bf16.mxu0 0
        %496 = vmatpush1.bf16.msra.mxu0 %v420
        %497 = vmatprep.subr.bf16.mxu0 0
        %498 = vmatpush1.bf16.msra.mxu0 %v423
        %499 = vmatprep.subr.bf16.mxu0 0
        %500 = vmatpush1.bf16.msra.mxu0 %v426
        %501 = vmatprep.subr.bf16.mxu0 0
        %502 = vmatpush1.bf16.msra.mxu0 %v429
        %503 = vmatprep.subr.bf16.mxu0 0
        %504 = vmatpush1.bf16.msra.mxu0 %v452
        %505 = vmatprep.subr.bf16.mxu0 0
        %506 = vmatpush1.bf16.msra.mxu0 0
        %507 = vmatprep.subr.bf16.mxu0 0
        %508 = vmatpush1.bf16.msra.mxu0 0
        %509 = vmatprep.subr.bf16.mxu0 0
        %510 = vmatpush1.bf16.msra.mxu0 0
        %511 = vmatprep.subr.bf16.mxu0 0
        %512 = vmatpush1.bf16.msra.mxu0 0
        %513 = vmatprep.subr.bf16.mxu0 0
        %514 = vmatpush1.bf16.msra.mxu0 0
        %515 = vmatprep.subr.bf16.mxu0 0
        %516 = vmatpush1.bf16.msra.mxu0 0
        %517 = vmatprep.subr.bf16.mxu0 0
        %518 = vmatpush1.bf16.msra.mxu0 0
        %519 = vmatprep.subr.bf16.mxu0 0
        %520 = vmatpush1.bf16.msra.mxu0 0
        %521 = vmatprep.subr.bf16.mxu0 0
        %522 = vmatpush1.bf16.msra.mxu0 0
        %523 = vmatprep.subr.bf16.mxu0 0
        %524 = vmatpush1.bf16.msra.mxu0 0
        %525 = vmatprep.subr.bf16.mxu0 0
        %526 = vmatpush1.bf16.msra.mxu0 0
        %527 = vmatprep.mubr.bf16.mxu0 0
        %528 = vmatmul.mubr.bf16.gmra.mrb[0].mxu0 %v442
        %v529 = vpop.f32.mrb[0].mxu0
        %v530 = vadd.f32 %v438, %v529
        %v531 = vpop.f32.mrb[0].mxu0
        %v532 = vpop.f32.mrb[0].mxu0
        %v533 = vpop.f32.mrb[0].mxu0
        %534 = vdwg.mxu0
        %v535 = vmax.f32 %v489, 0.0
        %v536 = vmax.f32 %v491, 0.0
        %v537 = vmax.f32 %v530, 0.0
        %v539 = vlaneseq
        %v540 = vshrl.u32 %v539, 7
        %v541 = vsub.s32 0, %v540
        %v542 = vrot.slane %v335, %v541
        %v543 = vlaneseq
        %v544 = vshrl.u32 %v543, 7
        %v545 = vsub.s32 1, %v544
        %v546 = vrot.slane %v335, %v545
        %v547 = vlaneseq
        %v548 = vshrl.u32 %v547, 7
        %v549 = vsub.s32 2, %v548
        %v550 = vrot.slane %v335, %v549
        %v554 = vmul.f32 %v535, %v542
        %v555 = vmul.f32 %v536, %v546
        %v556 = vmul.f32 %v537, %v550
        %557 = vrot.lane.b32.xlu0 %v554, 19
        %v558 = vpop.permute.xlu0 %557
        %559 = vrot.lane.b32.xlu0 %v555, 19
        %v560 = vpop.permute.xlu0 %559
        %561 = vrot.lane.b32.xlu0 %v556, 19
        %v562 = vpop.permute.xlu0 %561
        %v563 = vsel %vm344, %v560, %v562
        %v564 = vsel %vm344, %v558, %v560
        %v565 = vsel %vm344, %v562, %v558
        %566 = vrot.lane.b32.xlu0 %v554, 18
        %v567 = vpop.permute.xlu0 %566
        %568 = vrot.lane.b32.xlu0 %v555, 18
        %v569 = vpop.permute.xlu0 %568
        %570 = vrot.lane.b32.xlu0 %v556, 18
        %v571 = vpop.permute.xlu0 %570
        %v572 = vsel %vm354, %v569, %v571
        %v573 = vsel %vm354, %v567, %v569
        %v574 = vsel %vm354, %v571, %v567
        %575 = vrot.lane.b32.xlu0 %v554, 17
        %v576 = vpop.permute.xlu0 %575
        %577 = vrot.lane.b32.xlu0 %v555, 17
        %v578 = vpop.permute.xlu0 %577
        %579 = vrot.lane.b32.xlu0 %v556, 17
        %v580 = vpop.permute.xlu0 %579
        %v581 = vsel %vm364, %v578, %v580
        %v582 = vsel %vm364, %v576, %v578
        %v583 = vsel %vm364, %v580, %v576
        %584 = vrot.lane.b32.xlu0 %v554, 1
        %v585 = vpop.permute.xlu0 %584
        %586 = vrot.lane.b32.xlu0 %v555, 1
        %v587 = vpop.permute.xlu0 %586
        %588 = vrot.lane.b32.xlu0 %v556, 1
        %v589 = vpop.permute.xlu0 %588
        %v590 = vsel %vm374, %v587, %v589
        %v591 = vsel %vm374, %v585, %v587
        %v592 = vsel %vm374, %v589, %v585
        %593 = vrot.lane.b32.xlu0 %v554, 127
        %v594 = vpop.permute.xlu0 %593
        %595 = vrot.lane.b32.xlu0 %v555, 127
        %v596 = vpop.permute.xlu0 %595
        %597 = vrot.lane.b32.xlu0 %v556, 127
        %v598 = vpop.permute.xlu0 %597
        %v599 = vsel %vm384, %v596, %v598
        %v600 = vsel %vm384, %v594, %v596
        %v601 = vsel %vm384, %v598, %v594
        %602 = vrot.lane.b32.xlu0 %v554, 111
        %v603 = vpop.permute.xlu0 %602
        %604 = vrot.lane.b32.xlu0 %v555, 111
        %v605 = vpop.permute.xlu0 %604
        %606 = vrot.lane.b32.xlu0 %v556, 111
        %v607 = vpop.permute.xlu0 %606
        %v608 = vsel %vm394, %v605, %v607
        %v609 = vsel %vm394, %v603, %v605
        %v610 = vsel %vm394, %v607, %v603
        %611 = vrot.lane.b32.xlu0 %v554, 110
        %v612 = vpop.permute.xlu0 %611
        %613 = vrot.lane.b32.xlu0 %v555, 110
        %v614 = vpop.permute.xlu0 %613
        %615 = vrot.lane.b32.xlu0 %v556, 110
        %v616 = vpop.permute.xlu0 %615
        %v617 = vsel %vm404, %v614, %v616
        %v618 = vsel %vm404, %v612, %v614
        %v619 = vsel %vm404, %v616, %v612
        %620 = vrot.lane.b32.xlu0 %v554, 109
        %v621 = vpop.permute.xlu0 %620
        %622 = vrot.lane.b32.xlu0 %v555, 109
        %v623 = vpop.permute.xlu0 %622
        %624 = vrot.lane.b32.xlu0 %v556, 109
        %v625 = vpop.permute.xlu0 %624
        %v626 = vsel %vm414, %v623, %v625
        %v627 = vsel %vm414, %v621, %v623
        %v628 = vsel %vm414, %v625, %v621
        %v629 = vpack.c.bf16 %v574, %v565
        %v630 = vpack.c.bf16 %v573, %v564
        %v631 = vpack.c.bf16 %v572, %v563
        %v632 = vpack.c.bf16 %v592, %v583
        %v633 = vpack.c.bf16 %v591, %v582
        %v634 = vpack.c.bf16 %v590, %v581
        %v635 = vpack.c.bf16 %v600, %v554
        %v636 = vpack.c.bf16 %v599, %v555
        %v637 = vpack.c.bf16 %v601, %v556
        %v638 = vpack.c.bf16 %v618, %v609
        %v639 = vpack.c.bf16 %v617, %v608
        %v640 = vpack.c.bf16 %v619, %v610
        %v641 = vpack.c.bf16 %v627, %v627
        %v642 = vpack.c.bf16 %v626, %v626
        %v643 = vpack.c.bf16 %v628, %v628
        %v644 = vld [vmem:[#allocation7] sm:$0xf]
        %v645 = vld [vmem:[#allocation10] sm:$0xff]
        %647 = vset.pattern.permute.xlu0 0
        %648 = vperm.xlu0 %647, %v645
        %v649 = vpop.permute.xlu0 %648
        %v652 = vsel %vm440, %v644, 0
        %v655 = vsel %vm444, %v641, 0
        %v658 = vsel %vm444, %v642, 0
        %v661 = vsel %vm444, %v643, 0
        %663 = vmatprep.subr.bf16.mxu0 %v630
        %664 = vmatpush1.bf16.msra.mxu0 %v629
        %665 = vmatprep.subr.bf16.mxu0 %v633
        %666 = vmatpush1.bf16.msra.mxu0 %v632
        %667 = vmatprep.subr.bf16.mxu0 %v636
        %668 = vmatpush1.bf16.msra.mxu0 %v635
        %669 = vmatprep.subr.bf16.mxu0 %v639
        %670 = vmatpush1.bf16.msra.mxu0 %v638
        %671 = vmatprep.subr.bf16.mxu0 %v658
        %672 = vmatpush1.bf16.msra.mxu0 %v655
        %673 = vmatprep.subr.bf16.mxu0 0
        %674 = vmatpush1.bf16.msra.mxu0 0
        %675 = vmatprep.subr.bf16.mxu0 0
        %676 = vmatpush1.bf16.msra.mxu0 0
        %677 = vmatprep.subr.bf16.mxu0 0
        %678 = vmatpush1.bf16.msra.mxu0 0
        %679 = vmatprep.subr.bf16.mxu0 0
        %680 = vmatpush1.bf16.msra.mxu0 0
        %681 = vmatprep.subr.bf16.mxu0 0
        %682 = vmatpush1.bf16.msra.mxu0 0
        %683 = vmatprep.subr.bf16.mxu0 0
        %684 = vmatpush1.bf16.msra.mxu0 0
        %685 = vmatprep.subr.bf16.mxu0 0
        %686 = vmatpush1.bf16.msra.mxu0 0
        %687 = vmatprep.subr.bf16.mxu0 0
        %688 = vmatpush1.bf16.msra.mxu0 0
        %689 = vmatprep.subr.bf16.mxu0 0
        %690 = vmatpush1.bf16.msra.mxu0 0
        %691 = vmatprep.subr.bf16.mxu0 0
        %692 = vmatpush1.bf16.msra.mxu0 0
        %693 = vmatprep.subr.bf16.mxu0 0
        %694 = vmatpush1.bf16.msra.mxu0 0
        %695 = vmatprep.mubr.bf16.mxu0 0
        %696 = vmatmul.mubr.bf16.gmra.mrb[0].mxu0 %v652
        %v697 = vpop.f32.mrb[0].mxu0
        %v698 = vadd.f32 %v649, %v697
        %v699 = vpop.f32.mrb[0].mxu0
        %v700 = vadd.f32 %v649, %v699
        %v701 = vpop.f32.mrb[0].mxu0
        %v702 = vpop.f32.mrb[0].mxu0
        %703 = vdwg.mxu0
        %704 = vmatprep.subr.bf16.mxu0 0
        %705 = vmatpush1.bf16.msra.mxu0 %v631
        %706 = vmatprep.subr.bf16.mxu0 0
        %707 = vmatpush1.bf16.msra.mxu0 %v634
        %708 = vmatprep.subr.bf16.mxu0 0
        %709 = vmatpush1.bf16.msra.mxu0 %v637
        %710 = vmatprep.subr.bf16.mxu0 0
        %711 = vmatpush1.bf16.msra.mxu0 %v640
        %712 = vmatprep.subr.bf16.mxu0 0
        %713 = vmatpush1.bf16.msra.mxu0 %v661
        %714 = vmatprep.subr.bf16.mxu0 0
        %715 = vmatpush1.bf16.msra.mxu0 0
        %716 = vmatprep.subr.bf16.mxu0 0
        %717 = vmatpush1.bf16.msra.mxu0 0
        %718 = vmatprep.subr.bf16.mxu0 0
        %719 = vmatpush1.bf16.msra.mxu0 0
        %720 = vmatprep.subr.bf16.mxu0 0
        %721 = vmatpush1.bf16.msra.mxu0 0
        %722 = vmatprep.subr.bf16.mxu0 0
        %723 = vmatpush1.bf16.msra.mxu0 0
        %724 = vmatprep.subr.bf16.mxu0 0
        %725 = vmatpush1.bf16.msra.mxu0 0
        %726 = vmatprep.subr.bf16.mxu0 0
        %727 = vmatpush1.bf16.msra.mxu0 0
        %728 = vmatprep.subr.bf16.mxu0 0
        %729 = vmatpush1.bf16.msra.mxu0 0
        %730 = vmatprep.subr.bf16.mxu0 0
        %731 = vmatpush1.bf16.msra.mxu0 0
        %732 = vmatprep.subr.bf16.mxu0 0
        %733 = vmatpush1.bf16.msra.mxu0 0
        %734 = vmatprep.subr.bf16.mxu0 0
        %735 = vmatpush1.bf16.msra.mxu0 0
        %736 = vmatprep.mubr.bf16.mxu0 0
        %737 = vmatmul.mubr.bf16.gmra.mrb[0].mxu0 %v652
        %v738 = vpop.f32.mrb[0].mxu0
        %v739 = vadd.f32 %v649, %v738
        %v740 = vpop.f32.mrb[0].mxu0
        %v741 = vpop.f32.mrb[0].mxu0
        %v742 = vpop.f32.mrb[0].mxu0
        %743 = vdwg.mxu0
        %v744 = vadd.f32 %v698, %v332
        %v745 = vadd.f32 %v700, %v333
        %v746 = vadd.f32 %v739, %v334
        %v747 = vmax.f32 %v744, 0.0
        %v748 = vmax.f32 %v745, 0.0
        %v749 = vmax.f32 %v746, 0.0
        %750 = vst [vmem:[%s330] sm:$0xff] %v747
        %751 = vst [vmem:[%s330 + $0x8] sm:$0xff] %v748
        %752 = vst [vmem:[%s330 + $0x10] sm:$0xff] %v749
        %s753 = sand.u32 %s165, 1
        %s754 = scalar_lea.sflag [#allocation4], %s753
        %s755 = sand.u32 %s165, 1
        %s756 = smul.addr %s755, 24
        %s757 = scalar_lea.vmem [#allocation13], %s756
        // Predicated region
        $region69: #{tpu_custom_call.1} parent=43 // pred_check
          %p758 = pneg %p175
        $region70: #{tpu_custom_call.1} parent=43 // pred_check_branch
          %760 = sbr.rel (%p758) target = $region72
        $region71: #{tpu_custom_call.1} parent=43 // pred_region
          %s762 = ssub.s32 384, 384
          %763 = vsyncadd %s754, %s762
          %s764 = smul.addr %s26, 3
          %s765 = smul.addr %s764, 128
          %s766 = scalar_lea.hbm %s6, %s765
          %s768 = sshll.u32 %s757, 4
          %s769 = int_to_ptr.vmem [resolvable:$true] %s768
          %771 = dma.vmem_to_hbm [thread:$0]  %s769, 384, %s766, %s754
        $region72: #{tpu_custom_call.1} parent=43 // pred_fallthru
          _
      $region44: #{tpu_custom_call.1} parent=5 // pred_fallthru
        _
      %p772 = scmp.le.s32.totalorder 2, %s21
      // Predicated region
      $region73: #{tpu_custom_call.1} parent=5 // pred_check
        %p773 = pneg %p772
      $region74: #{tpu_custom_call.1} parent=5 // pred_check_branch
        %775 = sbr.rel (%p773) target = $region76
      $region75: #{tpu_custom_call.1} parent=5 // pred_region
        %s776 = ssub.s32 %s21, 2
        // Predicated region
        $region77: #{tpu_custom_call.1} parent=75 // pred_check
          %p777 = pneg %p181
        $region78: #{tpu_custom_call.1} parent=75 // pred_check_branch
          %779 = sbr.rel (%p777) target = $region80
        $region79: #{tpu_custom_call.1} parent=75 // pred_region
          %s780 = sand.u32 %s166, 1
          %s781 = scalar_lea.sflag [#allocation4], %s780
          %s782 = sand.u32 %s166, 1
          %s783 = smul.addr %s782, 24
          %s784 = scalar_lea.vmem [#allocation13], %s783
          %785 = dma.done %s781, 384
        $region80: #{tpu_custom_call.1} parent=75 // pred_fallthru
          _
      $region76: #{tpu_custom_call.1} parent=5 // pred_fallthru
        _
    $region6: #{tpu_custom_call.1} parent=1 // loop_footer
      %s25 = sadd.s32 1, %s21
    $region7: #{tpu_custom_call.1} parent=1 // loop_footer_branch
      %20 = sbr.rel target = $region3
    $region8: #{tpu_custom_call.1} parent=1 // loop_exit
      _
    %786 = vsyncpa [#allocation3], 1
    %s787 = scalar_lea.sflag [#allocation3], 1
    %788 = vsyncpa %s787, 1
    %789 = vsyncpa [#allocation6], 1
    %790 = vsyncpa [#allocation9], 1
    %791 = vsyncpa [#allocation12], 1
    %792 = vsyncpa [#allocation4], 1
    %s793 = scalar_lea.sflag [#allocation4], 1
    %794 = vsyncpa %s793, 1

// kernel: tpu_custom_call.1
$region0: #{tpu_custom_call.1}
  #allocation0 [shape = 'u32[]', space=smem, size = 0x4, offset = 0x4, fixed_abs, tag = 'smem constant byte address 0x4 - core index']
  #allocation1 [shape = 'u32[144,128]{1,0:T(1,128)}', space=vmem, size = 0x12000, scoped, tag = 'internal scratch']
  %s0 = inlined_call_operand.hbm [shape: f32[2,8,384], index: 0, kind: input, shape index: {}]
  %s1 = inlined_call_operand.hbm [shape: bf16[8,72], index: 1, kind: input, shape index: {}]
  %s2 = inlined_call_operand.hbm [shape: bf16[8,72], index: 2, kind: input, shape index: {}]
  %s3 = inlined_call_operand.hbm [shape: f32[8,1], index: 3, kind: input, shape index: {}]
  %s4 = inlined_call_operand.hbm [shape: f32[8,1], index: 4, kind: input, shape index: {}]
  %s5 = inlined_call_operand.hbm [shape: f32[1,384], index: 5, kind: input, shape index: {}]
  %s6 = inlined_call_operand.hbm [shape: f32[2,8,384], index: 6, kind: output, shape index: {}]
  %s7 = sld [smem:[#allocation0]]
  $region81: #{tpu_custom_call.1} parent=0
    _
  %s9 = ssub.s32 1, %s7
  %s10 = scalar_select 0, %s9, %s7
  $region1: #{tpu_custom_call.1} parent=0
    #allocation2 [shape = 'u8[24576]{0}', space=vmem, size = 0x6000, scoped, tag = 'input window, operand 0']
    #allocation3 [shape = 's32[2]{0}', space=sflag, size = 0x8, scoped, tag = 'scoped memory for tpu_custom_call.1']
    #allocation4 [shape = 's32[2]{0}', space=sflag, size = 0x8, scoped, tag = 'scoped memory for tpu_custom_call.1']
    #allocation5 [shape = 'u8[2048]{0}', space=vmem, size = 0x800, scoped, tag = 'input window, operand 1, single buffered']
    #allocation6 [shape = 's32[1]{0}', space=sflag, size = 0x4, scoped, tag = 'scoped memory for tpu_custom_call.1']
    #allocation7 [shape = 'u8[2048]{0}', space=vmem, size = 0x800, scoped, tag = 'input window, operand 2, single buffered']
    #allocation8 [shape = 'u8[4096]{0}', space=vmem, size = 0x1000, scoped, tag = 'input window, operand 3, single buffered']
    #allocation9 [shape = 's32[1]{0}', space=sflag, size = 0x4, scoped, tag = 'scoped memory for tpu_custom_call.1']
    #allocation10 [shape = 'u8[4096]{0}', space=vmem, size = 0x1000, scoped, tag = 'input window, operand 4, single buffered']
    #allocation11 [shape = 'u8[1536]{0}', space=vmem, size = 0x800, scoped, tag = 'input window, operand 5, single buffered']
    #allocation12 [shape = 's32[1]{0}', space=sflag, size = 0x4, scoped, tag = 'scoped memory for tpu_custom_call.1']
    #allocation13 [shape = 'u8[24576]{0}', space=vmem, size = 0x6000, scoped, tag = 'output window, operand 0']
    %11 = vsyncpa [#allocation3], 0
    %s12 = scalar_lea.sflag [#allocation3], 1
    %13 = vsyncpa %s12, 0
    %14 = vsyncpa [#allocation6], 0
    %15 = vsyncpa [#allocation9], 0
    %16 = vsyncpa [#allocation12], 0
    %17 = vsyncpa [#allocation4], 0
    %s18 = scalar_lea.sflag [#allocation4], 1
    %19 = vsyncpa %s18, 0
    loop: start=0, step=1, limit=4
    $region2: #{tpu_custom_call.1} parent=1 // loop_pre_header
      _
    $region3: #{tpu_custom_call.1} parent=1 // loop_header
      %s21 = sphi 0, %s25
      %p22 = scmp.ge.s32.totalorder %s21, 4
      %s31 = sphi 0, %s33
      %s34 = sphi 0, %s31
      %s35 = sphi 0, %s34
      %s51 = sphi 0, %s35
      %s55 = sphi 0, %s55
      %s57 = sphi 0, %s55
      %s58 = sphi 0, %s57
      %s72 = sphi 0, %s58
      %s76 = sphi 0, %s76
      %s78 = sphi 0, %s76
      %s79 = sphi 0, %s78
      %s93 = sphi 0, %s79
      %s97 = sphi 0, %s97
      %s99 = sphi 0, %s97
      %s100 = sphi 0, %s99
      %s114 = sphi 0, %s100
      %s118 = sphi 0, %s118
      %s120 = sphi 0, %s118
      %s121 = sphi 0, %s120
      %s135 = sphi 0, %s121
      %s139 = sphi 0, %s139
      %s141 = sphi 0, %s139
      %s142 = sphi 0, %s141
      %s156 = sphi 0, %s142
      %s162 = sphi 0, %s164
      %s165 = sphi 0, %s162
      %s166 = sphi 0, %s165
      %s182 = sphi 0, %s166
    $region4: #{tpu_custom_call.1} parent=1 // loop_header_branch
      %24 = sbr.rel (%p22) target = $region8
    $region5: #{tpu_custom_call.1} parent=1 // loop_body
      %s26 = ssub.s32 %s21, 1
      %s27 = ssub.s32 %s21, 2
      %s28 = sadd.s32 %s21, 1
      %s29 = ssub.s32 %s21, %s28
      %p30 = scmp.eq.s32.totalorder %s29, 0
      %s32 = sadd.s32 %s31, 1
      %s33 = scalar_select %p30, %s31, %s32
      %p36 = pneg %p30
      %p37 = scmp.eq.s32.totalorder %s21, 1
      %p38 = por %p36, %p37
      %p39 = scmp.ne.s32.totalorder %s31, %s34
      %p40 = scmp.eq.s32.totalorder %s21, 0
      %p41 = por %p39, %p40
      %p42 = scmp.ne.s32.totalorder %s31, %s34
      %p43 = scmp.eq.s32.totalorder %s26, 1
      %p44 = por %p42, %p43
      %p45 = scmp.ne.s32.totalorder %s34, %s35
      %p46 = scmp.eq.s32.totalorder %s26, 0
      %p47 = por %p45, %p46
      %p48 = scmp.ne.s32.totalorder %s34, %s35
      %p49 = scmp.eq.s32.totalorder %s27, 1
      %p50 = por %p48, %p49
      %p52 = scmp.ne.s32.totalorder %s35, %s51
      %p53 = scmp.eq.s32.totalorder %s27, 0
      %p54 = por %p52, %p53
      %s56 = sadd.s32 %s55, 1
      %p59 = scmp.eq.s32.totalorder %s21, 1
      %p60 = scmp.ne.s32.totalorder %s55, %s57
      %p61 = scmp.eq.s32.totalorder %s21, 0
      %p62 = por %p60, %p61
      %p63 = scmp.ne.s32.totalorder %s55, %s57
      %p64 = scmp.eq.s32.totalorder %s26, 1
      %p65 = por %p63, %p64
      %p66 = scmp.ne.s32.totalorder %s57, %s58
      %p67 = scmp.eq.s32.totalorder %s26, 0
      %p68 = por %p66, %p67
      %p69 = scmp.ne.s32.totalorder %s57, %s58
      %p70 = scmp.eq.s32.totalorder %s27, 1
      %p71 = por %p69, %p70
      %p73 = scmp.ne.s32.totalorder %s58, %s72
      %p74 = scmp.eq.s32.totalorder %s27, 0
      %p75 = por %p73, %p74
      %s77 = sadd.s32 %s76, 1
      %p80 = scmp.eq.s32.totalorder %s21, 1
      %p81 = scmp.ne.s32.totalorder %s76, %s78
      %p82 = scmp.eq.s32.totalorder %s21, 0
      %p83 = por %p81, %p82
      %p84 = scmp.ne.s32.totalorder %s76, %s78
      %p85 = scmp.eq.s32.totalorder %s26, 1
      %p86 = por %p84, %p85
      %p87 = scmp.ne.s32.totalorder %s78, %s79
      %p88 = scmp.eq.s32.totalorder %s26, 0
      %p89 = por %p87, %p88
      %p90 = scmp.ne.s32.totalorder %s78, %s79
      %p91 = scmp.eq.s32.totalorder %s27, 1
      %p92 = por %p90, %p91
      %p94 = scmp.ne.s32.totalorder %s79, %s93
      %p95 = scmp.eq.s32.totalorder %s27, 0
      %p96 = por %p94, %p95
      %s98 = sadd.s32 %s97, 1
      %p101 = scmp.eq.s32.totalorder %s21, 1
      %p102 = scmp.ne.s32.totalorder %s97, %s99
      %p103 = scmp.eq.s32.totalorder %s21, 0
      %p104 = por %p102, %p103
      %p105 = scmp.ne.s32.totalorder %s97, %s99
      %p106 = scmp.eq.s32.totalorder %s26, 1
      %p107 = por %p105, %p106
      %p108 = scmp.ne.s32.totalorder %s99, %s100
      %p109 = scmp.eq.s32.totalorder %s26, 0
      %p110 = por %p108, %p109
      %p111 = scmp.ne.s32.totalorder %s99, %s100
      %p112 = scmp.eq.s32.totalorder %s27, 1
      %p113 = por %p111, %p112
      %p115 = scmp.ne.s32.totalorder %s100, %s114
      %p116 = scmp.eq.s32.totalorder %s27, 0
      %p117 = por %p115, %p116
      %s119 = sadd.s32 %s118, 1
      %p122 = scmp.eq.s32.totalorder %s21, 1
      %p123 = scmp.ne.s32.totalorder %s118, %s120
      %p124 = scmp.eq.s32.totalorder %s21, 0
      %p125 = por %p123, %p124
      %p126 = scmp.ne.s32.totalorder %s118, %s120
      %p127 = scmp.eq.s32.totalorder %s26, 1
      %p128 = por %p126, %p127
      %p129 = scmp.ne.s32.totalorder %s120, %s121
      %p130 = scmp.eq.s32.totalorder %s26, 0
      %p131 = por %p129, %p130
      %p132 = scmp.ne.s32.totalorder %s120, %s121
      %p133 = scmp.eq.s32.totalorder %s27, 1
      %p134 = por %p132, %p133
      %p136 = scmp.ne.s32.totalorder %s121, %s135
      %p137 = scmp.eq.s32.totalorder %s27, 0
      %p138 = por %p136, %p137
      %s140 = sadd.s32 %s139, 1
      %p143 = scmp.eq.s32.totalorder %s21, 1
      %p144 = scmp.ne.s32.totalorder %s139, %s141
      %p145 = scmp.eq.s32.totalorder %s21, 0
      %p146 = por %p144, %p145
      %p147 = scmp.ne.s32.totalorder %s139, %s141
      %p148 = scmp.eq.s32.totalorder %s26, 1
      %p149 = por %p147, %p148
      %p150 = scmp.ne.s32.totalorder %s141, %s142
      %p151 = scmp.eq.s32.totalorder %s26, 0
      %p152 = por %p150, %p151
      %p153 = scmp.ne.s32.totalorder %s141, %s142
      %p154 = scmp.eq.s32.totalorder %s27, 1
      %p155 = por %p153, %p154
      %p157 = scmp.ne.s32.totalorder %s142, %s156
      %p158 = scmp.eq.s32.totalorder %s27, 0
      %p159 = por %p157, %p158
      %s160 = ssub.s32 %s21, %s28
      %p161 = scmp.eq.s32.totalorder %s160, 0
      %s163 = sadd.s32 %s162, 1
      %s164 = scalar_select %p161, %s162, %s163
      %p167 = pneg %p161
      %p168 = scmp.eq.s32.totalorder %s21, 1
      %p169 = por %p167, %p168
      %p170 = scmp.ne.s32.totalorder %s162, %s165
      %p171 = scmp.eq.s32.totalorder %s21, 0
      %p172 = por %p170, %p171
      %p173 = scmp.ne.s32.totalorder %s162, %s165
      %p174 = scmp.eq.s32.totalorder %s26, 1
      %p175 = por %p173, %p174
      %p176 = scmp.ne.s32.totalorder %s165, %s166
      %p177 = scmp.eq.s32.totalorder %s26, 0
      %p178 = por %p176, %p177
      %p179 = scmp.ne.s32.totalorder %s165, %s166
      %p180 = scmp.eq.s32.totalorder %s27, 1
      %p181 = por %p179, %p180
      %p183 = scmp.ne.s32.totalorder %s166, %s182
      %p184 = scmp.eq.s32.totalorder %s27, 0
      %p185 = por %p183, %p184
      %p186 = scmp.le.s32.totalorder 1, %s21
      %p187 = scmp.lt.s32.totalorder %s21, 3
      %p188 = pnand %p186, %p187
      %p189 = pneg %p188
      // Predicated region
      $region9: #{tpu_custom_call.1} parent=5 // pred_check
        _
      $region10: #{tpu_custom_call.1} parent=5 // pred_check_branch
        %191 = sbr.rel (%p188) target = $region12
      $region11: #{tpu_custom_call.1} parent=5 // pred_region
        %s192 = ssub.s32 %s21, 1
        // Predicated region
        $region13: #{tpu_custom_call.1} parent=11 // pred_check
          %p193 = pneg %p68
        $region14: #{tpu_custom_call.1} parent=11 // pred_check_branch
          %195 = sbr.rel (%p193) target = $region16
        $region15: #{tpu_custom_call.1} parent=11 // pred_region
          %s197 = ssub.s32 64, 64
          %198 = vsyncadd [#allocation6], %s197
          %s200 = sshll.u32 [#allocation5], 4
          %s201 = int_to_ptr.vmem [resolvable:$true] %s200
          %203 = dma.hbm_to_vmem [thread:$0]  %s1, 64, %s201, [#allocation6]
        $region16: #{tpu_custom_call.1} parent=11 // pred_fallthru
          _
        // Predicated region
        $region17: #{tpu_custom_call.1} parent=11 // pred_check
          %p204 = pneg %p89
        $region18: #{tpu_custom_call.1} parent=11 // pred_check_branch
          %206 = sbr.rel (%p204) target = $region20
        $region19: #{tpu_custom_call.1} parent=11 // pred_region
          %s208 = ssub.s32 64, 64
          %209 = vsyncadd [#allocation6], %s208
          %s211 = sshll.u32 [#allocation7], 4
          %s212 = int_to_ptr.vmem [resolvable:$true] %s211
          %214 = dma.hbm_to_vmem [thread:$0]  %s2, 64, %s212, [#allocation6]
        $region20: #{tpu_custom_call.1} parent=11 // pred_fallthru
          _
        // Predicated region
        $region21: #{tpu_custom_call.1} parent=11 // pred_check
          %p215 = pneg %p110
        $region22: #{tpu_custom_call.1} parent=11 // pred_check_branch
          %217 = sbr.rel (%p215) target = $region24
        $region23: #{tpu_custom_call.1} parent=11 // pred_region
          %s219 = ssub.s32 128, 128
          %220 = vsyncadd [#allocation9], %s219
          %s222 = sshll.u32 [#allocation8], 4
          %s223 = int_to_ptr.vmem [resolvable:$true] %s222
          %225 = dma.hbm_to_vmem [thread:$0]  %s3, 128, %s223, [#allocation9]
        $region24: #{tpu_custom_call.1} parent=11 // pred_fallthru
          _
        // Predicated region
        $region25: #{tpu_custom_call.1} parent=11 // pred_check
          %p226 = pneg %p131
        $region26: #{tpu_custom_call.1} parent=11 // pred_check_branch
          %228 = sbr.rel (%p226) target = $region28
        $region27: #{tpu_custom_call.1} parent=11 // pred_region
          %s230 = ssub.s32 128, 128
          %231 = vsyncadd [#allocation9], %s230
          %s233 = sshll.u32 [#allocation10], 4
          %s234 = int_to_ptr.vmem [resolvable:$true] %s233
          %236 = dma.hbm_to_vmem [thread:$0]  %s4, 128, %s234, [#allocation9]
        $region28: #{tpu_custom_call.1} parent=11 // pred_fallthru
          _
        // Predicated region
        $region29: #{tpu_custom_call.1} parent=11 // pred_check
          %p237 = pneg %p152
        $region30: #{tpu_custom_call.1} parent=11 // pred_check_branch
          %239 = sbr.rel (%p237) target = $region32
        $region31: #{tpu_custom_call.1} parent=11 // pred_region
          %s241 = ssub.s32 48, 48
          %242 = vsyncadd [#allocation12], %s241
          %s244 = sshll.u32 [#allocation11], 4
          %s245 = int_to_ptr.vmem [resolvable:$true] %s244
          %247 = dma.hbm_to_vmem [thread:$0]  %s5, 48, %s245, [#allocation12]
        $region32: #{tpu_custom_call.1} parent=11 // pred_fallthru
          _
      $region12: #{tpu_custom_call.1} parent=5 // pred_fallthru
        _
      %p248 = scmp.lt.s32.totalorder %s21, 2
      // Predicated region
      $region33: #{tpu_custom_call.1} parent=5 // pred_check
        %p249 = pneg %p248
      $region34: #{tpu_custom_call.1} parent=5 // pred_check_branch
        %251 = sbr.rel (%p249) target = $region36
      $region35: #{tpu_custom_call.1} parent=5 // pred_region
        // Predicated region
        $region37: #{tpu_custom_call.1} parent=35 // pred_check
          %p252 = pneg %p41
        $region38: #{tpu_custom_call.1} parent=35 // pred_check_branch
          %254 = sbr.rel (%p252) target = $region40
        $region39: #{tpu_custom_call.1} parent=35 // pred_region
          %s255 = sand.u32 %s31, 1
          %s256 = scalar_lea.sflag [#allocation3], %s255
          %s257 = sand.u32 %s31, 1
          %s258 = smul.addr %s257, 24
          %s259 = scalar_lea.vmem [#allocation2], %s258
          %s261 = ssub.s32 384, 384
          %262 = vsyncadd %s256, %s261
          %s263 = smul.addr %s21, 3
          %s264 = smul.addr %s263, 128
          %s265 = scalar_lea.hbm %s0, %s264
          %s267 = sshll.u32 %s259, 4
          %s268 = int_to_ptr.vmem [resolvable:$true] %s267
          %270 = dma.hbm_to_vmem [thread:$0]  %s265, 384, %s268, %s256
        $region40: #{tpu_custom_call.1} parent=35 // pred_fallthru
          _
      $region36: #{tpu_custom_call.1} parent=5 // pred_fallthru
        _
      %p271 = scmp.le.s32.totalorder 1, %s21
      %p272 = scmp.lt.s32.totalorder %s21, 3
      %p273 = pnand %p271, %p272
      %p274 = pneg %p273
      // Predicated region
      $region41: #{tpu_custom_call.1} parent=5 // pred_check
        _
      $region42: #{tpu_custom_call.1} parent=5 // pred_check_branch
        %276 = sbr.rel (%p273) target = $region44
      $region43: #{tpu_custom_call.1} parent=5 // pred_region
        %s277 = ssub.s32 %s21, 1
        %s278 = sand.u32 %s34, 1
        %s279 = scalar_lea.sflag [#allocation3], %s278
        %s280 = sand.u32 %s34, 1
        %s281 = smul.addr %s280, 24
        %s282 = scalar_lea.vmem [#allocation2], %s281
        // Predicated region
        $region45: #{tpu_custom_call.1} parent=43 // pred_check
          %p283 = pneg %p47
        $region46: #{tpu_custom_call.1} parent=43 // pred_check_branch
          %285 = sbr.rel (%p283) target = $region48
        $region47: #{tpu_custom_call.1} parent=43 // pred_region
          %286 = dma.done %s279, 384
        $region48: #{tpu_custom_call.1} parent=43 // pred_fallthru
          _
        // Predicated region
        $region49: #{tpu_custom_call.1} parent=43 // pred_check
          %p287 = pneg %p68
        $region50: #{tpu_custom_call.1} parent=43 // pred_check_branch
          %289 = sbr.rel (%p287) target = $region52
        $region51: #{tpu_custom_call.1} parent=43 // pred_region
          %290 = dma.done [#allocation6], 64
        $region52: #{tpu_custom_call.1} parent=43 // pred_fallthru
          _
        // Predicated region
        $region53: #{tpu_custom_call.1} parent=43 // pred_check
          %p291 = pneg %p89
        $region54: #{tpu_custom_call.1} parent=43 // pred_check_branch
          %293 = sbr.rel (%p291) target = $region56
        $region55: #{tpu_custom_call.1} parent=43 // pred_region
          %294 = dma.done [#allocation6], 64
        $region56: #{tpu_custom_call.1} parent=43 // pred_fallthru
          _
        // Predicated region
        $region57: #{tpu_custom_call.1} parent=43 // pred_check
          %p295 = pneg %p110
        $region58: #{tpu_custom_call.1} parent=43 // pred_check_branch
          %297 = sbr.rel (%p295) target = $region60
        $region59: #{tpu_custom_call.1} parent=43 // pred_region
          %298 = dma.done [#allocation9], 128
        $region60: #{tpu_custom_call.1} parent=43 // pred_fallthru
          _
        // Predicated region
        $region61: #{tpu_custom_call.1} parent=43 // pred_check
          %p299 = pneg %p131
        $region62: #{tpu_custom_call.1} parent=43 // pred_check_branch
          %301 = sbr.rel (%p299) target = $region64
        $region63: #{tpu_custom_call.1} parent=43 // pred_region
          %302 = dma.done [#allocation9], 128
        $region64: #{tpu_custom_call.1} parent=43 // pred_fallthru
          _
        // Predicated region
        $region65: #{tpu_custom_call.1} parent=43 // pred_check
          %p303 = pneg %p152
        $region66: #{tpu_custom_call.1} parent=43 // pred_check_branch
          %305 = sbr.rel (%p303) target = $region68
        $region67: #{tpu_custom_call.1} parent=43 // pred_region
          %306 = dma.done [#allocation12], 48
        $region68: #{tpu_custom_call.1} parent=43 // pred_fallthru
          _
        %s307 = sand.u32 %s34, 1
        %s308 = scalar_lea.sflag [#allocation3], %s307
        %s309 = sand.u32 %s34, 1
        %s310 = smul.addr %s309, 24
        %s311 = scalar_lea.vmem [#allocation2], %s310
        %p312 = pneg %p47
        %p313 = pneg %p44
        %p314 = pneg %p68
        %p315 = pneg %p65
        %p316 = pneg %p89
        %p317 = pneg %p86
        %p318 = pneg %p110
        %p319 = pneg %p107
        %p320 = pneg %p131
        %p321 = pneg %p128
        %p322 = pneg %p152
        %p323 = pneg %p149
        %p324 = pneg %p178
        %p325 = pneg %p175
        %s326 = sand.u32 %s165, 1
        %s327 = scalar_lea.sflag [#allocation4], %s326
        %s328 = sand.u32 %s165, 1
        %s329 = smul.addr %s328, 24
        %s330 = scalar_lea.vmem [#allocation13], %s329
        %v332 = vld [vmem:[%s282] sm:$0xff]
        %v333 = vld [vmem:[%s282 + $0x8] sm:$0xff]
        %v334 = vld [vmem:[%s282 + $0x10] sm:$0xff]
        %v335 = vld [vmem:[#allocation11] sm:$0x7]
        %336 = vrot.lane.b32.xlu0 %v332, 19
        %v337 = vpop.permute.xlu0 %336
        %338 = vrot.lane.b32.xlu0 %v333, 19
        %v339 = vpop.permute.xlu0 %338
        %340 = vrot.lane.b32.xlu0 %v334, 19
        %v341 = vpop.permute.xlu0 %340
        %v342 = vlaneseq
        %v343 = vand.u32 %v342, 127
        %vm344 = vcmp.lt.s32.totalorder %v343, 19
        %v345 = vsel %vm344, %v339, %v341
        %v346 = vsel %vm344, %v337, %v339
        %v347 = vsel %vm344, %v341, %v337
        %348 = vrot.lane.b32.xlu0 %v332, 18
        %v349 = vpop.permute.xlu0 %348
        %350 = vrot.lane.b32.xlu0 %v333, 18
        %v351 = vpop.permute.xlu0 %350
        %352 = vrot.lane.b32.xlu0 %v334, 18
        %v353 = vpop.permute.xlu0 %352
        %vm354 = vcmp.lt.s32.totalorder %v343, 18
        %v355 = vsel %vm354, %v351, %v353
        %v356 = vsel %vm354, %v349, %v351
        %v357 = vsel %vm354, %v353, %v349
        %358 = vrot.lane.b32.xlu0 %v332, 17
        %v359 = vpop.permute.xlu0 %358
        %360 = vrot.lane.b32.xlu0 %v333, 17
        %v361 = vpop.permute.xlu0 %360
        %362 = vrot.lane.b32.xlu0 %v334, 17
        %v363 = vpop.permute.xlu0 %362
        %vm364 = vcmp.lt.s32.totalorder %v343, 17
        %v365 = vsel %vm364, %v361, %v363
        %v366 = vsel %vm364, %v359, %v361
        %v367 = vsel %vm364, %v363, %v359
        %368 = vrot.lane.b32.xlu0 %v332, 1
        %v369 = vpop.permute.xlu0 %368
        %370 = vrot.lane.b32.xlu0 %v333, 1
        %v371 = vpop.permute.xlu0 %370
        %372 = vrot.lane.b32.xlu0 %v334, 1
        %v373 = vpop.permute.xlu0 %372
        %vm374 = vcmp.lt.s32.totalorder %v343, 1
        %v375 = vsel %vm374, %v371, %v373
        %v376 = vsel %vm374, %v369, %v371
        %v377 = vsel %vm374, %v373, %v369
        %378 = vrot.lane.b32.xlu0 %v332, 127
        %v379 = vpop.permute.xlu0 %378
        %380 = vrot.lane.b32.xlu0 %v333, 127
        %v381 = vpop.permute.xlu0 %380
        %382 = vrot.lane.b32.xlu0 %v334, 127
        %v383 = vpop.permute.xlu0 %382
        %vm384 = vcmp.lt.s32.totalorder %v343, 127
        %v385 = vsel %vm384, %v381, %v383
        %v386 = vsel %vm384, %v379, %v381
        %v387 = vsel %vm384, %v383, %v379
        %388 = vrot.lane.b32.xlu0 %v332, 111
        %v389 = vpop.permute.xlu0 %388
        %390 = vrot.lane.b32.xlu0 %v333, 111
        %v391 = vpop.permute.xlu0 %390
        %392 = vrot.lane.b32.xlu0 %v334, 111
        %v393 = vpop.permute.xlu0 %392
        %vm394 = vcmp.lt.s32.totalorder %v343, 111
        %v395 = vsel %vm394, %v391, %v393
        %v396 = vsel %vm394, %v389, %v391
        %v397 = vsel %vm394, %v393, %v389
        %398 = vrot.lane.b32.xlu0 %v332, 110
        %v399 = vpop.permute.xlu0 %398
        %400 = vrot.lane.b32.xlu0 %v333, 110
        %v401 = vpop.permute.xlu0 %400
        %402 = vrot.lane.b32.xlu0 %v334, 110
        %v403 = vpop.permute.xlu0 %402
        %vm404 = vcmp.lt.s32.totalorder %v343, 110
        %v405 = vsel %vm404, %v401, %v403
        %v406 = vsel %vm404, %v399, %v401
        %v407 = vsel %vm404, %v403, %v399
        %408 = vrot.lane.b32.xlu0 %v332, 109
        %v409 = vpop.permute.xlu0 %408
        %410 = vrot.lane.b32.xlu0 %v333, 109
        %v411 = vpop.permute.xlu0 %410
        %412 = vrot.lane.b32.xlu0 %v334, 109
        %v413 = vpop.permute.xlu0 %412
        %vm414 = vcmp.lt.s32.totalorder %v343, 109
        %v415 = vsel %vm414, %v411, %v413
        %v416 = vsel %vm414, %v409, %v411
        %v417 = vsel %vm414, %v413, %v409
        %v418 = vpack.c.bf16 %v357, %v347
        %v419 = vpack.c.bf16 %v356, %v346
        %v420 = vpack.c.bf16 %v355, %v345
        %v421 = vpack.c.bf16 %v377, %v367
        %v422 = vpack.c.bf16 %v376, %v366
        %v423 = vpack.c.bf16 %v375, %v365
        %v424 = vpack.c.bf16 %v386, %v332
        %v425 = vpack.c.bf16 %v385, %v333
        %v426 = vpack.c.bf16 %v387, %v334
        %v427 = vpack.c.bf16 %v406, %v396
        %v428 = vpack.c.bf16 %v405, %v395
        %v429 = vpack.c.bf16 %v407, %v397
        %v430 = vpack.c.bf16 %v416, %v416
        %v431 = vpack.c.bf16 %v415, %v415
        %v432 = vpack.c.bf16 %v417, %v417
        %v433 = vld [vmem:[#allocation5] sm:$0xf]
        %v434 = vld [vmem:[#allocation8] sm:$0xff]
        %436 = vset.pattern.permute.xlu0 0
        %437 = vperm.xlu0 %436, %v434
        %v438 = vpop.permute.xlu0 %437
        %vm440 = vcmask 588800
        %v442 = vsel %vm440, %v433, 0
        %vm444 = vcmask 1043456
        %v446 = vsel %vm444, %v430, 0
        %v449 = vsel %vm444, %v431, 0
        %v452 = vsel %vm444, %v432, 0
        %454 = vmatprep.subr.bf16.mxu0 %v419
        %455 = vmatpush1.bf16.msra.mxu0 %v418
        %456 = vmatprep.subr.bf16.mxu0 %v422
        %457 = vmatpush1.bf16.msra.mxu0 %v421
        %458 = vmatprep.subr.bf16.mxu0 %v425
        %459 = vmatpush1.bf16.msra.mxu0 %v424
        %460 = vmatprep.subr.bf16.mxu0 %v428
        %461 = vmatpush1.bf16.msra.mxu0 %v427
        %462 = vmatprep.subr.bf16.mxu0 %v449
        %463 = vmatpush1.bf16.msra.mxu0 %v446
        %464 = vmatprep.subr.bf16.mxu0 0
        %465 = vmatpush1.bf16.msra.mxu0 0
        %466 = vmatprep.subr.bf16.mxu0 0
        %467 = vmatpush1.bf16.msra.mxu0 0
        %468 = vmatprep.subr.bf16.mxu0 0
        %469 = vmatpush1.bf16.msra.mxu0 0
        %470 = vmatprep.subr.bf16.mxu0 0
        %471 = vmatpush1.bf16.msra.mxu0 0
        %472 = vmatprep.subr.bf16.mxu0 0
        %473 = vmatpush1.bf16.msra.mxu0 0
        %474 = vmatprep.subr.bf16.mxu0 0
        %475 = vmatpush1.bf16.msra.mxu0 0
        %476 = vmatprep.subr.bf16.mxu0 0
        %477 = vmatpush1.bf16.msra.mxu0 0
        %478 = vmatprep.subr.bf16.mxu0 0
        %479 = vmatpush1.bf16.msra.mxu0 0
        %480 = vmatprep.subr.bf16.mxu0 0
        %481 = vmatpush1.bf16.msra.mxu0 0
        %482 = vmatprep.subr.bf16.mxu0 0
        %483 = vmatpush1.bf16.msra.mxu0 0
        %484 = vmatprep.subr.bf16.mxu0 0
        %485 = vmatpush1.bf16.msra.mxu0 0
        %486 = vmatprep.mubr.bf16.mxu0 0
        %487 = vmatmul.mubr.bf16.gmra.mrb[0].mxu0 %v442
        %v488 = vpop.f32.mrb[0].mxu0
        %v489 = vadd.f32 %v438, %v488
        %v490 = vpop.f32.mrb[0].mxu0
        %v491 = vadd.f32 %v438, %v490
        %v492 = vpop.f32.mrb[0].mxu0
        %v493 = vpop.f32.mrb[0].mxu0
        %494 = vdwg.mxu0
        %495 = vmatprep.subr.bf16.mxu0 0
        %496 = vmatpush1.bf16.msra.mxu0 %v420
        %497 = vmatprep.subr.bf16.mxu0 0
        %498 = vmatpush1.bf16.msra.mxu0 %v423
        %499 = vmatprep.subr.bf16.mxu0 0
        %500 = vmatpush1.bf16.msra.mxu0 %v426
        %501 = vmatprep.subr.bf16.mxu0 0
        %502 = vmatpush1.bf16.msra.mxu0 %v429
        %503 = vmatprep.subr.bf16.mxu0 0
        %504 = vmatpush1.bf16.msra.mxu0 %v452
        %505 = vmatprep.subr.bf16.mxu0 0
        %506 = vmatpush1.bf16.msra.mxu0 0
        %507 = vmatprep.subr.bf16.mxu0 0
        %508 = vmatpush1.bf16.msra.mxu0 0
        %509 = vmatprep.subr.bf16.mxu0 0
        %510 = vmatpush1.bf16.msra.mxu0 0
        %511 = vmatprep.subr.bf16.mxu0 0
        %512 = vmatpush1.bf16.msra.mxu0 0
        %513 = vmatprep.subr.bf16.mxu0 0
        %514 = vmatpush1.bf16.msra.mxu0 0
        %515 = vmatprep.subr.bf16.mxu0 0
        %516 = vmatpush1.bf16.msra.mxu0 0
        %517 = vmatprep.subr.bf16.mxu0 0
        %518 = vmatpush1.bf16.msra.mxu0 0
        %519 = vmatprep.subr.bf16.mxu0 0
        %520 = vmatpush1.bf16.msra.mxu0 0
        %521 = vmatprep.subr.bf16.mxu0 0
        %522 = vmatpush1.bf16.msra.mxu0 0
        %523 = vmatprep.subr.bf16.mxu0 0
        %524 = vmatpush1.bf16.msra.mxu0 0
        %525 = vmatprep.subr.bf16.mxu0 0
        %526 = vmatpush1.bf16.msra.mxu0 0
        %527 = vmatprep.mubr.bf16.mxu0 0
        %528 = vmatmul.mubr.bf16.gmra.mrb[0].mxu0 %v442
        %v529 = vpop.f32.mrb[0].mxu0
        %v530 = vadd.f32 %v438, %v529
        %v531 = vpop.f32.mrb[0].mxu0
        %v532 = vpop.f32.mrb[0].mxu0
        %v533 = vpop.f32.mrb[0].mxu0
        %534 = vdwg.mxu0
        %v535 = vmax.f32 %v489, 0.0
        %v536 = vmax.f32 %v491, 0.0
        %v537 = vmax.f32 %v530, 0.0
        %v539 = vlaneseq
        %v540 = vshrl.u32 %v539, 7
        %v541 = vsub.s32 0, %v540
        %v542 = vrot.slane %v335, %v541
        %v543 = vlaneseq
        %v544 = vshrl.u32 %v543, 7
        %v545 = vsub.s32 1, %v544
        %v546 = vrot.slane %v335, %v545
        %v547 = vlaneseq
        %v548 = vshrl.u32 %v547, 7
        %v549 = vsub.s32 2, %v548
        %v550 = vrot.slane %v335, %v549
        %v554 = vmul.f32 %v535, %v542
        %v555 = vmul.f32 %v536, %v546
        %v556 = vmul.f32 %v537, %v550
        %557 = vrot.lane.b32.xlu0 %v554, 19
        %v558 = vpop.permute.xlu0 %557
        %559 = vrot.lane.b32.xlu0 %v555, 19
        %v560 = vpop.permute.xlu0 %559
        %561 = vrot.lane.b32.xlu0 %v556, 19
        %v562 = vpop.permute.xlu0 %561
        %v563 = vsel %vm344, %v560, %v562
        %v564 = vsel %vm344, %v558, %v560
        %v565 = vsel %vm344, %v562, %v558
        %566 = vrot.lane.b32.xlu0 %v554, 18
        %v567 = vpop.permute.xlu0 %566
        %568 = vrot.lane.b32.xlu0 %v555, 18
        %v569 = vpop.permute.xlu0 %568
        %570 = vrot.lane.b32.xlu0 %v556, 18
        %v571 = vpop.permute.xlu0 %570
        %v572 = vsel %vm354, %v569, %v571
        %v573 = vsel %vm354, %v567, %v569
        %v574 = vsel %vm354, %v571, %v567
        %575 = vrot.lane.b32.xlu0 %v554, 17
        %v576 = vpop.permute.xlu0 %575
        %577 = vrot.lane.b32.xlu0 %v555, 17
        %v578 = vpop.permute.xlu0 %577
        %579 = vrot.lane.b32.xlu0 %v556, 17
        %v580 = vpop.permute.xlu0 %579
        %v581 = vsel %vm364, %v578, %v580
        %v582 = vsel %vm364, %v576, %v578
        %v583 = vsel %vm364, %v580, %v576
        %584 = vrot.lane.b32.xlu0 %v554, 1
        %v585 = vpop.permute.xlu0 %584
        %586 = vrot.lane.b32.xlu0 %v555, 1
        %v587 = vpop.permute.xlu0 %586
        %588 = vrot.lane.b32.xlu0 %v556, 1
        %v589 = vpop.permute.xlu0 %588
        %v590 = vsel %vm374, %v587, %v589
        %v591 = vsel %vm374, %v585, %v587
        %v592 = vsel %vm374, %v589, %v585
        %593 = vrot.lane.b32.xlu0 %v554, 127
        %v594 = vpop.permute.xlu0 %593
        %595 = vrot.lane.b32.xlu0 %v555, 127
        %v596 = vpop.permute.xlu0 %595
        %597 = vrot.lane.b32.xlu0 %v556, 127
        %v598 = vpop.permute.xlu0 %597
        %v599 = vsel %vm384, %v596, %v598
        %v600 = vsel %vm384, %v594, %v596
        %v601 = vsel %vm384, %v598, %v594
        %602 = vrot.lane.b32.xlu0 %v554, 111
        %v603 = vpop.permute.xlu0 %602
        %604 = vrot.lane.b32.xlu0 %v555, 111
        %v605 = vpop.permute.xlu0 %604
        %606 = vrot.lane.b32.xlu0 %v556, 111
        %v607 = vpop.permute.xlu0 %606
        %v608 = vsel %vm394, %v605, %v607
        %v609 = vsel %vm394, %v603, %v605
        %v610 = vsel %vm394, %v607, %v603
        %611 = vrot.lane.b32.xlu0 %v554, 110
        %v612 = vpop.permute.xlu0 %611
        %613 = vrot.lane.b32.xlu0 %v555, 110
        %v614 = vpop.permute.xlu0 %613
        %615 = vrot.lane.b32.xlu0 %v556, 110
        %v616 = vpop.permute.xlu0 %615
        %v617 = vsel %vm404, %v614, %v616
        %v618 = vsel %vm404, %v612, %v614
        %v619 = vsel %vm404, %v616, %v612
        %620 = vrot.lane.b32.xlu0 %v554, 109
        %v621 = vpop.permute.xlu0 %620
        %622 = vrot.lane.b32.xlu0 %v555, 109
        %v623 = vpop.permute.xlu0 %622
        %624 = vrot.lane.b32.xlu0 %v556, 109
        %v625 = vpop.permute.xlu0 %624
        %v626 = vsel %vm414, %v623, %v625
        %v627 = vsel %vm414, %v621, %v623
        %v628 = vsel %vm414, %v625, %v621
        %v629 = vpack.c.bf16 %v574, %v565
        %v630 = vpack.c.bf16 %v573, %v564
        %v631 = vpack.c.bf16 %v572, %v563
        %v632 = vpack.c.bf16 %v592, %v583
        %v633 = vpack.c.bf16 %v591, %v582
        %v634 = vpack.c.bf16 %v590, %v581
        %v635 = vpack.c.bf16 %v600, %v554
        %v636 = vpack.c.bf16 %v599, %v555
        %v637 = vpack.c.bf16 %v601, %v556
        %v638 = vpack.c.bf16 %v618, %v609
        %v639 = vpack.c.bf16 %v617, %v608
        %v640 = vpack.c.bf16 %v619, %v610
        %v641 = vpack.c.bf16 %v627, %v627
        %v642 = vpack.c.bf16 %v626, %v626
        %v643 = vpack.c.bf16 %v628, %v628
        %v644 = vld [vmem:[#allocation7] sm:$0xf]
        %v645 = vld [vmem:[#allocation10] sm:$0xff]
        %647 = vset.pattern.permute.xlu0 0
        %648 = vperm.xlu0 %647, %v645
        %v649 = vpop.permute.xlu0 %648
        %v652 = vsel %vm440, %v644, 0
        %v655 = vsel %vm444, %v641, 0
        %v658 = vsel %vm444, %v642, 0
        %v661 = vsel %vm444, %v643, 0
        %663 = vmatprep.subr.bf16.mxu0 %v630
        %664 = vmatpush1.bf16.msra.mxu0 %v629
        %665 = vmatprep.subr.bf16.mxu0 %v633
        %666 = vmatpush1.bf16.msra.mxu0 %v632
        %667 = vmatprep.subr.bf16.mxu0 %v636
        %668 = vmatpush1.bf16.msra.mxu0 %v635
        %669 = vmatprep.subr.bf16.mxu0 %v639
        %670 = vmatpush1.bf16.msra.mxu0 %v638
        %671 = vmatprep.subr.bf16.mxu0 %v658
        %672 = vmatpush1.bf16.msra.mxu0 %v655
        %673 = vmatprep.subr.bf16.mxu0 0
        %674 = vmatpush1.bf16.msra.mxu0 0
        %675 = vmatprep.subr.bf16.mxu0 0
        %676 = vmatpush1.bf16.msra.mxu0 0
        %677 = vmatprep.subr.bf16.mxu0 0
        %678 = vmatpush1.bf16.msra.mxu0 0
        %679 = vmatprep.subr.bf16.mxu0 0
        %680 = vmatpush1.bf16.msra.mxu0 0
        %681 = vmatprep.subr.bf16.mxu0 0
        %682 = vmatpush1.bf16.msra.mxu0 0
        %683 = vmatprep.subr.bf16.mxu0 0
        %684 = vmatpush1.bf16.msra.mxu0 0
        %685 = vmatprep.subr.bf16.mxu0 0
        %686 = vmatpush1.bf16.msra.mxu0 0
        %687 = vmatprep.subr.bf16.mxu0 0
        %688 = vmatpush1.bf16.msra.mxu0 0
        %689 = vmatprep.subr.bf16.mxu0 0
        %690 = vmatpush1.bf16.msra.mxu0 0
        %691 = vmatprep.subr.bf16.mxu0 0
        %692 = vmatpush1.bf16.msra.mxu0 0
        %693 = vmatprep.subr.bf16.mxu0 0
        %694 = vmatpush1.bf16.msra.mxu0 0
        %695 = vmatprep.mubr.bf16.mxu0 0
        %696 = vmatmul.mubr.bf16.gmra.mrb[0].mxu0 %v652
        %v697 = vpop.f32.mrb[0].mxu0
        %v698 = vadd.f32 %v649, %v697
        %v699 = vpop.f32.mrb[0].mxu0
        %v700 = vadd.f32 %v649, %v699
        %v701 = vpop.f32.mrb[0].mxu0
        %v702 = vpop.f32.mrb[0].mxu0
        %703 = vdwg.mxu0
        %704 = vmatprep.subr.bf16.mxu0 0
        %705 = vmatpush1.bf16.msra.mxu0 %v631
        %706 = vmatprep.subr.bf16.mxu0 0
        %707 = vmatpush1.bf16.msra.mxu0 %v634
        %708 = vmatprep.subr.bf16.mxu0 0
        %709 = vmatpush1.bf16.msra.mxu0 %v637
        %710 = vmatprep.subr.bf16.mxu0 0
        %711 = vmatpush1.bf16.msra.mxu0 %v640
        %712 = vmatprep.subr.bf16.mxu0 0
        %713 = vmatpush1.bf16.msra.mxu0 %v661
        %714 = vmatprep.subr.bf16.mxu0 0
        %715 = vmatpush1.bf16.msra.mxu0 0
        %716 = vmatprep.subr.bf16.mxu0 0
        %717 = vmatpush1.bf16.msra.mxu0 0
        %718 = vmatprep.subr.bf16.mxu0 0
        %719 = vmatpush1.bf16.msra.mxu0 0
        %720 = vmatprep.subr.bf16.mxu0 0
        %721 = vmatpush1.bf16.msra.mxu0 0
        %722 = vmatprep.subr.bf16.mxu0 0
        %723 = vmatpush1.bf16.msra.mxu0 0
        %724 = vmatprep.subr.bf16.mxu0 0
        %725 = vmatpush1.bf16.msra.mxu0 0
        %726 = vmatprep.subr.bf16.mxu0 0
        %727 = vmatpush1.bf16.msra.mxu0 0
        %728 = vmatprep.subr.bf16.mxu0 0
        %729 = vmatpush1.bf16.msra.mxu0 0
        %730 = vmatprep.subr.bf16.mxu0 0
        %731 = vmatpush1.bf16.msra.mxu0 0
        %732 = vmatprep.subr.bf16.mxu0 0
        %733 = vmatpush1.bf16.msra.mxu0 0
        %734 = vmatprep.subr.bf16.mxu0 0
        %735 = vmatpush1.bf16.msra.mxu0 0
        %736 = vmatprep.mubr.bf16.mxu0 0
        %737 = vmatmul.mubr.bf16.gmra.mrb[0].mxu0 %v652
        %v738 = vpop.f32.mrb[0].mxu0
        %v739 = vadd.f32 %v649, %v738
        %v740 = vpop.f32.mrb[0].mxu0
        %v741 = vpop.f32.mrb[0].mxu0
        %v742 = vpop.f32.mrb[0].mxu0
        %743 = vdwg.mxu0
        %v744 = vadd.f32 %v698, %v332
        %v745 = vadd.f32 %v700, %v333
        %v746 = vadd.f32 %v739, %v334
        %v747 = vmax.f32 %v744, 0.0
        %v748 = vmax.f32 %v745, 0.0
        %v749 = vmax.f32 %v746, 0.0
        %750 = vst [vmem:[%s330] sm:$0xff] %v747
        %751 = vst [vmem:[%s330 + $0x8] sm:$0xff] %v748
        %752 = vst [vmem:[%s330 + $0x10] sm:$0xff] %v749
        %s753 = sand.u32 %s165, 1
        %s754 = scalar_lea.sflag [#allocation4], %s753
        %s755 = sand.u32 %s165, 1
        %s756 = smul.addr %s755, 24
        %s757 = scalar_lea.vmem [#allocation13], %s756
        // Predicated region
        $region69: #{tpu_custom_call.1} parent=43 // pred_check
          %p758 = pneg %p175
        $region70: #{tpu_custom_call.1} parent=43 // pred_check_branch
          %760 = sbr.rel (%p758) target = $region72
        $region71: #{tpu_custom_call.1} parent=43 // pred_region
          %s762 = ssub.s32 384, 384
          %763 = vsyncadd %s754, %s762
          %s764 = smul.addr %s26, 3
          %s765 = smul.addr %s764, 128
          %s766 = scalar_lea.hbm %s6, %s765
          %s768 = sshll.u32 %s757, 4
          %s769 = int_to_ptr.vmem [resolvable:$true] %s768
          %771 = dma.vmem_to_hbm [thread:$0]  %s769, 384, %s766, %s754
        $region72: #{tpu_custom_call.1} parent=43 // pred_fallthru
          _
      $region44: #{tpu_custom_call.1} parent=5 // pred_fallthru
        _
      %p772 = scmp.le.s32.totalorder 2, %s21
      // Predicated region
      $region73: #{tpu_custom_call.1} parent=5 // pred_check
        %p773 = pneg %p772
      $region74: #{tpu_custom_call.1} parent=5 // pred_check_branch
        %775 = sbr.rel (%p773) target = $region76
      $region75: #{tpu_custom_call.1} parent=5 // pred_region
        %s776 = ssub.s32 %s21, 2
        // Predicated region
        $region77: #{tpu_custom_call.1} parent=75 // pred_check
          %p777 = pneg %p181
        $region78: #{tpu_custom_call.1} parent=75 // pred_check_branch
          %779 = sbr.rel (%p777) target = $region80
        $region79: #{tpu_custom_call.1} parent=75 // pred_region
          %s780 = sand.u32 %s166, 1
          %s781 = scalar_lea.sflag [#allocation4], %s780
          %s782 = sand.u32 %s166, 1
          %s783 = smul.addr %s782, 24
          %s784 = scalar_lea.vmem [#allocation13], %s783
          %785 = dma.done %s781, 384
        $region80: #{tpu_custom_call.1} parent=75 // pred_fallthru
          _
      $region76: #{tpu_custom_call.1} parent=5 // pred_fallthru
        _
    $region6: #{tpu_custom_call.1} parent=1 // loop_footer
      %s25 = sadd.s32 1, %s21
    $region7: #{tpu_custom_call.1} parent=1 // loop_footer_branch
      %20 = sbr.rel target = $region3
    $region8: #{tpu_custom_call.1} parent=1 // loop_exit
      _
    %786 = vsyncpa [#allocation3], 1
    %s787 = scalar_lea.sflag [#allocation3], 1
    %788 = vsyncpa %s787, 1
    %789 = vsyncpa [#allocation6], 1
    %790 = vsyncpa [#allocation9], 1
    %791 = vsyncpa [#allocation12], 1
    %792 = vsyncpa [#allocation4], 1
    %s793 = scalar_lea.sflag [#allocation4], 1
    %794 = vsyncpa %s793, 1

// kernel: tpu_custom_call.1
$region0: #{tpu_custom_call.1}
  #allocation0 [shape = 'u32[]', space=smem, size = 0x4, offset = 0x4, fixed_abs, tag = 'smem constant byte address 0x4 - core index']
  #allocation1 [shape = 'u32[144,128]{1,0:T(1,128)}', space=vmem, size = 0x12000, scoped, tag = 'internal scratch']
  %s0 = inlined_call_operand.hbm [shape: f32[2,8,384], index: 0, kind: input, shape index: {}]
  %s1 = inlined_call_operand.hbm [shape: bf16[9,8,8], index: 1, kind: input, shape index: {}]
  %s2 = inlined_call_operand.hbm [shape: bf16[9,8,8], index: 2, kind: input, shape index: {}]
  %s3 = inlined_call_operand.hbm [shape: f32[8,1], index: 3, kind: input, shape index: {}]
  %s4 = inlined_call_operand.hbm [shape: f32[8,1], index: 4, kind: input, shape index: {}]
  %s5 = inlined_call_operand.hbm [shape: f32[1,384], index: 5, kind: input, shape index: {}]
  %s6 = inlined_call_operand.hbm [shape: f32[2,8,384], index: 6, kind: output, shape index: {}]
  %s7 = sld [smem:[#allocation0]]
  $region81: #{tpu_custom_call.1} parent=0
    _
  %s9 = ssub.s32 1, %s7
  %s10 = scalar_select 0, %s9, %s7
  $region1: #{tpu_custom_call.1} parent=0
    #allocation2 [shape = 'u8[24576]{0}', space=vmem, size = 0x6000, scoped, tag = 'input window, operand 0']
    #allocation3 [shape = 's32[2]{0}', space=sflag, size = 0x8, scoped, tag = 'scoped memory for tpu_custom_call.1']
    #allocation4 [shape = 's32[2]{0}', space=sflag, size = 0x8, scoped, tag = 'scoped memory for tpu_custom_call.1']
    #allocation5 [shape = 'u8[18432]{0}', space=vmem, size = 0x4800, scoped, tag = 'input window, operand 1, single buffered']
    #allocation6 [shape = 's32[1]{0}', space=sflag, size = 0x4, scoped, tag = 'scoped memory for tpu_custom_call.1']
    #allocation7 [shape = 'u8[18432]{0}', space=vmem, size = 0x4800, scoped, tag = 'input window, operand 2, single buffered']
    #allocation8 [shape = 'u8[4096]{0}', space=vmem, size = 0x1000, scoped, tag = 'input window, operand 3, single buffered']
    #allocation9 [shape = 's32[1]{0}', space=sflag, size = 0x4, scoped, tag = 'scoped memory for tpu_custom_call.1']
    #allocation10 [shape = 'u8[4096]{0}', space=vmem, size = 0x1000, scoped, tag = 'input window, operand 4, single buffered']
    #allocation11 [shape = 'u8[1536]{0}', space=vmem, size = 0x800, scoped, tag = 'input window, operand 5, single buffered']
    #allocation12 [shape = 's32[1]{0}', space=sflag, size = 0x4, scoped, tag = 'scoped memory for tpu_custom_call.1']
    #allocation13 [shape = 'u8[24576]{0}', space=vmem, size = 0x6000, scoped, tag = 'output window, operand 0']
    %11 = vsyncpa [#allocation3], 0
    %s12 = scalar_lea.sflag [#allocation3], 1
    %13 = vsyncpa %s12, 0
    %14 = vsyncpa [#allocation6], 0
    %15 = vsyncpa [#allocation9], 0
    %16 = vsyncpa [#allocation12], 0
    %17 = vsyncpa [#allocation4], 0
    %s18 = scalar_lea.sflag [#allocation4], 1
    %19 = vsyncpa %s18, 0
    loop: start=0, step=1, limit=4
    $region2: #{tpu_custom_call.1} parent=1 // loop_pre_header
      _
    $region3: #{tpu_custom_call.1} parent=1 // loop_header
      %s21 = sphi 0, %s25
      %p22 = scmp.ge.s32.totalorder %s21, 4
      %s31 = sphi 0, %s33
      %s34 = sphi 0, %s31
      %s35 = sphi 0, %s34
      %s51 = sphi 0, %s35
      %s55 = sphi 0, %s55
      %s57 = sphi 0, %s55
      %s58 = sphi 0, %s57
      %s72 = sphi 0, %s58
      %s76 = sphi 0, %s76
      %s78 = sphi 0, %s76
      %s79 = sphi 0, %s78
      %s93 = sphi 0, %s79
      %s97 = sphi 0, %s97
      %s99 = sphi 0, %s97
      %s100 = sphi 0, %s99
      %s114 = sphi 0, %s100
      %s118 = sphi 0, %s118
      %s120 = sphi 0, %s118
      %s121 = sphi 0, %s120
      %s135 = sphi 0, %s121
      %s139 = sphi 0, %s139
      %s141 = sphi 0, %s139
      %s142 = sphi 0, %s141
      %s156 = sphi 0, %s142
      %s162 = sphi 0, %s164
      %s165 = sphi 0, %s162
      %s166 = sphi 0, %s165
      %s182 = sphi 0, %s166
    $region4: #{tpu_custom_call.1} parent=1 // loop_header_branch
      %24 = sbr.rel (%p22) target = $region8
    $region5: #{tpu_custom_call.1} parent=1 // loop_body
      %s26 = ssub.s32 %s21, 1
      %s27 = ssub.s32 %s21, 2
      %s28 = sadd.s32 %s21, 1
      %s29 = ssub.s32 %s21, %s28
      %p30 = scmp.eq.s32.totalorder %s29, 0
      %s32 = sadd.s32 %s31, 1
      %s33 = scalar_select %p30, %s31, %s32
      %p36 = pneg %p30
      %p37 = scmp.eq.s32.totalorder %s21, 1
      %p38 = por %p36, %p37
      %p39 = scmp.ne.s32.totalorder %s31, %s34
      %p40 = scmp.eq.s32.totalorder %s21, 0
      %p41 = por %p39, %p40
      %p42 = scmp.ne.s32.totalorder %s31, %s34
      %p43 = scmp.eq.s32.totalorder %s26, 1
      %p44 = por %p42, %p43
      %p45 = scmp.ne.s32.totalorder %s34, %s35
      %p46 = scmp.eq.s32.totalorder %s26, 0
      %p47 = por %p45, %p46
      %p48 = scmp.ne.s32.totalorder %s34, %s35
      %p49 = scmp.eq.s32.totalorder %s27, 1
      %p50 = por %p48, %p49
      %p52 = scmp.ne.s32.totalorder %s35, %s51
      %p53 = scmp.eq.s32.totalorder %s27, 0
      %p54 = por %p52, %p53
      %s56 = sadd.s32 %s55, 1
      %p59 = scmp.eq.s32.totalorder %s21, 1
      %p60 = scmp.ne.s32.totalorder %s55, %s57
      %p61 = scmp.eq.s32.totalorder %s21, 0
      %p62 = por %p60, %p61
      %p63 = scmp.ne.s32.totalorder %s55, %s57
      %p64 = scmp.eq.s32.totalorder %s26, 1
      %p65 = por %p63, %p64
      %p66 = scmp.ne.s32.totalorder %s57, %s58
      %p67 = scmp.eq.s32.totalorder %s26, 0
      %p68 = por %p66, %p67
      %p69 = scmp.ne.s32.totalorder %s57, %s58
      %p70 = scmp.eq.s32.totalorder %s27, 1
      %p71 = por %p69, %p70
      %p73 = scmp.ne.s32.totalorder %s58, %s72
      %p74 = scmp.eq.s32.totalorder %s27, 0
      %p75 = por %p73, %p74
      %s77 = sadd.s32 %s76, 1
      %p80 = scmp.eq.s32.totalorder %s21, 1
      %p81 = scmp.ne.s32.totalorder %s76, %s78
      %p82 = scmp.eq.s32.totalorder %s21, 0
      %p83 = por %p81, %p82
      %p84 = scmp.ne.s32.totalorder %s76, %s78
      %p85 = scmp.eq.s32.totalorder %s26, 1
      %p86 = por %p84, %p85
      %p87 = scmp.ne.s32.totalorder %s78, %s79
      %p88 = scmp.eq.s32.totalorder %s26, 0
      %p89 = por %p87, %p88
      %p90 = scmp.ne.s32.totalorder %s78, %s79
      %p91 = scmp.eq.s32.totalorder %s27, 1
      %p92 = por %p90, %p91
      %p94 = scmp.ne.s32.totalorder %s79, %s93
      %p95 = scmp.eq.s32.totalorder %s27, 0
      %p96 = por %p94, %p95
      %s98 = sadd.s32 %s97, 1
      %p101 = scmp.eq.s32.totalorder %s21, 1
      %p102 = scmp.ne.s32.totalorder %s97, %s99
      %p103 = scmp.eq.s32.totalorder %s21, 0
      %p104 = por %p102, %p103
      %p105 = scmp.ne.s32.totalorder %s97, %s99
      %p106 = scmp.eq.s32.totalorder %s26, 1
      %p107 = por %p105, %p106
      %p108 = scmp.ne.s32.totalorder %s99, %s100
      %p109 = scmp.eq.s32.totalorder %s26, 0
      %p110 = por %p108, %p109
      %p111 = scmp.ne.s32.totalorder %s99, %s100
      %p112 = scmp.eq.s32.totalorder %s27, 1
      %p113 = por %p111, %p112
      %p115 = scmp.ne.s32.totalorder %s100, %s114
      %p116 = scmp.eq.s32.totalorder %s27, 0
      %p117 = por %p115, %p116
      %s119 = sadd.s32 %s118, 1
      %p122 = scmp.eq.s32.totalorder %s21, 1
      %p123 = scmp.ne.s32.totalorder %s118, %s120
      %p124 = scmp.eq.s32.totalorder %s21, 0
      %p125 = por %p123, %p124
      %p126 = scmp.ne.s32.totalorder %s118, %s120
      %p127 = scmp.eq.s32.totalorder %s26, 1
      %p128 = por %p126, %p127
      %p129 = scmp.ne.s32.totalorder %s120, %s121
      %p130 = scmp.eq.s32.totalorder %s26, 0
      %p131 = por %p129, %p130
      %p132 = scmp.ne.s32.totalorder %s120, %s121
      %p133 = scmp.eq.s32.totalorder %s27, 1
      %p134 = por %p132, %p133
      %p136 = scmp.ne.s32.totalorder %s121, %s135
      %p137 = scmp.eq.s32.totalorder %s27, 0
      %p138 = por %p136, %p137
      %s140 = sadd.s32 %s139, 1
      %p143 = scmp.eq.s32.totalorder %s21, 1
      %p144 = scmp.ne.s32.totalorder %s139, %s141
      %p145 = scmp.eq.s32.totalorder %s21, 0
      %p146 = por %p144, %p145
      %p147 = scmp.ne.s32.totalorder %s139, %s141
      %p148 = scmp.eq.s32.totalorder %s26, 1
      %p149 = por %p147, %p148
      %p150 = scmp.ne.s32.totalorder %s141, %s142
      %p151 = scmp.eq.s32.totalorder %s26, 0
      %p152 = por %p150, %p151
      %p153 = scmp.ne.s32.totalorder %s141, %s142
      %p154 = scmp.eq.s32.totalorder %s27, 1
      %p155 = por %p153, %p154
      %p157 = scmp.ne.s32.totalorder %s142, %s156
      %p158 = scmp.eq.s32.totalorder %s27, 0
      %p159 = por %p157, %p158
      %s160 = ssub.s32 %s21, %s28
      %p161 = scmp.eq.s32.totalorder %s160, 0
      %s163 = sadd.s32 %s162, 1
      %s164 = scalar_select %p161, %s162, %s163
      %p167 = pneg %p161
      %p168 = scmp.eq.s32.totalorder %s21, 1
      %p169 = por %p167, %p168
      %p170 = scmp.ne.s32.totalorder %s162, %s165
      %p171 = scmp.eq.s32.totalorder %s21, 0
      %p172 = por %p170, %p171
      %p173 = scmp.ne.s32.totalorder %s162, %s165
      %p174 = scmp.eq.s32.totalorder %s26, 1
      %p175 = por %p173, %p174
      %p176 = scmp.ne.s32.totalorder %s165, %s166
      %p177 = scmp.eq.s32.totalorder %s26, 0
      %p178 = por %p176, %p177
      %p179 = scmp.ne.s32.totalorder %s165, %s166
      %p180 = scmp.eq.s32.totalorder %s27, 1
      %p181 = por %p179, %p180
      %p183 = scmp.ne.s32.totalorder %s166, %s182
      %p184 = scmp.eq.s32.totalorder %s27, 0
      %p185 = por %p183, %p184
      %p186 = scmp.le.s32.totalorder 1, %s21
      %p187 = scmp.lt.s32.totalorder %s21, 3
      %p188 = pnand %p186, %p187
      %p189 = pneg %p188
      // Predicated region
      $region9: #{tpu_custom_call.1} parent=5 // pred_check
        _
      $region10: #{tpu_custom_call.1} parent=5 // pred_check_branch
        %191 = sbr.rel (%p188) target = $region12
      $region11: #{tpu_custom_call.1} parent=5 // pred_region
        %s192 = ssub.s32 %s21, 1
        // Predicated region
        $region13: #{tpu_custom_call.1} parent=11 // pred_check
          %p193 = pneg %p68
        $region14: #{tpu_custom_call.1} parent=11 // pred_check_branch
          %195 = sbr.rel (%p193) target = $region16
        $region15: #{tpu_custom_call.1} parent=11 // pred_region
          %s197 = ssub.s32 576, 576
          %198 = vsyncadd [#allocation6], %s197
          %s199 = sshll.u32 [#allocation5], 4
          %s200 = int_to_ptr.vmem [resolvable:$true] %s199
          %205 = dma.hbm_to_vmem [thread:$0]  %s1, 576, %s200, [#allocation6], 64, 64, 4
        $region16: #{tpu_custom_call.1} parent=11 // pred_fallthru
          _
        // Predicated region
        $region17: #{tpu_custom_call.1} parent=11 // pred_check
          %p206 = pneg %p89
        $region18: #{tpu_custom_call.1} parent=11 // pred_check_branch
          %208 = sbr.rel (%p206) target = $region20
        $region19: #{tpu_custom_call.1} parent=11 // pred_region
          %s210 = ssub.s32 576, 576
          %211 = vsyncadd [#allocation6], %s210
          %s212 = sshll.u32 [#allocation7], 4
          %s213 = int_to_ptr.vmem [resolvable:$true] %s212
          %218 = dma.hbm_to_vmem [thread:$0]  %s2, 576, %s213, [#allocation6], 64, 64, 4
        $region20: #{tpu_custom_call.1} parent=11 // pred_fallthru
          _
        // Predicated region
        $region21: #{tpu_custom_call.1} parent=11 // pred_check
          %p219 = pneg %p110
        $region22: #{tpu_custom_call.1} parent=11 // pred_check_branch
          %221 = sbr.rel (%p219) target = $region24
        $region23: #{tpu_custom_call.1} parent=11 // pred_region
          %s223 = ssub.s32 128, 128
          %224 = vsyncadd [#allocation9], %s223
          %s226 = sshll.u32 [#allocation8], 4
          %s227 = int_to_ptr.vmem [resolvable:$true] %s226
          %229 = dma.hbm_to_vmem [thread:$0]  %s3, 128, %s227, [#allocation9]
        $region24: #{tpu_custom_call.1} parent=11 // pred_fallthru
          _
        // Predicated region
        $region25: #{tpu_custom_call.1} parent=11 // pred_check
          %p230 = pneg %p131
        $region26: #{tpu_custom_call.1} parent=11 // pred_check_branch
          %232 = sbr.rel (%p230) target = $region28
        $region27: #{tpu_custom_call.1} parent=11 // pred_region
          %s234 = ssub.s32 128, 128
          %235 = vsyncadd [#allocation9], %s234
          %s237 = sshll.u32 [#allocation10], 4
          %s238 = int_to_ptr.vmem [resolvable:$true] %s237
          %240 = dma.hbm_to_vmem [thread:$0]  %s4, 128, %s238, [#allocation9]
        $region28: #{tpu_custom_call.1} parent=11 // pred_fallthru
          _
        // Predicated region
        $region29: #{tpu_custom_call.1} parent=11 // pred_check
          %p241 = pneg %p152
        $region30: #{tpu_custom_call.1} parent=11 // pred_check_branch
          %243 = sbr.rel (%p241) target = $region32
        $region31: #{tpu_custom_call.1} parent=11 // pred_region
          %s245 = ssub.s32 48, 48
          %246 = vsyncadd [#allocation12], %s245
          %s248 = sshll.u32 [#allocation11], 4
          %s249 = int_to_ptr.vmem [resolvable:$true] %s248
          %251 = dma.hbm_to_vmem [thread:$0]  %s5, 48, %s249, [#allocation12]
        $region32: #{tpu_custom_call.1} parent=11 // pred_fallthru
          _
      $region12: #{tpu_custom_call.1} parent=5 // pred_fallthru
        _
      %p252 = scmp.lt.s32.totalorder %s21, 2
      // Predicated region
      $region33: #{tpu_custom_call.1} parent=5 // pred_check
        %p253 = pneg %p252
      $region34: #{tpu_custom_call.1} parent=5 // pred_check_branch
        %255 = sbr.rel (%p253) target = $region36
      $region35: #{tpu_custom_call.1} parent=5 // pred_region
        // Predicated region
        $region37: #{tpu_custom_call.1} parent=35 // pred_check
          %p256 = pneg %p41
        $region38: #{tpu_custom_call.1} parent=35 // pred_check_branch
          %258 = sbr.rel (%p256) target = $region40
        $region39: #{tpu_custom_call.1} parent=35 // pred_region
          %s259 = sand.u32 %s31, 1
          %s260 = scalar_lea.sflag [#allocation3], %s259
          %s261 = sand.u32 %s31, 1
          %s262 = smul.addr %s261, 24
          %s263 = scalar_lea.vmem [#allocation2], %s262
          %s265 = ssub.s32 384, 384
          %266 = vsyncadd %s260, %s265
          %s267 = smul.addr %s21, 3
          %s268 = smul.addr %s267, 128
          %s269 = scalar_lea.hbm %s0, %s268
          %s271 = sshll.u32 %s263, 4
          %s272 = int_to_ptr.vmem [resolvable:$true] %s271
          %274 = dma.hbm_to_vmem [thread:$0]  %s269, 384, %s272, %s260
        $region40: #{tpu_custom_call.1} parent=35 // pred_fallthru
          _
      $region36: #{tpu_custom_call.1} parent=5 // pred_fallthru
        _
      %p275 = scmp.le.s32.totalorder 1, %s21
      %p276 = scmp.lt.s32.totalorder %s21, 3
      %p277 = pnand %p275, %p276
      %p278 = pneg %p277
      // Predicated region
      $region41: #{tpu_custom_call.1} parent=5 // pred_check
        _
      $region42: #{tpu_custom_call.1} parent=5 // pred_check_branch
        %280 = sbr.rel (%p277) target = $region44
      $region43: #{tpu_custom_call.1} parent=5 // pred_region
        %s281 = ssub.s32 %s21, 1
        %s282 = sand.u32 %s34, 1
        %s283 = scalar_lea.sflag [#allocation3], %s282
        %s284 = sand.u32 %s34, 1
        %s285 = smul.addr %s284, 24
        %s286 = scalar_lea.vmem [#allocation2], %s285
        // Predicated region
        $region45: #{tpu_custom_call.1} parent=43 // pred_check
          %p287 = pneg %p47
        $region46: #{tpu_custom_call.1} parent=43 // pred_check_branch
          %289 = sbr.rel (%p287) target = $region48
        $region47: #{tpu_custom_call.1} parent=43 // pred_region
          %290 = dma.done %s283, 384
        $region48: #{tpu_custom_call.1} parent=43 // pred_fallthru
          _
        // Predicated region
        $region49: #{tpu_custom_call.1} parent=43 // pred_check
          %p291 = pneg %p68
        $region50: #{tpu_custom_call.1} parent=43 // pred_check_branch
          %293 = sbr.rel (%p291) target = $region52
        $region51: #{tpu_custom_call.1} parent=43 // pred_region
          %294 = dma.done [#allocation6], 576
        $region52: #{tpu_custom_call.1} parent=43 // pred_fallthru
          _
        // Predicated region
        $region53: #{tpu_custom_call.1} parent=43 // pred_check
          %p295 = pneg %p89
        $region54: #{tpu_custom_call.1} parent=43 // pred_check_branch
          %297 = sbr.rel (%p295) target = $region56
        $region55: #{tpu_custom_call.1} parent=43 // pred_region
          %298 = dma.done [#allocation6], 576
        $region56: #{tpu_custom_call.1} parent=43 // pred_fallthru
          _
        // Predicated region
        $region57: #{tpu_custom_call.1} parent=43 // pred_check
          %p299 = pneg %p110
        $region58: #{tpu_custom_call.1} parent=43 // pred_check_branch
          %301 = sbr.rel (%p299) target = $region60
        $region59: #{tpu_custom_call.1} parent=43 // pred_region
          %302 = dma.done [#allocation9], 128
        $region60: #{tpu_custom_call.1} parent=43 // pred_fallthru
          _
        // Predicated region
        $region61: #{tpu_custom_call.1} parent=43 // pred_check
          %p303 = pneg %p131
        $region62: #{tpu_custom_call.1} parent=43 // pred_check_branch
          %305 = sbr.rel (%p303) target = $region64
        $region63: #{tpu_custom_call.1} parent=43 // pred_region
          %306 = dma.done [#allocation9], 128
        $region64: #{tpu_custom_call.1} parent=43 // pred_fallthru
          _
        // Predicated region
        $region65: #{tpu_custom_call.1} parent=43 // pred_check
          %p307 = pneg %p152
        $region66: #{tpu_custom_call.1} parent=43 // pred_check_branch
          %309 = sbr.rel (%p307) target = $region68
        $region67: #{tpu_custom_call.1} parent=43 // pred_region
          %310 = dma.done [#allocation12], 48
        $region68: #{tpu_custom_call.1} parent=43 // pred_fallthru
          _
        %s311 = sand.u32 %s34, 1
        %s312 = scalar_lea.sflag [#allocation3], %s311
        %s313 = sand.u32 %s34, 1
        %s314 = smul.addr %s313, 24
        %s315 = scalar_lea.vmem [#allocation2], %s314
        %p316 = pneg %p47
        %p317 = pneg %p44
        %p318 = pneg %p68
        %p319 = pneg %p65
        %p320 = pneg %p89
        %p321 = pneg %p86
        %p322 = pneg %p110
        %p323 = pneg %p107
        %p324 = pneg %p131
        %p325 = pneg %p128
        %p326 = pneg %p152
        %p327 = pneg %p149
        %p328 = pneg %p178
        %p329 = pneg %p175
        %s330 = sand.u32 %s165, 1
        %s331 = scalar_lea.sflag [#allocation4], %s330
        %s332 = sand.u32 %s165, 1
        %s333 = smul.addr %s332, 24
        %s334 = scalar_lea.vmem [#allocation13], %s333
        %v336 = vld [vmem:[%s286] sm:$0xff]
        %v337 = vld [vmem:[%s286 + $0x8] sm:$0xff]
        %v338 = vld [vmem:[%s286 + $0x10] sm:$0xff]
        %v339 = vld [vmem:[#allocation11] sm:$0x7]
        %340 = vrot.lane.b32.xlu0 %v336, 19
        %v341 = vpop.permute.xlu0 %340
        %342 = vrot.lane.b32.xlu0 %v337, 19
        %v343 = vpop.permute.xlu0 %342
        %344 = vrot.lane.b32.xlu0 %v338, 19
        %v345 = vpop.permute.xlu0 %344
        %v346 = vlaneseq
        %v347 = vand.u32 %v346, 127
        %vm348 = vcmp.lt.s32.totalorder %v347, 19
        %v349 = vsel %vm348, %v343, %v345
        %v350 = vsel %vm348, %v341, %v343
        %v351 = vsel %vm348, %v345, %v341
        %352 = vrot.lane.b32.xlu0 %v336, 18
        %v353 = vpop.permute.xlu0 %352
        %354 = vrot.lane.b32.xlu0 %v337, 18
        %v355 = vpop.permute.xlu0 %354
        %356 = vrot.lane.b32.xlu0 %v338, 18
        %v357 = vpop.permute.xlu0 %356
        %vm358 = vcmp.lt.s32.totalorder %v347, 18
        %v359 = vsel %vm358, %v355, %v357
        %v360 = vsel %vm358, %v353, %v355
        %v361 = vsel %vm358, %v357, %v353
        %362 = vrot.lane.b32.xlu0 %v336, 17
        %v363 = vpop.permute.xlu0 %362
        %364 = vrot.lane.b32.xlu0 %v337, 17
        %v365 = vpop.permute.xlu0 %364
        %366 = vrot.lane.b32.xlu0 %v338, 17
        %v367 = vpop.permute.xlu0 %366
        %vm368 = vcmp.lt.s32.totalorder %v347, 17
        %v369 = vsel %vm368, %v365, %v367
        %v370 = vsel %vm368, %v363, %v365
        %v371 = vsel %vm368, %v367, %v363
        %372 = vrot.lane.b32.xlu0 %v336, 1
        %v373 = vpop.permute.xlu0 %372
        %374 = vrot.lane.b32.xlu0 %v337, 1
        %v375 = vpop.permute.xlu0 %374
        %376 = vrot.lane.b32.xlu0 %v338, 1
        %v377 = vpop.permute.xlu0 %376
        %vm378 = vcmp.lt.s32.totalorder %v347, 1
        %v379 = vsel %vm378, %v375, %v377
        %v380 = vsel %vm378, %v373, %v375
        %v381 = vsel %vm378, %v377, %v373
        %382 = vrot.lane.b32.xlu0 %v336, 127
        %v383 = vpop.permute.xlu0 %382
        %384 = vrot.lane.b32.xlu0 %v337, 127
        %v385 = vpop.permute.xlu0 %384
        %386 = vrot.lane.b32.xlu0 %v338, 127
        %v387 = vpop.permute.xlu0 %386
        %vm388 = vcmp.lt.s32.totalorder %v347, 127
        %v389 = vsel %vm388, %v385, %v387
        %v390 = vsel %vm388, %v383, %v385
        %v391 = vsel %vm388, %v387, %v383
        %392 = vrot.lane.b32.xlu0 %v336, 111
        %v393 = vpop.permute.xlu0 %392
        %394 = vrot.lane.b32.xlu0 %v337, 111
        %v395 = vpop.permute.xlu0 %394
        %396 = vrot.lane.b32.xlu0 %v338, 111
        %v397 = vpop.permute.xlu0 %396
        %vm398 = vcmp.lt.s32.totalorder %v347, 111
        %v399 = vsel %vm398, %v395, %v397
        %v400 = vsel %vm398, %v393, %v395
        %v401 = vsel %vm398, %v397, %v393
        %402 = vrot.lane.b32.xlu0 %v336, 110
        %v403 = vpop.permute.xlu0 %402
        %404 = vrot.lane.b32.xlu0 %v337, 110
        %v405 = vpop.permute.xlu0 %404
        %406 = vrot.lane.b32.xlu0 %v338, 110
        %v407 = vpop.permute.xlu0 %406
        %vm408 = vcmp.lt.s32.totalorder %v347, 110
        %v409 = vsel %vm408, %v405, %v407
        %v410 = vsel %vm408, %v403, %v405
        %v411 = vsel %vm408, %v407, %v403
        %412 = vrot.lane.b32.xlu0 %v336, 109
        %v413 = vpop.permute.xlu0 %412
        %414 = vrot.lane.b32.xlu0 %v337, 109
        %v415 = vpop.permute.xlu0 %414
        %416 = vrot.lane.b32.xlu0 %v338, 109
        %v417 = vpop.permute.xlu0 %416
        %vm418 = vcmp.lt.s32.totalorder %v347, 109
        %v419 = vsel %vm418, %v415, %v417
        %v420 = vsel %vm418, %v413, %v415
        %v421 = vsel %vm418, %v417, %v413
        %s422 = scalar_lea.vmem [#allocation5], 16
        %v423 = vld [vmem:[%s422] sm:$0xf]
        %v424 = vpack.c.bf16 %v336, %v336
        %v425 = vpack.c.bf16 %v337, %v337
        %v426 = vpack.c.bf16 %v338, %v338
        %v427 = vld [vmem:[#allocation5] sm:$0xf]
        %v428 = vpack.c.bf16 %v351, %v351
        %v429 = vpack.c.bf16 %v350, %v350
        %v430 = vpack.c.bf16 %v349, %v349
        %vm431 = vcmask 64512
        %v433 = vsel %vm431, %v427, 0
        %vm435 = vcmask 1043456
        %v437 = vsel %vm435, %v428, 0
        %v440 = vsel %vm435, %v429, 0
        %v443 = vsel %vm435, %v430, 0
        %445 = vmatprep.subr.bf16.mxu0 %v440
        %446 = vmatpush1.bf16.msra.mxu0 %v437
        %447 = vmatprep.subr.bf16.mxu0 0
        %448 = vmatpush1.bf16.msra.mxu0 0
        %449 = vmatprep.subr.bf16.mxu0 0
        %450 = vmatpush1.bf16.msra.mxu0 0
        %451 = vmatprep.subr.bf16.mxu0 0
        %452 = vmatpush1.bf16.msra.mxu0 0
        %453 = vmatprep.subr.bf16.mxu0 0
        %454 = vmatpush1.bf16.msra.mxu0 0
        %455 = vmatprep.subr.bf16.mxu0 0
        %456 = vmatpush1.bf16.msra.mxu0 0
        %457 = vmatprep.subr.bf16.mxu0 0
        %458 = vmatpush1.bf16.msra.mxu0 0
        %459 = vmatprep.subr.bf16.mxu0 0
        %460 = vmatpush1.bf16.msra.mxu0 0
        %461 = vmatprep.subr.bf16.mxu0 0
        %462 = vmatpush1.bf16.msra.mxu0 0
        %463 = vmatprep.subr.bf16.mxu0 0
        %464 = vmatpush1.bf16.msra.mxu0 0
        %465 = vmatprep.subr.bf16.mxu0 0
        %466 = vmatpush1.bf16.msra.mxu0 0
        %467 = vmatprep.subr.bf16.mxu0 0
        %468 = vmatpush1.bf16.msra.mxu0 0
        %469 = vmatprep.subr.bf16.mxu0 0
        %470 = vmatpush1.bf16.msra.mxu0 0
        %471 = vmatprep.subr.bf16.mxu0 0
        %472 = vmatpush1.bf16.msra.mxu0 0
        %473 = vmatprep.subr.bf16.mxu0 0
        %474 = vmatpush1.bf16.msra.mxu0 0
        %475 = vmatprep.subr.bf16.mxu0 0
        %476 = vmatpush1.bf16.msra.mxu0 0
        %477 = vmatprep.mubr.bf16.mxu0 0
        %478 = vmatmul.mubr.bf16.gmra.mrb[0].mxu0 %v433
        %v479 = vpop.f32.mrb[0].mxu0
        %v480 = vadd.f32 0.0, %v479
        %v481 = vpop.f32.mrb[0].mxu0
        %v482 = vadd.f32 0.0, %v481
        %v483 = vpop.f32.mrb[0].mxu0
        %v484 = vpop.f32.mrb[0].mxu0
        %485 = vdwg.mxu0
        %486 = vmatprep.subr.bf16.mxu0 0
        %487 = vmatpush1.bf16.msra.mxu0 %v443
        %488 = vmatprep.subr.bf16.mxu0 0
        %489 = vmatpush1.bf16.msra.mxu0 0
        %490 = vmatprep.subr.bf16.mxu0 0
        %491 = vmatpush1.bf16.msra.mxu0 0
        %492 = vmatprep.subr.bf16.mxu0 0
        %493 = vmatpush1.bf16.msra.mxu0 0
        %494 = vmatprep.subr.bf16.mxu0 0
        %495 = vmatpush1.bf16.msra.mxu0 0
        %496 = vmatprep.subr.bf16.mxu0 0
        %497 = vmatpush1.bf16.msra.mxu0 0
        %498 = vmatprep.subr.bf16.mxu0 0
        %499 = vmatpush1.bf16.msra.mxu0 0
        %500 = vmatprep.subr.bf16.mxu0 0
        %501 = vmatpush1.bf16.msra.mxu0 0
        %502 = vmatprep.subr.bf16.mxu0 0
        %503 = vmatpush1.bf16.msra.mxu0 0
        %504 = vmatprep.subr.bf16.mxu0 0
        %505 = vmatpush1.bf16.msra.mxu0 0
        %506 = vmatprep.subr.bf16.mxu0 0
        %507 = vmatpush1.bf16.msra.mxu0 0
        %508 = vmatprep.subr.bf16.mxu0 0
        %509 = vmatpush1.bf16.msra.mxu0 0
        %510 = vmatprep.subr.bf16.mxu0 0
        %511 = vmatpush1.bf16.msra.mxu0 0
        %512 = vmatprep.subr.bf16.mxu0 0
        %513 = vmatpush1.bf16.msra.mxu0 0
        %514 = vmatprep.subr.bf16.mxu0 0
        %515 = vmatpush1.bf16.msra.mxu0 0
        %516 = vmatprep.subr.bf16.mxu0 0
        %517 = vmatpush1.bf16.msra.mxu0 0
        %518 = vmatprep.mubr.bf16.mxu0 0
        %519 = vmatmul.mubr.bf16.gmra.mrb[0].mxu0 %v433
        %v520 = vpop.f32.mrb[0].mxu0
        %v521 = vadd.f32 0.0, %v520
        %v522 = vpop.f32.mrb[0].mxu0
        %v523 = vpop.f32.mrb[0].mxu0
        %v524 = vpop.f32.mrb[0].mxu0
        %525 = vdwg.mxu0
        %v527 = vsel %vm431, %v423, 0
        %v530 = vsel %vm435, %v424, 0
        %v533 = vsel %vm435, %v425, 0
        %v536 = vsel %vm435, %v426, 0
        %538 = vmatprep.subr.bf16.mxu0 %v533
        %539 = vmatpush1.bf16.msra.mxu0 %v530
        %540 = vmatprep.subr.bf16.mxu0 0
        %541 = vmatpush1.bf16.msra.mxu0 0
        %542 = vmatprep.subr.bf16.mxu0 0
        %543 = vmatpush1.bf16.msra.mxu0 0
        %544 = vmatprep.subr.bf16.mxu0 0
        %545 = vmatpush1.bf16.msra.mxu0 0
        %546 = vmatprep.subr.bf16.mxu0 0
        %547 = vmatpush1.bf16.msra.mxu0 0
        %548 = vmatprep.subr.bf16.mxu0 0
        %549 = vmatpush1.bf16.msra.mxu0 0
        %550 = vmatprep.subr.bf16.mxu0 0
        %551 = vmatpush1.bf16.msra.mxu0 0
        %552 = vmatprep.subr.bf16.mxu0 0
        %553 = vmatpush1.bf16.msra.mxu0 0
        %554 = vmatprep.subr.bf16.mxu0 0
        %555 = vmatpush1.bf16.msra.mxu0 0
        %556 = vmatprep.subr.bf16.mxu0 0
        %557 = vmatpush1.bf16.msra.mxu0 0
        %558 = vmatprep.subr.bf16.mxu0 0
        %559 = vmatpush1.bf16.msra.mxu0 0
        %560 = vmatprep.subr.bf16.mxu0 0
        %561 = vmatpush1.bf16.msra.mxu0 0
        %562 = vmatprep.subr.bf16.mxu0 0
        %563 = vmatpush1.bf16.msra.mxu0 0
        %564 = vmatprep.subr.bf16.mxu0 0
        %565 = vmatpush1.bf16.msra.mxu0 0
        %566 = vmatprep.subr.bf16.mxu0 0
        %567 = vmatpush1.bf16.msra.mxu0 0
        %568 = vmatprep.subr.bf16.mxu0 0
        %569 = vmatpush1.bf16.msra.mxu0 0
        %570 = vmatprep.mubr.bf16.mxu0 0
        %571 = vmatmul.mubr.bf16.gmra.mrb[0].mxu0 %v527
        %v572 = vpop.f32.mrb[0].mxu0
        %v573 = vadd.f32 %v480, %v572
        %v574 = vpop.f32.mrb[0].mxu0
        %v575 = vadd.f32 %v482, %v574
        %v576 = vpop.f32.mrb[0].mxu0
        %v577 = vpop.f32.mrb[0].mxu0
        %578 = vdwg.mxu0
        %579 = vmatprep.subr.bf16.mxu0 0
        %580 = vmatpush1.bf16.msra.mxu0 %v536
        %581 = vmatprep.subr.bf16.mxu0 0
        %582 = vmatpush1.bf16.msra.mxu0 0
        %583 = vmatprep.subr.bf16.mxu0 0
        %584 = vmatpush1.bf16.msra.mxu0 0
        %585 = vmatprep.subr.bf16.mxu0 0
        %586 = vmatpush1.bf16.msra.mxu0 0
        %587 = vmatprep.subr.bf16.mxu0 0
        %588 = vmatpush1.bf16.msra.mxu0 0
        %589 = vmatprep.subr.bf16.mxu0 0
        %590 = vmatpush1.bf16.msra.mxu0 0
        %591 = vmatprep.subr.bf16.mxu0 0
        %592 = vmatpush1.bf16.msra.mxu0 0
        %593 = vmatprep.subr.bf16.mxu0 0
        %594 = vmatpush1.bf16.msra.mxu0 0
        %595 = vmatprep.subr.bf16.mxu0 0
        %596 = vmatpush1.bf16.msra.mxu0 0
        %597 = vmatprep.subr.bf16.mxu0 0
        %598 = vmatpush1.bf16.msra.mxu0 0
        %599 = vmatprep.subr.bf16.mxu0 0
        %600 = vmatpush1.bf16.msra.mxu0 0
        %601 = vmatprep.subr.bf16.mxu0 0
        %602 = vmatpush1.bf16.msra.mxu0 0
        %603 = vmatprep.subr.bf16.mxu0 0
        %604 = vmatpush1.bf16.msra.mxu0 0
        %605 = vmatprep.subr.bf16.mxu0 0
        %606 = vmatpush1.bf16.msra.mxu0 0
        %607 = vmatprep.subr.bf16.mxu0 0
        %608 = vmatpush1.bf16.msra.mxu0 0
        %609 = vmatprep.subr.bf16.mxu0 0
        %610 = vmatpush1.bf16.msra.mxu0 0
        %611 = vmatprep.mubr.bf16.mxu0 0
        %612 = vmatmul.mubr.bf16.gmra.mrb[0].mxu0 %v527
        %v613 = vpop.f32.mrb[0].mxu0
        %v614 = vadd.f32 %v521, %v613
        %v615 = vpop.f32.mrb[0].mxu0
        %v616 = vpop.f32.mrb[0].mxu0
        %v617 = vpop.f32.mrb[0].mxu0
        %618 = vdwg.mxu0
        %s619 = scalar_lea.vmem [#allocation5], 4
        %v620 = vld [vmem:[%s619] sm:$0xf]
        %v621 = vpack.c.bf16 %v361, %v361
        %v622 = vpack.c.bf16 %v360, %v360
        %v623 = vpack.c.bf16 %v359, %v359
        %v625 = vsel %vm431, %v620, 0
        %v628 = vsel %vm435, %v621, 0
        %v631 = vsel %vm435, %v622, 0
        %v634 = vsel %vm435, %v623, 0
        %636 = vmatprep.subr.bf16.mxu0 %v631
        %637 = vmatpush1.bf16.msra.mxu0 %v628
        %638 = vmatprep.subr.bf16.mxu0 0
        %639 = vmatpush1.bf16.msra.mxu0 0
        %640 = vmatprep.subr.bf16.mxu0 0
        %641 = vmatpush1.bf16.msra.mxu0 0
        %642 = vmatprep.subr.bf16.mxu0 0
        %643 = vmatpush1.bf16.msra.mxu0 0
        %644 = vmatprep.subr.bf16.mxu0 0
        %645 = vmatpush1.bf16.msra.mxu0 0
        %646 = vmatprep.subr.bf16.mxu0 0
        %647 = vmatpush1.bf16.msra.mxu0 0
        %648 = vmatprep.subr.bf16.mxu0 0
        %649 = vmatpush1.bf16.msra.mxu0 0
        %650 = vmatprep.subr.bf16.mxu0 0
        %651 = vmatpush1.bf16.msra.mxu0 0
        %652 = vmatprep.subr.bf16.mxu0 0
        %653 = vmatpush1.bf16.msra.mxu0 0
        %654 = vmatprep.subr.bf16.mxu0 0
        %655 = vmatpush1.bf16.msra.mxu0 0
        %656 = vmatprep.subr.bf16.mxu0 0
        %657 = vmatpush1.bf16.msra.mxu0 0
        %658 = vmatprep.subr.bf16.mxu0 0
        %659 = vmatpush1.bf16.msra.mxu0 0
        %660 = vmatprep.subr.bf16.mxu0 0
        %661 = vmatpush1.bf16.msra.mxu0 0
        %662 = vmatprep.subr.bf16.mxu0 0
        %663 = vmatpush1.bf16.msra.mxu0 0
        %664 = vmatprep.subr.bf16.mxu0 0
        %665 = vmatpush1.bf16.msra.mxu0 0
        %666 = vmatprep.subr.bf16.mxu0 0
        %667 = vmatpush1.bf16.msra.mxu0 0
        %668 = vmatprep.mubr.bf16.mxu0 0
        %669 = vmatmul.mubr.bf16.gmra.mrb[0].mxu0 %v625
        %v670 = vpop.f32.mrb[0].mxu0
        %v671 = vadd.f32 0.0, %v670
        %v672 = vpop.f32.mrb[0].mxu0
        %v673 = vadd.f32 0.0, %v672
        %v674 = vpop.f32.mrb[0].mxu0
        %v675 = vpop.f32.mrb[0].mxu0
        %676 = vdwg.mxu0
        %677 = vmatprep.subr.bf16.mxu0 0
        %678 = vmatpush1.bf16.msra.mxu0 %v634
        %679 = vmatprep.subr.bf16.mxu0 0
        %680 = vmatpush1.bf16.msra.mxu0 0
        %681 = vmatprep.subr.bf16.mxu0 0
        %682 = vmatpush1.bf16.msra.mxu0 0
        %683 = vmatprep.subr.bf16.mxu0 0
        %684 = vmatpush1.bf16.msra.mxu0 0
        %685 = vmatprep.subr.bf16.mxu0 0
        %686 = vmatpush1.bf16.msra.mxu0 0
        %687 = vmatprep.subr.bf16.mxu0 0
        %688 = vmatpush1.bf16.msra.mxu0 0
        %689 = vmatprep.subr.bf16.mxu0 0
        %690 = vmatpush1.bf16.msra.mxu0 0
        %691 = vmatprep.subr.bf16.mxu0 0
        %692 = vmatpush1.bf16.msra.mxu0 0
        %693 = vmatprep.subr.bf16.mxu0 0
        %694 = vmatpush1.bf16.msra.mxu0 0
        %695 = vmatprep.subr.bf16.mxu0 0
        %696 = vmatpush1.bf16.msra.mxu0 0
        %697 = vmatprep.subr.bf16.mxu0 0
        %698 = vmatpush1.bf16.msra.mxu0 0
        %699 = vmatprep.subr.bf16.mxu0 0
        %700 = vmatpush1.bf16.msra.mxu0 0
        %701 = vmatprep.subr.bf16.mxu0 0
        %702 = vmatpush1.bf16.msra.mxu0 0
        %703 = vmatprep.subr.bf16.mxu0 0
        %704 = vmatpush1.bf16.msra.mxu0 0
        %705 = vmatprep.subr.bf16.mxu0 0
        %706 = vmatpush1.bf16.msra.mxu0 0
        %707 = vmatprep.subr.bf16.mxu0 0
        %708 = vmatpush1.bf16.msra.mxu0 0
        %709 = vmatprep.mubr.bf16.mxu0 0
        %710 = vmatmul.mubr.bf16.gmra.mrb[0].mxu0 %v625
        %v711 = vpop.f32.mrb[0].mxu0
        %v712 = vadd.f32 0.0, %v711
        %v713 = vpop.f32.mrb[0].mxu0
        %v714 = vpop.f32.mrb[0].mxu0
        %v715 = vpop.f32.mrb[0].mxu0
        %716 = vdwg.mxu0
        %v717 = vadd.f32 %v573, %v671
        %v718 = vadd.f32 %v575, %v673
        %v719 = vadd.f32 %v614, %v712
        %s720 = scalar_lea.vmem [#allocation5], 8
        %v721 = vld [vmem:[%s720] sm:$0xf]
        %v722 = vpack.c.bf16 %v371, %v371
        %v723 = vpack.c.bf16 %v370, %v370
        %v724 = vpack.c.bf16 %v369, %v369
        %v726 = vsel %vm431, %v721, 0
        %v729 = vsel %vm435, %v722, 0
        %v732 = vsel %vm435, %v723, 0
        %v735 = vsel %vm435, %v724, 0
        %737 = vmatprep.subr.bf16.mxu0 %v732
        %738 = vmatpush1.bf16.msra.mxu0 %v729
        %739 = vmatprep.subr.bf16.mxu0 0
        %740 = vmatpush1.bf16.msra.mxu0 0
        %741 = vmatprep.subr.bf16.mxu0 0
        %742 = vmatpush1.bf16.msra.mxu0 0
        %743 = vmatprep.subr.bf16.mxu0 0
        %744 = vmatpush1.bf16.msra.mxu0 0
        %745 = vmatprep.subr.bf16.mxu0 0
        %746 = vmatpush1.bf16.msra.mxu0 0
        %747 = vmatprep.subr.bf16.mxu0 0
        %748 = vmatpush1.bf16.msra.mxu0 0
        %749 = vmatprep.subr.bf16.mxu0 0
        %750 = vmatpush1.bf16.msra.mxu0 0
        %751 = vmatprep.subr.bf16.mxu0 0
        %752 = vmatpush1.bf16.msra.mxu0 0
        %753 = vmatprep.subr.bf16.mxu0 0
        %754 = vmatpush1.bf16.msra.mxu0 0
        %755 = vmatprep.subr.bf16.mxu0 0
        %756 = vmatpush1.bf16.msra.mxu0 0
        %757 = vmatprep.subr.bf16.mxu0 0
        %758 = vmatpush1.bf16.msra.mxu0 0
        %759 = vmatprep.subr.bf16.mxu0 0
        %760 = vmatpush1.bf16.msra.mxu0 0
        %761 = vmatprep.subr.bf16.mxu0 0
        %762 = vmatpush1.bf16.msra.mxu0 0
        %763 = vmatprep.subr.bf16.mxu0 0
        %764 = vmatpush1.bf16.msra.mxu0 0
        %765 = vmatprep.subr.bf16.mxu0 0
        %766 = vmatpush1.bf16.msra.mxu0 0
        %767 = vmatprep.subr.bf16.mxu0 0
        %768 = vmatpush1.bf16.msra.mxu0 0
        %769 = vmatprep.mubr.bf16.mxu0 0
        %770 = vmatmul.mubr.bf16.gmra.mrb[0].mxu0 %v726
        %v771 = vpop.f32.mrb[0].mxu0
        %v772 = vadd.f32 0.0, %v771
        %v773 = vpop.f32.mrb[0].mxu0
        %v774 = vadd.f32 0.0, %v773
        %v775 = vpop.f32.mrb[0].mxu0
        %v776 = vpop.f32.mrb[0].mxu0
        %777 = vdwg.mxu0
        %778 = vmatprep.subr.bf16.mxu0 0
        %779 = vmatpush1.bf16.msra.mxu0 %v735
        %780 = vmatprep.subr.bf16.mxu0 0
        %781 = vmatpush1.bf16.msra.mxu0 0
        %782 = vmatprep.subr.bf16.mxu0 0
        %783 = vmatpush1.bf16.msra.mxu0 0
        %784 = vmatprep.subr.bf16.mxu0 0
        %785 = vmatpush1.bf16.msra.mxu0 0
        %786 = vmatprep.subr.bf16.mxu0 0
        %787 = vmatpush1.bf16.msra.mxu0 0
        %788 = vmatprep.subr.bf16.mxu0 0
        %789 = vmatpush1.bf16.msra.mxu0 0
        %790 = vmatprep.subr.bf16.mxu0 0
        %791 = vmatpush1.bf16.msra.mxu0 0
        %792 = vmatprep.subr.bf16.mxu0 0
        %793 = vmatpush1.bf16.msra.mxu0 0
        %794 = vmatprep.subr.bf16.mxu0 0
        %795 = vmatpush1.bf16.msra.mxu0 0
        %796 = vmatprep.subr.bf16.mxu0 0
        %797 = vmatpush1.bf16.msra.mxu0 0
        %798 = vmatprep.subr.bf16.mxu0 0
        %799 = vmatpush1.bf16.msra.mxu0 0
        %800 = vmatprep.subr.bf16.mxu0 0
        %801 = vmatpush1.bf16.msra.mxu0 0
        %802 = vmatprep.subr.bf16.mxu0 0
        %803 = vmatpush1.bf16.msra.mxu0 0
        %804 = vmatprep.subr.bf16.mxu0 0
        %805 = vmatpush1.bf16.msra.mxu0 0
        %806 = vmatprep.subr.bf16.mxu0 0
        %807 = vmatpush1.bf16.msra.mxu0 0
        %808 = vmatprep.subr.bf16.mxu0 0
        %809 = vmatpush1.bf16.msra.mxu0 0
        %810 = vmatprep.mubr.bf16.mxu0 0
        %811 = vmatmul.mubr.bf16.gmra.mrb[0].mxu0 %v726
        %v812 = vpop.f32.mrb[0].mxu0
        %v813 = vadd.f32 0.0, %v812
        %v814 = vpop.f32.mrb[0].mxu0
        %v815 = vpop.f32.mrb[0].mxu0
        %v816 = vpop.f32.mrb[0].mxu0
        %817 = vdwg.mxu0
        %v818 = vadd.f32 %v717, %v772
        %v819 = vadd.f32 %v718, %v774
        %v820 = vadd.f32 %v719, %v813
        %s821 = scalar_lea.vmem [#allocation5], 12
        %v822 = vld [vmem:[%s821] sm:$0xf]
        %v823 = vpack.c.bf16 %v381, %v381
        %v824 = vpack.c.bf16 %v380, %v380
        %v825 = vpack.c.bf16 %v379, %v379
        %v827 = vsel %vm431, %v822, 0
        %v830 = vsel %vm435, %v823, 0
        %v833 = vsel %vm435, %v824, 0
        %v836 = vsel %vm435, %v825, 0
        %838 = vmatprep.subr.bf16.mxu0 %v833
        %839 = vmatpush1.bf16.msra.mxu0 %v830
        %840 = vmatprep.subr.bf16.mxu0 0
        %841 = vmatpush1.bf16.msra.mxu0 0
        %842 = vmatprep.subr.bf16.mxu0 0
        %843 = vmatpush1.bf16.msra.mxu0 0
        %844 = vmatprep.subr.bf16.mxu0 0
        %845 = vmatpush1.bf16.msra.mxu0 0
        %846 = vmatprep.subr.bf16.mxu0 0
        %847 = vmatpush1.bf16.msra.mxu0 0
        %848 = vmatprep.subr.bf16.mxu0 0
        %849 = vmatpush1.bf16.msra.mxu0 0
        %850 = vmatprep.subr.bf16.mxu0 0
        %851 = vmatpush1.bf16.msra.mxu0 0
        %852 = vmatprep.subr.bf16.mxu0 0
        %853 = vmatpush1.bf16.msra.mxu0 0
        %854 = vmatprep.subr.bf16.mxu0 0
        %855 = vmatpush1.bf16.msra.mxu0 0
        %856 = vmatprep.subr.bf16.mxu0 0
        %857 = vmatpush1.bf16.msra.mxu0 0
        %858 = vmatprep.subr.bf16.mxu0 0
        %859 = vmatpush1.bf16.msra.mxu0 0
        %860 = vmatprep.subr.bf16.mxu0 0
        %861 = vmatpush1.bf16.msra.mxu0 0
        %862 = vmatprep.subr.bf16.mxu0 0
        %863 = vmatpush1.bf16.msra.mxu0 0
        %864 = vmatprep.subr.bf16.mxu0 0
        %865 = vmatpush1.bf16.msra.mxu0 0
        %866 = vmatprep.subr.bf16.mxu0 0
        %867 = vmatpush1.bf16.msra.mxu0 0
        %868 = vmatprep.subr.bf16.mxu0 0
        %869 = vmatpush1.bf16.msra.mxu0 0
        %870 = vmatprep.mubr.bf16.mxu0 0
        %871 = vmatmul.mubr.bf16.gmra.mrb[0].mxu0 %v827
        %v872 = vpop.f32.mrb[0].mxu0
        %v873 = vadd.f32 0.0, %v872
        %v874 = vpop.f32.mrb[0].mxu0
        %v875 = vadd.f32 0.0, %v874
        %v876 = vpop.f32.mrb[0].mxu0
        %v877 = vpop.f32.mrb[0].mxu0
        %878 = vdwg.mxu0
        %879 = vmatprep.subr.bf16.mxu0 0
        %880 = vmatpush1.bf16.msra.mxu0 %v836
        %881 = vmatprep.subr.bf16.mxu0 0
        %882 = vmatpush1.bf16.msra.mxu0 0
        %883 = vmatprep.subr.bf16.mxu0 0
        %884 = vmatpush1.bf16.msra.mxu0 0
        %885 = vmatprep.subr.bf16.mxu0 0
        %886 = vmatpush1.bf16.msra.mxu0 0
        %887 = vmatprep.subr.bf16.mxu0 0
        %888 = vmatpush1.bf16.msra.mxu0 0
        %889 = vmatprep.subr.bf16.mxu0 0
        %890 = vmatpush1.bf16.msra.mxu0 0
        %891 = vmatprep.subr.bf16.mxu0 0
        %892 = vmatpush1.bf16.msra.mxu0 0
        %893 = vmatprep.subr.bf16.mxu0 0
        %894 = vmatpush1.bf16.msra.mxu0 0
        %895 = vmatprep.subr.bf16.mxu0 0
        %896 = vmatpush1.bf16.msra.mxu0 0
        %897 = vmatprep.subr.bf16.mxu0 0
        %898 = vmatpush1.bf16.msra.mxu0 0
        %899 = vmatprep.subr.bf16.mxu0 0
        %900 = vmatpush1.bf16.msra.mxu0 0
        %901 = vmatprep.subr.bf16.mxu0 0
        %902 = vmatpush1.bf16.msra.mxu0 0
        %903 = vmatprep.subr.bf16.mxu0 0
        %904 = vmatpush1.bf16.msra.mxu0 0
        %905 = vmatprep.subr.bf16.mxu0 0
        %906 = vmatpush1.bf16.msra.mxu0 0
        %907 = vmatprep.subr.bf16.mxu0 0
        %908 = vmatpush1.bf16.msra.mxu0 0
        %909 = vmatprep.subr.bf16.mxu0 0
        %910 = vmatpush1.bf16.msra.mxu0 0
        %911 = vmatprep.mubr.bf16.mxu0 0
        %912 = vmatmul.mubr.bf16.gmra.mrb[0].mxu0 %v827
        %v913 = vpop.f32.mrb[0].mxu0
        %v914 = vadd.f32 0.0, %v913
        %v915 = vpop.f32.mrb[0].mxu0
        %v916 = vpop.f32.mrb[0].mxu0
        %v917 = vpop.f32.mrb[0].mxu0
        %918 = vdwg.mxu0
        %v919 = vadd.f32 %v818, %v873
        %v920 = vadd.f32 %v819, %v875
        %v921 = vadd.f32 %v820, %v914
        %s922 = scalar_lea.vmem [#allocation5], 20
        %v923 = vld [vmem:[%s922] sm:$0xf]
        %v924 = vpack.c.bf16 %v390, %v390
        %v925 = vpack.c.bf16 %v389, %v389
        %v926 = vpack.c.bf16 %v391, %v391
        %v928 = vsel %vm431, %v923, 0
        %v931 = vsel %vm435, %v924, 0
        %v934 = vsel %vm435, %v925, 0
        %v937 = vsel %vm435, %v926, 0
        %939 = vmatprep.subr.bf16.mxu0 %v934
        %940 = vmatpush1.bf16.msra.mxu0 %v931
        %941 = vmatprep.subr.bf16.mxu0 0
        %942 = vmatpush1.bf16.msra.mxu0 0
        %943 = vmatprep.subr.bf16.mxu0 0
        %944 = vmatpush1.bf16.msra.mxu0 0
        %945 = vmatprep.subr.bf16.mxu0 0
        %946 = vmatpush1.bf16.msra.mxu0 0
        %947 = vmatprep.subr.bf16.mxu0 0
        %948 = vmatpush1.bf16.msra.mxu0 0
        %949 = vmatprep.subr.bf16.mxu0 0
        %950 = vmatpush1.bf16.msra.mxu0 0
        %951 = vmatprep.subr.bf16.mxu0 0
        %952 = vmatpush1.bf16.msra.mxu0 0
        %953 = vmatprep.subr.bf16.mxu0 0
        %954 = vmatpush1.bf16.msra.mxu0 0
        %955 = vmatprep.subr.bf16.mxu0 0
        %956 = vmatpush1.bf16.msra.mxu0 0
        %957 = vmatprep.subr.bf16.mxu0 0
        %958 = vmatpush1.bf16.msra.mxu0 0
        %959 = vmatprep.subr.bf16.mxu0 0
        %960 = vmatpush1.bf16.msra.mxu0 0
        %961 = vmatprep.subr.bf16.mxu0 0
        %962 = vmatpush1.bf16.msra.mxu0 0
        %963 = vmatprep.subr.bf16.mxu0 0
        %964 = vmatpush1.bf16.msra.mxu0 0
        %965 = vmatprep.subr.bf16.mxu0 0
        %966 = vmatpush1.bf16.msra.mxu0 0
        %967 = vmatprep.subr.bf16.mxu0 0
        %968 = vmatpush1.bf16.msra.mxu0 0
        %969 = vmatprep.subr.bf16.mxu0 0
        %970 = vmatpush1.bf16.msra.mxu0 0
        %971 = vmatprep.mubr.bf16.mxu0 0
        %972 = vmatmul.mubr.bf16.gmra.mrb[0].mxu0 %v928
        %v973 = vpop.f32.mrb[0].mxu0
        %v974 = vadd.f32 0.0, %v973
        %v975 = vpop.f32.mrb[0].mxu0
        %v976 = vadd.f32 0.0, %v975
        %v977 = vpop.f32.mrb[0].mxu0
        %v978 = vpop.f32.mrb[0].mxu0
        %979 = vdwg.mxu0
        %980 = vmatprep.subr.bf16.mxu0 0
        %981 = vmatpush1.bf16.msra.mxu0 %v937
        %982 = vmatprep.subr.bf16.mxu0 0
        %983 = vmatpush1.bf16.msra.mxu0 0
        %984 = vmatprep.subr.bf16.mxu0 0
        %985 = vmatpush1.bf16.msra.mxu0 0
        %986 = vmatprep.subr.bf16.mxu0 0
        %987 = vmatpush1.bf16.msra.mxu0 0
        %988 = vmatprep.subr.bf16.mxu0 0
        %989 = vmatpush1.bf16.msra.mxu0 0
        %990 = vmatprep.subr.bf16.mxu0 0
        %991 = vmatpush1.bf16.msra.mxu0 0
        %992 = vmatprep.subr.bf16.mxu0 0
        %993 = vmatpush1.bf16.msra.mxu0 0
        %994 = vmatprep.subr.bf16.mxu0 0
        %995 = vmatpush1.bf16.msra.mxu0 0
        %996 = vmatprep.subr.bf16.mxu0 0
        %997 = vmatpush1.bf16.msra.mxu0 0
        %998 = vmatprep.subr.bf16.mxu0 0
        %999 = vmatpush1.bf16.msra.mxu0 0
        %1000 = vmatprep.subr.bf16.mxu0 0
        %1001 = vmatpush1.bf16.msra.mxu0 0
        %1002 = vmatprep.subr.bf16.mxu0 0
        %1003 = vmatpush1.bf16.msra.mxu0 0
        %1004 = vmatprep.subr.bf16.mxu0 0
        %1005 = vmatpush1.bf16.msra.mxu0 0
        %1006 = vmatprep.subr.bf16.mxu0 0
        %1007 = vmatpush1.bf16.msra.mxu0 0
        %1008 = vmatprep.subr.bf16.mxu0 0
        %1009 = vmatpush1.bf16.msra.mxu0 0
        %1010 = vmatprep.subr.bf16.mxu0 0
        %1011 = vmatpush1.bf16.msra.mxu0 0
        %1012 = vmatprep.mubr.bf16.mxu0 0
        %1013 = vmatmul.mubr.bf16.gmra.mrb[0].mxu0 %v928
        %v1014 = vpop.f32.mrb[0].mxu0
        %v1015 = vadd.f32 0.0, %v1014
        %v1016 = vpop.f32.mrb[0].mxu0
        %v1017 = vpop.f32.mrb[0].mxu0
        %v1018 = vpop.f32.mrb[0].mxu0
        %1019 = vdwg.mxu0
        %v1020 = vadd.f32 %v919, %v974
        %v1021 = vadd.f32 %v920, %v976
        %v1022 = vadd.f32 %v921, %v1015
        %s1023 = scalar_lea.vmem [#allocation5], 24
        %v1024 = vld [vmem:[%s1023] sm:$0xf]
        %v1025 = vpack.c.bf16 %v400, %v400
        %v1026 = vpack.c.bf16 %v399, %v399
        %v1027 = vpack.c.bf16 %v401, %v401
        %v1029 = vsel %vm431, %v1024, 0
        %v1032 = vsel %vm435, %v1025, 0
        %v1035 = vsel %vm435, %v1026, 0
        %v1038 = vsel %vm435, %v1027, 0
        %1040 = vmatprep.subr.bf16.mxu0 %v1035
        %1041 = vmatpush1.bf16.msra.mxu0 %v1032
        %1042 = vmatprep.subr.bf16.mxu0 0
        %1043 = vmatpush1.bf16.msra.mxu0 0
        %1044 = vmatprep.subr.bf16.mxu0 0
        %1045 = vmatpush1.bf16.msra.mxu0 0
        %1046 = vmatprep.subr.bf16.mxu0 0
        %1047 = vmatpush1.bf16.msra.mxu0 0
        %1048 = vmatprep.subr.bf16.mxu0 0
        %1049 = vmatpush1.bf16.msra.mxu0 0
        %1050 = vmatprep.subr.bf16.mxu0 0
        %1051 = vmatpush1.bf16.msra.mxu0 0
        %1052 = vmatprep.subr.bf16.mxu0 0
        %1053 = vmatpush1.bf16.msra.mxu0 0
        %1054 = vmatprep.subr.bf16.mxu0 0
        %1055 = vmatpush1.bf16.msra.mxu0 0
        %1056 = vmatprep.subr.bf16.mxu0 0
        %1057 = vmatpush1.bf16.msra.mxu0 0
        %1058 = vmatprep.subr.bf16.mxu0 0
        %1059 = vmatpush1.bf16.msra.mxu0 0
        %1060 = vmatprep.subr.bf16.mxu0 0
        %1061 = vmatpush1.bf16.msra.mxu0 0
        %1062 = vmatprep.subr.bf16.mxu0 0
        %1063 = vmatpush1.bf16.msra.mxu0 0
        %1064 = vmatprep.subr.bf16.mxu0 0
        %1065 = vmatpush1.bf16.msra.mxu0 0
        %1066 = vmatprep.subr.bf16.mxu0 0
        %1067 = vmatpush1.bf16.msra.mxu0 0
        %1068 = vmatprep.subr.bf16.mxu0 0
        %1069 = vmatpush1.bf16.msra.mxu0 0
        %1070 = vmatprep.subr.bf16.mxu0 0
        %1071 = vmatpush1.bf16.msra.mxu0 0
        %1072 = vmatprep.mubr.bf16.mxu0 0
        %1073 = vmatmul.mubr.bf16.gmra.mrb[0].mxu0 %v1029
        %v1074 = vpop.f32.mrb[0].mxu0
        %v1075 = vadd.f32 0.0, %v1074
        %v1076 = vpop.f32.mrb[0].mxu0
        %v1077 = vadd.f32 0.0, %v1076
        %v1078 = vpop.f32.mrb[0].mxu0
        %v1079 = vpop.f32.mrb[0].mxu0
        %1080 = vdwg.mxu0
        %1081 = vmatprep.subr.bf16.mxu0 0
        %1082 = vmatpush1.bf16.msra.mxu0 %v1038
        %1083 = vmatprep.subr.bf16.mxu0 0
        %1084 = vmatpush1.bf16.msra.mxu0 0
        %1085 = vmatprep.subr.bf16.mxu0 0
        %1086 = vmatpush1.bf16.msra.mxu0 0
        %1087 = vmatprep.subr.bf16.mxu0 0
        %1088 = vmatpush1.bf16.msra.mxu0 0
        %1089 = vmatprep.subr.bf16.mxu0 0
        %1090 = vmatpush1.bf16.msra.mxu0 0
        %1091 = vmatprep.subr.bf16.mxu0 0
        %1092 = vmatpush1.bf16.msra.mxu0 0
        %1093 = vmatprep.subr.bf16.mxu0 0
        %1094 = vmatpush1.bf16.msra.mxu0 0
        %1095 = vmatprep.subr.bf16.mxu0 0
        %1096 = vmatpush1.bf16.msra.mxu0 0
        %1097 = vmatprep.subr.bf16.mxu0 0
        %1098 = vmatpush1.bf16.msra.mxu0 0
        %1099 = vmatprep.subr.bf16.mxu0 0
        %1100 = vmatpush1.bf16.msra.mxu0 0
        %1101 = vmatprep.subr.bf16.mxu0 0
        %1102 = vmatpush1.bf16.msra.mxu0 0
        %1103 = vmatprep.subr.bf16.mxu0 0
        %1104 = vmatpush1.bf16.msra.mxu0 0
        %1105 = vmatprep.subr.bf16.mxu0 0
        %1106 = vmatpush1.bf16.msra.mxu0 0
        %1107 = vmatprep.subr.bf16.mxu0 0
        %1108 = vmatpush1.bf16.msra.mxu0 0
        %1109 = vmatprep.subr.bf16.mxu0 0
        %1110 = vmatpush1.bf16.msra.mxu0 0
        %1111 = vmatprep.subr.bf16.mxu0 0
        %1112 = vmatpush1.bf16.msra.mxu0 0
        %1113 = vmatprep.mubr.bf16.mxu0 0
        %1114 = vmatmul.mubr.bf16.gmra.mrb[0].mxu0 %v1029
        %v1115 = vpop.f32.mrb[0].mxu0
        %v1116 = vadd.f32 0.0, %v1115
        %v1117 = vpop.f32.mrb[0].mxu0
        %v1118 = vpop.f32.mrb[0].mxu0
        %v1119 = vpop.f32.mrb[0].mxu0
        %1120 = vdwg.mxu0
        %v1121 = vadd.f32 %v1020, %v1075
        %v1122 = vadd.f32 %v1021, %v1077
        %v1123 = vadd.f32 %v1022, %v1116
        %s1124 = scalar_lea.vmem [#allocation5], 28
        %v1125 = vld [vmem:[%s1124] sm:$0xf]
        %v1126 = vpack.c.bf16 %v410, %v410
        %v1127 = vpack.c.bf16 %v409, %v409
        %v1128 = vpack.c.bf16 %v411, %v411
        %v1130 = vsel %vm431, %v1125, 0
        %v1133 = vsel %vm435, %v1126, 0
        %v1136 = vsel %vm435, %v1127, 0
        %v1139 = vsel %vm435, %v1128, 0
        %1141 = vmatprep.subr.bf16.mxu0 %v1136
        %1142 = vmatpush1.bf16.msra.mxu0 %v1133
        %1143 = vmatprep.subr.bf16.mxu0 0
        %1144 = vmatpush1.bf16.msra.mxu0 0
        %1145 = vmatprep.subr.bf16.mxu0 0
        %1146 = vmatpush1.bf16.msra.mxu0 0
        %1147 = vmatprep.subr.bf16.mxu0 0
        %1148 = vmatpush1.bf16.msra.mxu0 0
        %1149 = vmatprep.subr.bf16.mxu0 0
        %1150 = vmatpush1.bf16.msra.mxu0 0
        %1151 = vmatprep.subr.bf16.mxu0 0
        %1152 = vmatpush1.bf16.msra.mxu0 0
        %1153 = vmatprep.subr.bf16.mxu0 0
        %1154 = vmatpush1.bf16.msra.mxu0 0
        %1155 = vmatprep.subr.bf16.mxu0 0
        %1156 = vmatpush1.bf16.msra.mxu0 0
        %1157 = vmatprep.subr.bf16.mxu0 0
        %1158 = vmatpush1.bf16.msra.mxu0 0
        %1159 = vmatprep.subr.bf16.mxu0 0
        %1160 = vmatpush1.bf16.msra.mxu0 0
        %1161 = vmatprep.subr.bf16.mxu0 0
        %1162 = vmatpush1.bf16.msra.mxu0 0
        %1163 = vmatprep.subr.bf16.mxu0 0
        %1164 = vmatpush1.bf16.msra.mxu0 0
        %1165 = vmatprep.subr.bf16.mxu0 0
        %1166 = vmatpush1.bf16.msra.mxu0 0
        %1167 = vmatprep.subr.bf16.mxu0 0
        %1168 = vmatpush1.bf16.msra.mxu0 0
        %1169 = vmatprep.subr.bf16.mxu0 0
        %1170 = vmatpush1.bf16.msra.mxu0 0
        %1171 = vmatprep.subr.bf16.mxu0 0
        %1172 = vmatpush1.bf16.msra.mxu0 0
        %1173 = vmatprep.mubr.bf16.mxu0 0
        %1174 = vmatmul.mubr.bf16.gmra.mrb[0].mxu0 %v1130
        %v1175 = vpop.f32.mrb[0].mxu0
        %v1176 = vadd.f32 0.0, %v1175
        %v1177 = vpop.f32.mrb[0].mxu0
        %v1178 = vadd.f32 0.0, %v1177
        %v1179 = vpop.f32.mrb[0].mxu0
        %v1180 = vpop.f32.mrb[0].mxu0
        %1181 = vdwg.mxu0
        %1182 = vmatprep.subr.bf16.mxu0 0
        %1183 = vmatpush1.bf16.msra.mxu0 %v1139
        %1184 = vmatprep.subr.bf16.mxu0 0
        %1185 = vmatpush1.bf16.msra.mxu0 0
        %1186 = vmatprep.subr.bf16.mxu0 0
        %1187 = vmatpush1.bf16.msra.mxu0 0
        %1188 = vmatprep.subr.bf16.mxu0 0
        %1189 = vmatpush1.bf16.msra.mxu0 0
        %1190 = vmatprep.subr.bf16.mxu0 0
        %1191 = vmatpush1.bf16.msra.mxu0 0
        %1192 = vmatprep.subr.bf16.mxu0 0
        %1193 = vmatpush1.bf16.msra.mxu0 0
        %1194 = vmatprep.subr.bf16.mxu0 0
        %1195 = vmatpush1.bf16.msra.mxu0 0
        %1196 = vmatprep.subr.bf16.mxu0 0
        %1197 = vmatpush1.bf16.msra.mxu0 0
        %1198 = vmatprep.subr.bf16.mxu0 0
        %1199 = vmatpush1.bf16.msra.mxu0 0
        %1200 = vmatprep.subr.bf16.mxu0 0
        %1201 = vmatpush1.bf16.msra.mxu0 0
        %1202 = vmatprep.subr.bf16.mxu0 0
        %1203 = vmatpush1.bf16.msra.mxu0 0
        %1204 = vmatprep.subr.bf16.mxu0 0
        %1205 = vmatpush1.bf16.msra.mxu0 0
        %1206 = vmatprep.subr.bf16.mxu0 0
        %1207 = vmatpush1.bf16.msra.mxu0 0
        %1208 = vmatprep.subr.bf16.mxu0 0
        %1209 = vmatpush1.bf16.msra.mxu0 0
        %1210 = vmatprep.subr.bf16.mxu0 0
        %1211 = vmatpush1.bf16.msra.mxu0 0
        %1212 = vmatprep.subr.bf16.mxu0 0
        %1213 = vmatpush1.bf16.msra.mxu0 0
        %1214 = vmatprep.mubr.bf16.mxu0 0
        %1215 = vmatmul.mubr.bf16.gmra.mrb[0].mxu0 %v1130
        %v1216 = vpop.f32.mrb[0].mxu0
        %v1217 = vadd.f32 0.0, %v1216
        %v1218 = vpop.f32.mrb[0].mxu0
        %v1219 = vpop.f32.mrb[0].mxu0
        %v1220 = vpop.f32.mrb[0].mxu0
        %1221 = vdwg.mxu0
        %v1222 = vadd.f32 %v1121, %v1176
        %v1223 = vadd.f32 %v1122, %v1178
        %v1224 = vadd.f32 %v1123, %v1217
        %s1225 = scalar_lea.vmem [#allocation5], 32
        %v1226 = vld [vmem:[%s1225] sm:$0xf]
        %v1227 = vpack.c.bf16 %v420, %v420
        %v1228 = vpack.c.bf16 %v419, %v419
        %v1229 = vpack.c.bf16 %v421, %v421
        %v1231 = vsel %vm431, %v1226, 0
        %v1234 = vsel %vm435, %v1227, 0
        %v1237 = vsel %vm435, %v1228, 0
        %v1240 = vsel %vm435, %v1229, 0
        %1242 = vmatprep.subr.bf16.mxu0 %v1237
        %1243 = vmatpush1.bf16.msra.mxu0 %v1234
        %1244 = vmatprep.subr.bf16.mxu0 0
        %1245 = vmatpush1.bf16.msra.mxu0 0
        %1246 = vmatprep.subr.bf16.mxu0 0
        %1247 = vmatpush1.bf16.msra.mxu0 0
        %1248 = vmatprep.subr.bf16.mxu0 0
        %1249 = vmatpush1.bf16.msra.mxu0 0
        %1250 = vmatprep.subr.bf16.mxu0 0
        %1251 = vmatpush1.bf16.msra.mxu0 0
        %1252 = vmatprep.subr.bf16.mxu0 0
        %1253 = vmatpush1.bf16.msra.mxu0 0
        %1254 = vmatprep.subr.bf16.mxu0 0
        %1255 = vmatpush1.bf16.msra.mxu0 0
        %1256 = vmatprep.subr.bf16.mxu0 0
        %1257 = vmatpush1.bf16.msra.mxu0 0
        %1258 = vmatprep.subr.bf16.mxu0 0
        %1259 = vmatpush1.bf16.msra.mxu0 0
        %1260 = vmatprep.subr.bf16.mxu0 0
        %1261 = vmatpush1.bf16.msra.mxu0 0
        %1262 = vmatprep.subr.bf16.mxu0 0
        %1263 = vmatpush1.bf16.msra.mxu0 0
        %1264 = vmatprep.subr.bf16.mxu0 0
        %1265 = vmatpush1.bf16.msra.mxu0 0
        %1266 = vmatprep.subr.bf16.mxu0 0
        %1267 = vmatpush1.bf16.msra.mxu0 0
        %1268 = vmatprep.subr.bf16.mxu0 0
        %1269 = vmatpush1.bf16.msra.mxu0 0
        %1270 = vmatprep.subr.bf16.mxu0 0
        %1271 = vmatpush1.bf16.msra.mxu0 0
        %1272 = vmatprep.subr.bf16.mxu0 0
        %1273 = vmatpush1.bf16.msra.mxu0 0
        %1274 = vmatprep.mubr.bf16.mxu0 0
        %1275 = vmatmul.mubr.bf16.gmra.mrb[0].mxu0 %v1231
        %v1276 = vpop.f32.mrb[0].mxu0
        %v1277 = vadd.f32 0.0, %v1276
        %v1278 = vpop.f32.mrb[0].mxu0
        %v1279 = vadd.f32 0.0, %v1278
        %v1280 = vpop.f32.mrb[0].mxu0
        %v1281 = vpop.f32.mrb[0].mxu0
        %1282 = vdwg.mxu0
        %1283 = vmatprep.subr.bf16.mxu0 0
        %1284 = vmatpush1.bf16.msra.mxu0 %v1240
        %1285 = vmatprep.subr.bf16.mxu0 0
        %1286 = vmatpush1.bf16.msra.mxu0 0
        %1287 = vmatprep.subr.bf16.mxu0 0
        %1288 = vmatpush1.bf16.msra.mxu0 0
        %1289 = vmatprep.subr.bf16.mxu0 0
        %1290 = vmatpush1.bf16.msra.mxu0 0
        %1291 = vmatprep.subr.bf16.mxu0 0
        %1292 = vmatpush1.bf16.msra.mxu0 0
        %1293 = vmatprep.subr.bf16.mxu0 0
        %1294 = vmatpush1.bf16.msra.mxu0 0
        %1295 = vmatprep.subr.bf16.mxu0 0
        %1296 = vmatpush1.bf16.msra.mxu0 0
        %1297 = vmatprep.subr.bf16.mxu0 0
        %1298 = vmatpush1.bf16.msra.mxu0 0
        %1299 = vmatprep.subr.bf16.mxu0 0
        %1300 = vmatpush1.bf16.msra.mxu0 0
        %1301 = vmatprep.subr.bf16.mxu0 0
        %1302 = vmatpush1.bf16.msra.mxu0 0
        %1303 = vmatprep.subr.bf16.mxu0 0
        %1304 = vmatpush1.bf16.msra.mxu0 0
        %1305 = vmatprep.subr.bf16.mxu0 0
        %1306 = vmatpush1.bf16.msra.mxu0 0
        %1307 = vmatprep.subr.bf16.mxu0 0
        %1308 = vmatpush1.bf16.msra.mxu0 0
        %1309 = vmatprep.subr.bf16.mxu0 0
        %1310 = vmatpush1.bf16.msra.mxu0 0
        %1311 = vmatprep.subr.bf16.mxu0 0
        %1312 = vmatpush1.bf16.msra.mxu0 0
        %1313 = vmatprep.subr.bf16.mxu0 0
        %1314 = vmatpush1.bf16.msra.mxu0 0
        %1315 = vmatprep.mubr.bf16.mxu0 0
        %1316 = vmatmul.mubr.bf16.gmra.mrb[0].mxu0 %v1231
        %v1317 = vpop.f32.mrb[0].mxu0
        %v1318 = vadd.f32 0.0, %v1317
        %v1319 = vpop.f32.mrb[0].mxu0
        %v1320 = vpop.f32.mrb[0].mxu0
        %v1321 = vpop.f32.mrb[0].mxu0
        %1322 = vdwg.mxu0
        %v1323 = vadd.f32 %v1222, %v1277
        %v1324 = vadd.f32 %v1223, %v1279
        %v1325 = vadd.f32 %v1224, %v1318
        %v1326 = vld [vmem:[#allocation8] sm:$0xff]
        %1328 = vset.pattern.permute.xlu0 0
        %1329 = vperm.xlu0 %1328, %v1326
        %v1330 = vpop.permute.xlu0 %1329
        %v1332 = vadd.f32 %v1323, %v1330
        %v1333 = vadd.f32 %v1324, %v1330
        %v1334 = vadd.f32 %v1325, %v1330
        %v1335 = vmax.f32 %v1332, 0.0
        %v1336 = vmax.f32 %v1333, 0.0
        %v1337 = vmax.f32 %v1334, 0.0
        %v1339 = vlaneseq
        %v1340 = vshrl.u32 %v1339, 7
        %v1341 = vsub.s32 0, %v1340
        %v1342 = vrot.slane %v339, %v1341
        %v1343 = vlaneseq
        %v1344 = vshrl.u32 %v1343, 7
        %v1345 = vsub.s32 1, %v1344
        %v1346 = vrot.slane %v339, %v1345
        %v1347 = vlaneseq
        %v1348 = vshrl.u32 %v1347, 7
        %v1349 = vsub.s32 2, %v1348
        %v1350 = vrot.slane %v339, %v1349
        %v1354 = vmul.f32 %v1335, %v1342
        %v1355 = vmul.f32 %v1336, %v1346
        %v1356 = vmul.f32 %v1337, %v1350
        %1357 = vrot.lane.b32.xlu0 %v1354, 19
        %v1358 = vpop.permute.xlu0 %1357
        %1359 = vrot.lane.b32.xlu0 %v1355, 19
        %v1360 = vpop.permute.xlu0 %1359
        %1361 = vrot.lane.b32.xlu0 %v1356, 19
        %v1362 = vpop.permute.xlu0 %1361
        %v1363 = vsel %vm348, %v1360, %v1362
        %v1364 = vsel %vm348, %v1358, %v1360
        %v1365 = vsel %vm348, %v1362, %v1358
        %1366 = vrot.lane.b32.xlu0 %v1354, 18
        %v1367 = vpop.permute.xlu0 %1366
        %1368 = vrot.lane.b32.xlu0 %v1355, 18
        %v1369 = vpop.permute.xlu0 %1368
        %1370 = vrot.lane.b32.xlu0 %v1356, 18
        %v1371 = vpop.permute.xlu0 %1370
        %v1372 = vsel %vm358, %v1369, %v1371
        %v1373 = vsel %vm358, %v1367, %v1369
        %v1374 = vsel %vm358, %v1371, %v1367
        %1375 = vrot.lane.b32.xlu0 %v1354, 17
        %v1376 = vpop.permute.xlu0 %1375
        %1377 = vrot.lane.b32.xlu0 %v1355, 17
        %v1378 = vpop.permute.xlu0 %1377
        %1379 = vrot.lane.b32.xlu0 %v1356, 17
        %v1380 = vpop.permute.xlu0 %1379
        %v1381 = vsel %vm368, %v1378, %v1380
        %v1382 = vsel %vm368, %v1376, %v1378
        %v1383 = vsel %vm368, %v1380, %v1376
        %1384 = vrot.lane.b32.xlu0 %v1354, 1
        %v1385 = vpop.permute.xlu0 %1384
        %1386 = vrot.lane.b32.xlu0 %v1355, 1
        %v1387 = vpop.permute.xlu0 %1386
        %1388 = vrot.lane.b32.xlu0 %v1356, 1
        %v1389 = vpop.permute.xlu0 %1388
        %v1390 = vsel %vm378, %v1387, %v1389
        %v1391 = vsel %vm378, %v1385, %v1387
        %v1392 = vsel %vm378, %v1389, %v1385
        %1393 = vrot.lane.b32.xlu0 %v1354, 127
        %v1394 = vpop.permute.xlu0 %1393
        %1395 = vrot.lane.b32.xlu0 %v1355, 127
        %v1396 = vpop.permute.xlu0 %1395
        %1397 = vrot.lane.b32.xlu0 %v1356, 127
        %v1398 = vpop.permute.xlu0 %1397
        %v1399 = vsel %vm388, %v1396, %v1398
        %v1400 = vsel %vm388, %v1394, %v1396
        %v1401 = vsel %vm388, %v1398, %v1394
        %1402 = vrot.lane.b32.xlu0 %v1354, 111
        %v1403 = vpop.permute.xlu0 %1402
        %1404 = vrot.lane.b32.xlu0 %v1355, 111
        %v1405 = vpop.permute.xlu0 %1404
        %1406 = vrot.lane.b32.xlu0 %v1356, 111
        %v1407 = vpop.permute.xlu0 %1406
        %v1408 = vsel %vm398, %v1405, %v1407
        %v1409 = vsel %vm398, %v1403, %v1405
        %v1410 = vsel %vm398, %v1407, %v1403
        %1411 = vrot.lane.b32.xlu0 %v1354, 110
        %v1412 = vpop.permute.xlu0 %1411
        %1413 = vrot.lane.b32.xlu0 %v1355, 110
        %v1414 = vpop.permute.xlu0 %1413
        %1415 = vrot.lane.b32.xlu0 %v1356, 110
        %v1416 = vpop.permute.xlu0 %1415
        %v1417 = vsel %vm408, %v1414, %v1416
        %v1418 = vsel %vm408, %v1412, %v1414
        %v1419 = vsel %vm408, %v1416, %v1412
        %1420 = vrot.lane.b32.xlu0 %v1354, 109
        %v1421 = vpop.permute.xlu0 %1420
        %1422 = vrot.lane.b32.xlu0 %v1355, 109
        %v1423 = vpop.permute.xlu0 %1422
        %1424 = vrot.lane.b32.xlu0 %v1356, 109
        %v1425 = vpop.permute.xlu0 %1424
        %v1426 = vsel %vm418, %v1423, %v1425
        %v1427 = vsel %vm418, %v1421, %v1423
        %v1428 = vsel %vm418, %v1425, %v1421
        %s1429 = scalar_lea.vmem [#allocation7], 16
        %v1430 = vld [vmem:[%s1429] sm:$0xf]
        %v1431 = vpack.c.bf16 %v1354, %v1354
        %v1432 = vpack.c.bf16 %v1355, %v1355
        %v1433 = vpack.c.bf16 %v1356, %v1356
        %v1434 = vld [vmem:[#allocation7] sm:$0xf]
        %v1435 = vpack.c.bf16 %v1365, %v1365
        %v1436 = vpack.c.bf16 %v1364, %v1364
        %v1437 = vpack.c.bf16 %v1363, %v1363
        %v1439 = vsel %vm431, %v1434, 0
        %v1442 = vsel %vm435, %v1435, 0
        %v1445 = vsel %vm435, %v1436, 0
        %v1448 = vsel %vm435, %v1437, 0
        %1450 = vmatprep.subr.bf16.mxu0 %v1445
        %1451 = vmatpush1.bf16.msra.mxu0 %v1442
        %1452 = vmatprep.subr.bf16.mxu0 0
        %1453 = vmatpush1.bf16.msra.mxu0 0
        %1454 = vmatprep.subr.bf16.mxu0 0
        %1455 = vmatpush1.bf16.msra.mxu0 0
        %1456 = vmatprep.subr.bf16.mxu0 0
        %1457 = vmatpush1.bf16.msra.mxu0 0
        %1458 = vmatprep.subr.bf16.mxu0 0
        %1459 = vmatpush1.bf16.msra.mxu0 0
        %1460 = vmatprep.subr.bf16.mxu0 0
        %1461 = vmatpush1.bf16.msra.mxu0 0
        %1462 = vmatprep.subr.bf16.mxu0 0
        %1463 = vmatpush1.bf16.msra.mxu0 0
        %1464 = vmatprep.subr.bf16.mxu0 0
        %1465 = vmatpush1.bf16.msra.mxu0 0
        %1466 = vmatprep.subr.bf16.mxu0 0
        %1467 = vmatpush1.bf16.msra.mxu0 0
        %1468 = vmatprep.subr.bf16.mxu0 0
        %1469 = vmatpush1.bf16.msra.mxu0 0
        %1470 = vmatprep.subr.bf16.mxu0 0
        %1471 = vmatpush1.bf16.msra.mxu0 0
        %1472 = vmatprep.subr.bf16.mxu0 0
        %1473 = vmatpush1.bf16.msra.mxu0 0
        %1474 = vmatprep.subr.bf16.mxu0 0
        %1475 = vmatpush1.bf16.msra.mxu0 0
        %1476 = vmatprep.subr.bf16.mxu0 0
        %1477 = vmatpush1.bf16.msra.mxu0 0
        %1478 = vmatprep.subr.bf16.mxu0 0
        %1479 = vmatpush1.bf16.msra.mxu0 0
        %1480 = vmatprep.subr.bf16.mxu0 0
        %1481 = vmatpush1.bf16.msra.mxu0 0
        %1482 = vmatprep.mubr.bf16.mxu0 0
        %1483 = vmatmul.mubr.bf16.gmra.mrb[0].mxu0 %v1439
        %v1484 = vpop.f32.mrb[0].mxu0
        %v1485 = vadd.f32 0.0, %v1484
        %v1486 = vpop.f32.mrb[0].mxu0
        %v1487 = vadd.f32 0.0, %v1486
        %v1488 = vpop.f32.mrb[0].mxu0
        %v1489 = vpop.f32.mrb[0].mxu0
        %1490 = vdwg.mxu0
        %1491 = vmatprep.subr.bf16.mxu0 0
        %1492 = vmatpush1.bf16.msra.mxu0 %v1448
        %1493 = vmatprep.subr.bf16.mxu0 0
        %1494 = vmatpush1.bf16.msra.mxu0 0
        %1495 = vmatprep.subr.bf16.mxu0 0
        %1496 = vmatpush1.bf16.msra.mxu0 0
        %1497 = vmatprep.subr.bf16.mxu0 0
        %1498 = vmatpush1.bf16.msra.mxu0 0
        %1499 = vmatprep.subr.bf16.mxu0 0
        %1500 = vmatpush1.bf16.msra.mxu0 0
        %1501 = vmatprep.subr.bf16.mxu0 0
        %1502 = vmatpush1.bf16.msra.mxu0 0
        %1503 = vmatprep.subr.bf16.mxu0 0
        %1504 = vmatpush1.bf16.msra.mxu0 0
        %1505 = vmatprep.subr.bf16.mxu0 0
        %1506 = vmatpush1.bf16.msra.mxu0 0
        %1507 = vmatprep.subr.bf16.mxu0 0
        %1508 = vmatpush1.bf16.msra.mxu0 0
        %1509 = vmatprep.subr.bf16.mxu0 0
        %1510 = vmatpush1.bf16.msra.mxu0 0
        %1511 = vmatprep.subr.bf16.mxu0 0
        %1512 = vmatpush1.bf16.msra.mxu0 0
        %1513 = vmatprep.subr.bf16.mxu0 0
        %1514 = vmatpush1.bf16.msra.mxu0 0
        %1515 = vmatprep.subr.bf16.mxu0 0
        %1516 = vmatpush1.bf16.msra.mxu0 0
        %1517 = vmatprep.subr.bf16.mxu0 0
        %1518 = vmatpush1.bf16.msra.mxu0 0
        %1519 = vmatprep.subr.bf16.mxu0 0
        %1520 = vmatpush1.bf16.msra.mxu0 0
        %1521 = vmatprep.subr.bf16.mxu0 0
        %1522 = vmatpush1.bf16.msra.mxu0 0
        %1523 = vmatprep.mubr.bf16.mxu0 0
        %1524 = vmatmul.mubr.bf16.gmra.mrb[0].mxu0 %v1439
        %v1525 = vpop.f32.mrb[0].mxu0
        %v1526 = vadd.f32 0.0, %v1525
        %v1527 = vpop.f32.mrb[0].mxu0
        %v1528 = vpop.f32.mrb[0].mxu0
        %v1529 = vpop.f32.mrb[0].mxu0
        %1530 = vdwg.mxu0
        %v1532 = vsel %vm431, %v1430, 0
        %v1535 = vsel %vm435, %v1431, 0
        %v1538 = vsel %vm435, %v1432, 0
        %v1541 = vsel %vm435, %v1433, 0
        %1543 = vmatprep.subr.bf16.mxu0 %v1538
        %1544 = vmatpush1.bf16.msra.mxu0 %v1535
        %1545 = vmatprep.subr.bf16.mxu0 0
        %1546 = vmatpush1.bf16.msra.mxu0 0
        %1547 = vmatprep.subr.bf16.mxu0 0
        %1548 = vmatpush1.bf16.msra.mxu0 0
        %1549 = vmatprep.subr.bf16.mxu0 0
        %1550 = vmatpush1.bf16.msra.mxu0 0
        %1551 = vmatprep.subr.bf16.mxu0 0
        %1552 = vmatpush1.bf16.msra.mxu0 0
        %1553 = vmatprep.subr.bf16.mxu0 0
        %1554 = vmatpush1.bf16.msra.mxu0 0
        %1555 = vmatprep.subr.bf16.mxu0 0
        %1556 = vmatpush1.bf16.msra.mxu0 0
        %1557 = vmatprep.subr.bf16.mxu0 0
        %1558 = vmatpush1.bf16.msra.mxu0 0
        %1559 = vmatprep.subr.bf16.mxu0 0
        %1560 = vmatpush1.bf16.msra.mxu0 0
        %1561 = vmatprep.subr.bf16.mxu0 0
        %1562 = vmatpush1.bf16.msra.mxu0 0
        %1563 = vmatprep.subr.bf16.mxu0 0
        %1564 = vmatpush1.bf16.msra.mxu0 0
        %1565 = vmatprep.subr.bf16.mxu0 0
        %1566 = vmatpush1.bf16.msra.mxu0 0
        %1567 = vmatprep.subr.bf16.mxu0 0
        %1568 = vmatpush1.bf16.msra.mxu0 0
        %1569 = vmatprep.subr.bf16.mxu0 0
        %1570 = vmatpush1.bf16.msra.mxu0 0
        %1571 = vmatprep.subr.bf16.mxu0 0
        %1572 = vmatpush1.bf16.msra.mxu0 0
        %1573 = vmatprep.subr.bf16.mxu0 0
        %1574 = vmatpush1.bf16.msra.mxu0 0
        %1575 = vmatprep.mubr.bf16.mxu0 0
        %1576 = vmatmul.mubr.bf16.gmra.mrb[0].mxu0 %v1532
        %v1577 = vpop.f32.mrb[0].mxu0
        %v1578 = vadd.f32 %v1485, %v1577
        %v1579 = vpop.f32.mrb[0].mxu0
        %v1580 = vadd.f32 %v1487, %v1579
        %v1581 = vpop.f32.mrb[0].mxu0
        %v1582 = vpop.f32.mrb[0].mxu0
        %1583 = vdwg.mxu0
        %1584 = vmatprep.subr.bf16.mxu0 0
        %1585 = vmatpush1.bf16.msra.mxu0 %v1541
        %1586 = vmatprep.subr.bf16.mxu0 0
        %1587 = vmatpush1.bf16.msra.mxu0 0
        %1588 = vmatprep.subr.bf16.mxu0 0
        %1589 = vmatpush1.bf16.msra.mxu0 0
        %1590 = vmatprep.subr.bf16.mxu0 0
        %1591 = vmatpush1.bf16.msra.mxu0 0
        %1592 = vmatprep.subr.bf16.mxu0 0
        %1593 = vmatpush1.bf16.msra.mxu0 0
        %1594 = vmatprep.subr.bf16.mxu0 0
        %1595 = vmatpush1.bf16.msra.mxu0 0
        %1596 = vmatprep.subr.bf16.mxu0 0
        %1597 = vmatpush1.bf16.msra.mxu0 0
        %1598 = vmatprep.subr.bf16.mxu0 0
        %1599 = vmatpush1.bf16.msra.mxu0 0
        %1600 = vmatprep.subr.bf16.mxu0 0
        %1601 = vmatpush1.bf16.msra.mxu0 0
        %1602 = vmatprep.subr.bf16.mxu0 0
        %1603 = vmatpush1.bf16.msra.mxu0 0
        %1604 = vmatprep.subr.bf16.mxu0 0
        %1605 = vmatpush1.bf16.msra.mxu0 0
        %1606 = vmatprep.subr.bf16.mxu0 0
        %1607 = vmatpush1.bf16.msra.mxu0 0
        %1608 = vmatprep.subr.bf16.mxu0 0
        %1609 = vmatpush1.bf16.msra.mxu0 0
        %1610 = vmatprep.subr.bf16.mxu0 0
        %1611 = vmatpush1.bf16.msra.mxu0 0
        %1612 = vmatprep.subr.bf16.mxu0 0
        %1613 = vmatpush1.bf16.msra.mxu0 0
        %1614 = vmatprep.subr.bf16.mxu0 0
        %1615 = vmatpush1.bf16.msra.mxu0 0
        %1616 = vmatprep.mubr.bf16.mxu0 0
        %1617 = vmatmul.mubr.bf16.gmra.mrb[0].mxu0 %v1532
        %v1618 = vpop.f32.mrb[0].mxu0
        %v1619 = vadd.f32 %v1526, %v1618
        %v1620 = vpop.f32.mrb[0].mxu0
        %v1621 = vpop.f32.mrb[0].mxu0
        %v1622 = vpop.f32.mrb[0].mxu0
        %1623 = vdwg.mxu0
        %s1624 = scalar_lea.vmem [#allocation7], 4
        %v1625 = vld [vmem:[%s1624] sm:$0xf]
        %v1626 = vpack.c.bf16 %v1374, %v1374
        %v1627 = vpack.c.bf16 %v1373, %v1373
        %v1628 = vpack.c.bf16 %v1372, %v1372
        %v1630 = vsel %vm431, %v1625, 0
        %v1633 = vsel %vm435, %v1626, 0
        %v1636 = vsel %vm435, %v1627, 0
        %v1639 = vsel %vm435, %v1628, 0
        %1641 = vmatprep.subr.bf16.mxu0 %v1636
        %1642 = vmatpush1.bf16.msra.mxu0 %v1633
        %1643 = vmatprep.subr.bf16.mxu0 0
        %1644 = vmatpush1.bf16.msra.mxu0 0
        %1645 = vmatprep.subr.bf16.mxu0 0
        %1646 = vmatpush1.bf16.msra.mxu0 0
        %1647 = vmatprep.subr.bf16.mxu0 0
        %1648 = vmatpush1.bf16.msra.mxu0 0
        %1649 = vmatprep.subr.bf16.mxu0 0
        %1650 = vmatpush1.bf16.msra.mxu0 0
        %1651 = vmatprep.subr.bf16.mxu0 0
        %1652 = vmatpush1.bf16.msra.mxu0 0
        %1653 = vmatprep.subr.bf16.mxu0 0
        %1654 = vmatpush1.bf16.msra.mxu0 0
        %1655 = vmatprep.subr.bf16.mxu0 0
        %1656 = vmatpush1.bf16.msra.mxu0 0
        %1657 = vmatprep.subr.bf16.mxu0 0
        %1658 = vmatpush1.bf16.msra.mxu0 0
        %1659 = vmatprep.subr.bf16.mxu0 0
        %1660 = vmatpush1.bf16.msra.mxu0 0
        %1661 = vmatprep.subr.bf16.mxu0 0
        %1662 = vmatpush1.bf16.msra.mxu0 0
        %1663 = vmatprep.subr.bf16.mxu0 0
        %1664 = vmatpush1.bf16.msra.mxu0 0
        %1665 = vmatprep.subr.bf16.mxu0 0
        %1666 = vmatpush1.bf16.msra.mxu0 0
        %1667 = vmatprep.subr.bf16.mxu0 0
        %1668 = vmatpush1.bf16.msra.mxu0 0
        %1669 = vmatprep.subr.bf16.mxu0 0
        %1670 = vmatpush1.bf16.msra.mxu0 0
        %1671 = vmatprep.subr.bf16.mxu0 0
        %1672 = vmatpush1.bf16.msra.mxu0 0
        %1673 = vmatprep.mubr.bf16.mxu0 0
        %1674 = vmatmul.mubr.bf16.gmra.mrb[0].mxu0 %v1630
        %v1675 = vpop.f32.mrb[0].mxu0
        %v1676 = vadd.f32 0.0, %v1675
        %v1677 = vpop.f32.mrb[0].mxu0
        %v1678 = vadd.f32 0.0, %v1677
        %v1679 = vpop.f32.mrb[0].mxu0
        %v1680 = vpop.f32.mrb[0].mxu0
        %1681 = vdwg.mxu0
        %1682 = vmatprep.subr.bf16.mxu0 0
        %1683 = vmatpush1.bf16.msra.mxu0 %v1639
        %1684 = vmatprep.subr.bf16.mxu0 0
        %1685 = vmatpush1.bf16.msra.mxu0 0
        %1686 = vmatprep.subr.bf16.mxu0 0
        %1687 = vmatpush1.bf16.msra.mxu0 0
        %1688 = vmatprep.subr.bf16.mxu0 0
        %1689 = vmatpush1.bf16.msra.mxu0 0
        %1690 = vmatprep.subr.bf16.mxu0 0
        %1691 = vmatpush1.bf16.msra.mxu0 0
        %1692 = vmatprep.subr.bf16.mxu0 0
        %1693 = vmatpush1.bf16.msra.mxu0 0
        %1694 = vmatprep.subr.bf16.mxu0 0
        %1695 = vmatpush1.bf16.msra.mxu0 0
        %1696 = vmatprep.subr.bf16.mxu0 0
        %1697 = vmatpush1.bf16.msra.mxu0 0
        %1698 = vmatprep.subr.bf16.mxu0 0
        %1699 = vmatpush1.bf16.msra.mxu0 0
        %1700 = vmatprep.subr.bf16.mxu0 0
        %1701 = vmatpush1.bf16.msra.mxu0 0
        %1702 = vmatprep.subr.bf16.mxu0 0
        %1703 = vmatpush1.bf16.msra.mxu0 0
        %1704 = vmatprep.subr.bf16.mxu0 0
        %1705 = vmatpush1.bf16.msra.mxu0 0
        %1706 = vmatprep.subr.bf16.mxu0 0
        %1707 = vmatpush1.bf16.msra.mxu0 0
        %1708 = vmatprep.subr.bf16.mxu0 0
        %1709 = vmatpush1.bf16.msra.mxu0 0
        %1710 = vmatprep.subr.bf16.mxu0 0
        %1711 = vmatpush1.bf16.msra.mxu0 0
        %1712 = vmatprep.subr.bf16.mxu0 0
        %1713 = vmatpush1.bf16.msra.mxu0 0
        %1714 = vmatprep.mubr.bf16.mxu0 0
        %1715 = vmatmul.mubr.bf16.gmra.mrb[0].mxu0 %v1630
        %v1716 = vpop.f32.mrb[0].mxu0
        %v1717 = vadd.f32 0.0, %v1716
        %v1718 = vpop.f32.mrb[0].mxu0
        %v1719 = vpop.f32.mrb[0].mxu0
        %v1720 = vpop.f32.mrb[0].mxu0
        %1721 = vdwg.mxu0
        %v1722 = vadd.f32 %v1578, %v1676
        %v1723 = vadd.f32 %v1580, %v1678
        %v1724 = vadd.f32 %v1619, %v1717
        %s1725 = scalar_lea.vmem [#allocation7], 8
        %v1726 = vld [vmem:[%s1725] sm:$0xf]
        %v1727 = vpack.c.bf16 %v1383, %v1383
        %v1728 = vpack.c.bf16 %v1382, %v1382
        %v1729 = vpack.c.bf16 %v1381, %v1381
        %v1731 = vsel %vm431, %v1726, 0
        %v1734 = vsel %vm435, %v1727, 0
        %v1737 = vsel %vm435, %v1728, 0
        %v1740 = vsel %vm435, %v1729, 0
        %1742 = vmatprep.subr.bf16.mxu0 %v1737
        %1743 = vmatpush1.bf16.msra.mxu0 %v1734
        %1744 = vmatprep.subr.bf16.mxu0 0
        %1745 = vmatpush1.bf16.msra.mxu0 0
        %1746 = vmatprep.subr.bf16.mxu0 0
        %1747 = vmatpush1.bf16.msra.mxu0 0
        %1748 = vmatprep.subr.bf16.mxu0 0
        %1749 = vmatpush1.bf16.msra.mxu0 0
        %1750 = vmatprep.subr.bf16.mxu0 0
        %1751 = vmatpush1.bf16.msra.mxu0 0
        %1752 = vmatprep.subr.bf16.mxu0 0
        %1753 = vmatpush1.bf16.msra.mxu0 0
        %1754 = vmatprep.subr.bf16.mxu0 0
        %1755 = vmatpush1.bf16.msra.mxu0 0
        %1756 = vmatprep.subr.bf16.mxu0 0
        %1757 = vmatpush1.bf16.msra.mxu0 0
        %1758 = vmatprep.subr.bf16.mxu0 0
        %1759 = vmatpush1.bf16.msra.mxu0 0
        %1760 = vmatprep.subr.bf16.mxu0 0
        %1761 = vmatpush1.bf16.msra.mxu0 0
        %1762 = vmatprep.subr.bf16.mxu0 0
        %1763 = vmatpush1.bf16.msra.mxu0 0
        %1764 = vmatprep.subr.bf16.mxu0 0
        %1765 = vmatpush1.bf16.msra.mxu0 0
        %1766 = vmatprep.subr.bf16.mxu0 0
        %1767 = vmatpush1.bf16.msra.mxu0 0
        %1768 = vmatprep.subr.bf16.mxu0 0
        %1769 = vmatpush1.bf16.msra.mxu0 0
        %1770 = vmatprep.subr.bf16.mxu0 0
        %1771 = vmatpush1.bf16.msra.mxu0 0
        %1772 = vmatprep.subr.bf16.mxu0 0
        %1773 = vmatpush1.bf16.msra.mxu0 0
        %1774 = vmatprep.mubr.bf16.mxu0 0
        %1775 = vmatmul.mubr.bf16.gmra.mrb[0].mxu0 %v1731
        %v1776 = vpop.f32.mrb[0].mxu0
        %v1777 = vadd.f32 0.0, %v1776
        %v1778 = vpop.f32.mrb[0].mxu0
        %v1779 = vadd.f32 0.0, %v1778
        %v1780 = vpop.f32.mrb[0].mxu0
        %v1781 = vpop.f32.mrb[0].mxu0
        %1782 = vdwg.mxu0
        %1783 = vmatprep.subr.bf16.mxu0 0
        %1784 = vmatpush1.bf16.msra.mxu0 %v1740
        %1785 = vmatprep.subr.bf16.mxu0 0
        %1786 = vmatpush1.bf16.msra.mxu0 0
        %1787 = vmatprep.subr.bf16.mxu0 0
        %1788 = vmatpush1.bf16.msra.mxu0 0
        %1789 = vmatprep.subr.bf16.mxu0 0
        %1790 = vmatpush1.bf16.msra.mxu0 0
        %1791 = vmatprep.subr.bf16.mxu0 0
        %1792 = vmatpush1.bf16.msra.mxu0 0
        %1793 = vmatprep.subr.bf16.mxu0 0
        %1794 = vmatpush1.bf16.msra.mxu0 0
        %1795 = vmatprep.subr.bf16.mxu0 0
        %1796 = vmatpush1.bf16.msra.mxu0 0
        %1797 = vmatprep.subr.bf16.mxu0 0
        %1798 = vmatpush1.bf16.msra.mxu0 0
        %1799 = vmatprep.subr.bf16.mxu0 0
        %1800 = vmatpush1.bf16.msra.mxu0 0
        %1801 = vmatprep.subr.bf16.mxu0 0
        %1802 = vmatpush1.bf16.msra.mxu0 0
        %1803 = vmatprep.subr.bf16.mxu0 0
        %1804 = vmatpush1.bf16.msra.mxu0 0
        %1805 = vmatprep.subr.bf16.mxu0 0
        %1806 = vmatpush1.bf16.msra.mxu0 0
        %1807 = vmatprep.subr.bf16.mxu0 0
        %1808 = vmatpush1.bf16.msra.mxu0 0
        %1809 = vmatprep.subr.bf16.mxu0 0
        %1810 = vmatpush1.bf16.msra.mxu0 0
        %1811 = vmatprep.subr.bf16.mxu0 0
        %1812 = vmatpush1.bf16.msra.mxu0 0
        %1813 = vmatprep.subr.bf16.mxu0 0
        %1814 = vmatpush1.bf16.msra.mxu0 0
        %1815 = vmatprep.mubr.bf16.mxu0 0
        %1816 = vmatmul.mubr.bf16.gmra.mrb[0].mxu0 %v1731
        %v1817 = vpop.f32.mrb[0].mxu0
        %v1818 = vadd.f32 0.0, %v1817
        %v1819 = vpop.f32.mrb[0].mxu0
        %v1820 = vpop.f32.mrb[0].mxu0
        %v1821 = vpop.f32.mrb[0].mxu0
        %1822 = vdwg.mxu0
        %v1823 = vadd.f32 %v1722, %v1777
        %v1824 = vadd.f32 %v1723, %v1779
        %v1825 = vadd.f32 %v1724, %v1818
        %s1826 = scalar_lea.vmem [#allocation7], 12
        %v1827 = vld [vmem:[%s1826] sm:$0xf]
        %v1828 = vpack.c.bf16 %v1392, %v1392
        %v1829 = vpack.c.bf16 %v1391, %v1391
        %v1830 = vpack.c.bf16 %v1390, %v1390
        %v1832 = vsel %vm431, %v1827, 0
        %v1835 = vsel %vm435, %v1828, 0
        %v1838 = vsel %vm435, %v1829, 0
        %v1841 = vsel %vm435, %v1830, 0
        %1843 = vmatprep.subr.bf16.mxu0 %v1838
        %1844 = vmatpush1.bf16.msra.mxu0 %v1835
        %1845 = vmatprep.subr.bf16.mxu0 0
        %1846 = vmatpush1.bf16.msra.mxu0 0
        %1847 = vmatprep.subr.bf16.mxu0 0
        %1848 = vmatpush1.bf16.msra.mxu0 0
        %1849 = vmatprep.subr.bf16.mxu0 0
        %1850 = vmatpush1.bf16.msra.mxu0 0
        %1851 = vmatprep.subr.bf16.mxu0 0
        %1852 = vmatpush1.bf16.msra.mxu0 0
        %1853 = vmatprep.subr.bf16.mxu0 0
        %1854 = vmatpush1.bf16.msra.mxu0 0
        %1855 = vmatprep.subr.bf16.mxu0 0
        %1856 = vmatpush1.bf16.msra.mxu0 0
        %1857 = vmatprep.subr.bf16.mxu0 0
        %1858 = vmatpush1.bf16.msra.mxu0 0
        %1859 = vmatprep.subr.bf16.mxu0 0
        %1860 = vmatpush1.bf16.msra.mxu0 0
        %1861 = vmatprep.subr.bf16.mxu0 0
        %1862 = vmatpush1.bf16.msra.mxu0 0
        %1863 = vmatprep.subr.bf16.mxu0 0
        %1864 = vmatpush1.bf16.msra.mxu0 0
        %1865 = vmatprep.subr.bf16.mxu0 0
        %1866 = vmatpush1.bf16.msra.mxu0 0
        %1867 = vmatprep.subr.bf16.mxu0 0
        %1868 = vmatpush1.bf16.msra.mxu0 0
        %1869 = vmatprep.subr.bf16.mxu0 0
        %1870 = vmatpush1.bf16.msra.mxu0 0
        %1871 = vmatprep.subr.bf16.mxu0 0
        %1872 = vmatpush1.bf16.msra.mxu0 0
        %1873 = vmatprep.subr.bf16.mxu0 0
        %1874 = vmatpush1.bf16.msra.mxu0 0
        %1875 = vmatprep.mubr.bf16.mxu0 0
        %1876 = vmatmul.mubr.bf16.gmra.mrb[0].mxu0 %v1832
        %v1877 = vpop.f32.mrb[0].mxu0
        %v1878 = vadd.f32 0.0, %v1877
        %v1879 = vpop.f32.mrb[0].mxu0
        %v1880 = vadd.f32 0.0, %v1879
        %v1881 = vpop.f32.mrb[0].mxu0
        %v1882 = vpop.f32.mrb[0].mxu0
        %1883 = vdwg.mxu0
        %1884 = vmatprep.subr.bf16.mxu0 0
        %1885 = vmatpush1.bf16.msra.mxu0 %v1841
        %1886 = vmatprep.subr.bf16.mxu0 0
        %1887 = vmatpush1.bf16.msra.mxu0 0
        %1888 = vmatprep.subr.bf16.mxu0 0
        %1889 = vmatpush1.bf16.msra.mxu0 0
        %1890 = vmatprep.subr.bf16.mxu0 0
        %1891 = vmatpush1.bf16.msra.mxu0 0
        %1892 = vmatprep.subr.bf16.mxu0 0
        %1893 = vmatpush1.bf16.msra.mxu0 0
        %1894 = vmatprep.subr.bf16.mxu0 0
        %1895 = vmatpush1.bf16.msra.mxu0 0
        %1896 = vmatprep.subr.bf16.mxu0 0
        %1897 = vmatpush1.bf16.msra.mxu0 0
        %1898 = vmatprep.subr.bf16.mxu0 0
        %1899 = vmatpush1.bf16.msra.mxu0 0
        %1900 = vmatprep.subr.bf16.mxu0 0
        %1901 = vmatpush1.bf16.msra.mxu0 0
        %1902 = vmatprep.subr.bf16.mxu0 0
        %1903 = vmatpush1.bf16.msra.mxu0 0
        %1904 = vmatprep.subr.bf16.mxu0 0
        %1905 = vmatpush1.bf16.msra.mxu0 0
        %1906 = vmatprep.subr.bf16.mxu0 0
        %1907 = vmatpush1.bf16.msra.mxu0 0
        %1908 = vmatprep.subr.bf16.mxu0 0
        %1909 = vmatpush1.bf16.msra.mxu0 0
        %1910 = vmatprep.subr.bf16.mxu0 0
        %1911 = vmatpush1.bf16.msra.mxu0 0
        %1912 = vmatprep.subr.bf16.mxu0 0
        %1913 = vmatpush1.bf16.msra.mxu0 0
        %1914 = vmatprep.subr.bf16.mxu0 0
        %1915 = vmatpush1.bf16.msra.mxu0 0
        %1916 = vmatprep.mubr.bf16.mxu0 0
        %1917 = vmatmul.mubr.bf16.gmra.mrb[0].mxu0 %v1832
        %v1918 = vpop.f32.mrb[0].mxu0
        %v1919 = vadd.f32 0.0, %v1918
        %v1920 = vpop.f32.mrb[0].mxu0
        %v1921 = vpop.f32.mrb[0].mxu0
        %v1922 = vpop.f32.mrb[0].mxu0
        %1923 = vdwg.mxu0
        %v1924 = vadd.f32 %v1823, %v1878
        %v1925 = vadd.f32 %v1824, %v1880
        %v1926 = vadd.f32 %v1825, %v1919
        %s1927 = scalar_lea.vmem [#allocation7], 20
        %v1928 = vld [vmem:[%s1927] sm:$0xf]
        %v1929 = vpack.c.bf16 %v1400, %v1400
        %v1930 = vpack.c.bf16 %v1399, %v1399
        %v1931 = vpack.c.bf16 %v1401, %v1401
        %v1933 = vsel %vm431, %v1928, 0
        %v1936 = vsel %vm435, %v1929, 0
        %v1939 = vsel %vm435, %v1930, 0
        %v1942 = vsel %vm435, %v1931, 0
        %1944 = vmatprep.subr.bf16.mxu0 %v1939
        %1945 = vmatpush1.bf16.msra.mxu0 %v1936
        %1946 = vmatprep.subr.bf16.mxu0 0
        %1947 = vmatpush1.bf16.msra.mxu0 0
        %1948 = vmatprep.subr.bf16.mxu0 0
        %1949 = vmatpush1.bf16.msra.mxu0 0
        %1950 = vmatprep.subr.bf16.mxu0 0
        %1951 = vmatpush1.bf16.msra.mxu0 0
        %1952 = vmatprep.subr.bf16.mxu0 0
        %1953 = vmatpush1.bf16.msra.mxu0 0
        %1954 = vmatprep.subr.bf16.mxu0 0
        %1955 = vmatpush1.bf16.msra.mxu0 0
        %1956 = vmatprep.subr.bf16.mxu0 0
        %1957 = vmatpush1.bf16.msra.mxu0 0
        %1958 = vmatprep.subr.bf16.mxu0 0
        %1959 = vmatpush1.bf16.msra.mxu0 0
        %1960 = vmatprep.subr.bf16.mxu0 0
        %1961 = vmatpush1.bf16.msra.mxu0 0
        %1962 = vmatprep.subr.bf16.mxu0 0
        %1963 = vmatpush1.bf16.msra.mxu0 0
        %1964 = vmatprep.subr.bf16.mxu0 0
        %1965 = vmatpush1.bf16.msra.mxu0 0
        %1966 = vmatprep.subr.bf16.mxu0 0
        %1967 = vmatpush1.bf16.msra.mxu0 0
        %1968 = vmatprep.subr.bf16.mxu0 0
        %1969 = vmatpush1.bf16.msra.mxu0 0
        %1970 = vmatprep.subr.bf16.mxu0 0
        %1971 = vmatpush1.bf16.msra.mxu0 0
        %1972 = vmatprep.subr.bf16.mxu0 0
        %1973 = vmatpush1.bf16.msra.mxu0 0
        %1974 = vmatprep.subr.bf16.mxu0 0
        %1975 = vmatpush1.bf16.msra.mxu0 0
        %1976 = vmatprep.mubr.bf16.mxu0 0
        %1977 = vmatmul.mubr.bf16.gmra.mrb[0].mxu0 %v1933
        %v1978 = vpop.f32.mrb[0].mxu0
        %v1979 = vadd.f32 0.0, %v1978
        %v1980 = vpop.f32.mrb[0].mxu0
        %v1981 = vadd.f32 0.0, %v1980
        %v1982 = vpop.f32.mrb[0].mxu0
        %v1983 = vpop.f32.mrb[0].mxu0
        %1984 = vdwg.mxu0
        %1985 = vmatprep.subr.bf16.mxu0 0
        %1986 = vmatpush1.bf16.msra.mxu0 %v1942
        %1987 = vmatprep.subr.bf16.mxu0 0
        %1988 = vmatpush1.bf16.msra.mxu0 0
        %1989 = vmatprep.subr.bf16.mxu0 0
        %1990 = vmatpush1.bf16.msra.mxu0 0
        %1991 = vmatprep.subr.bf16.mxu0 0
        %1992 = vmatpush1.bf16.msra.mxu0 0
        %1993 = vmatprep.subr.bf16.mxu0 0
        %1994 = vmatpush1.bf16.msra.mxu0 0
        %1995 = vmatprep.subr.bf16.mxu0 0
        %1996 = vmatpush1.bf16.msra.mxu0 0
        %1997 = vmatprep.subr.bf16.mxu0 0
        %1998 = vmatpush1.bf16.msra.mxu0 0
        %1999 = vmatprep.subr.bf16.mxu0 0
        %2000 = vmatpush1.bf16.msra.mxu0 0
        %2001 = vmatprep.subr.bf16.mxu0 0
        %2002 = vmatpush1.bf16.msra.mxu0 0
        %2003 = vmatprep.subr.bf16.mxu0 0
        %2004 = vmatpush1.bf16.msra.mxu0 0
        %2005 = vmatprep.subr.bf16.mxu0 0
        %2006 = vmatpush1.bf16.msra.mxu0 0
        %2007 = vmatprep.subr.bf16.mxu0 0
        %2008 = vmatpush1.bf16.msra.mxu0 0
        %2009 = vmatprep.subr.bf16.mxu0 0
        %2010 = vmatpush1.bf16.msra.mxu0 0
        %2011 = vmatprep.subr.bf16.mxu0 0
        %2012 = vmatpush1.bf16.msra.mxu0 0
        %2013 = vmatprep.subr.bf16.mxu0 0
        %2014 = vmatpush1.bf16.msra.mxu0 0
        %2015 = vmatprep.subr.bf16.mxu0 0
        %2016 = vmatpush1.bf16.msra.mxu0 0
        %2017 = vmatprep.mubr.bf16.mxu0 0
        %2018 = vmatmul.mubr.bf16.gmra.mrb[0].mxu0 %v1933
        %v2019 = vpop.f32.mrb[0].mxu0
        %v2020 = vadd.f32 0.0, %v2019
        %v2021 = vpop.f32.mrb[0].mxu0
        %v2022 = vpop.f32.mrb[0].mxu0
        %v2023 = vpop.f32.mrb[0].mxu0
        %2024 = vdwg.mxu0
        %v2025 = vadd.f32 %v1924, %v1979
        %v2026 = vadd.f32 %v1925, %v1981
        %v2027 = vadd.f32 %v1926, %v2020
        %s2028 = scalar_lea.vmem [#allocation7], 24
        %v2029 = vld [vmem:[%s2028] sm:$0xf]
        %v2030 = vpack.c.bf16 %v1409, %v1409
        %v2031 = vpack.c.bf16 %v1408, %v1408
        %v2032 = vpack.c.bf16 %v1410, %v1410
        %v2034 = vsel %vm431, %v2029, 0
        %v2037 = vsel %vm435, %v2030, 0
        %v2040 = vsel %vm435, %v2031, 0
        %v2043 = vsel %vm435, %v2032, 0
        %2045 = vmatprep.subr.bf16.mxu0 %v2040
        %2046 = vmatpush1.bf16.msra.mxu0 %v2037
        %2047 = vmatprep.subr.bf16.mxu0 0
        %2048 = vmatpush1.bf16.msra.mxu0 0
        %2049 = vmatprep.subr.bf16.mxu0 0
        %2050 = vmatpush1.bf16.msra.mxu0 0
        %2051 = vmatprep.subr.bf16.mxu0 0
        %2052 = vmatpush1.bf16.msra.mxu0 0
        %2053 = vmatprep.subr.bf16.mxu0 0
        %2054 = vmatpush1.bf16.msra.mxu0 0
        %2055 = vmatprep.subr.bf16.mxu0 0
        %2056 = vmatpush1.bf16.msra.mxu0 0
        %2057 = vmatprep.subr.bf16.mxu0 0
        %2058 = vmatpush1.bf16.msra.mxu0 0
        %2059 = vmatprep.subr.bf16.mxu0 0
        %2060 = vmatpush1.bf16.msra.mxu0 0
        %2061 = vmatprep.subr.bf16.mxu0 0
        %2062 = vmatpush1.bf16.msra.mxu0 0
        %2063 = vmatprep.subr.bf16.mxu0 0
        %2064 = vmatpush1.bf16.msra.mxu0 0
        %2065 = vmatprep.subr.bf16.mxu0 0
        %2066 = vmatpush1.bf16.msra.mxu0 0
        %2067 = vmatprep.subr.bf16.mxu0 0
        %2068 = vmatpush1.bf16.msra.mxu0 0
        %2069 = vmatprep.subr.bf16.mxu0 0
        %2070 = vmatpush1.bf16.msra.mxu0 0
        %2071 = vmatprep.subr.bf16.mxu0 0
        %2072 = vmatpush1.bf16.msra.mxu0 0
        %2073 = vmatprep.subr.bf16.mxu0 0
        %2074 = vmatpush1.bf16.msra.mxu0 0
        %2075 = vmatprep.subr.bf16.mxu0 0
        %2076 = vmatpush1.bf16.msra.mxu0 0
        %2077 = vmatprep.mubr.bf16.mxu0 0
        %2078 = vmatmul.mubr.bf16.gmra.mrb[0].mxu0 %v2034
        %v2079 = vpop.f32.mrb[0].mxu0
        %v2080 = vadd.f32 0.0, %v2079
        %v2081 = vpop.f32.mrb[0].mxu0
        %v2082 = vadd.f32 0.0, %v2081
        %v2083 = vpop.f32.mrb[0].mxu0
        %v2084 = vpop.f32.mrb[0].mxu0
        %2085 = vdwg.mxu0
        %2086 = vmatprep.subr.bf16.mxu0 0
        %2087 = vmatpush1.bf16.msra.mxu0 %v2043
        %2088 = vmatprep.subr.bf16.mxu0 0
        %2089 = vmatpush1.bf16.msra.mxu0 0
        %2090 = vmatprep.subr.bf16.mxu0 0
        %2091 = vmatpush1.bf16.msra.mxu0 0
        %2092 = vmatprep.subr.bf16.mxu0 0
        %2093 = vmatpush1.bf16.msra.mxu0 0
        %2094 = vmatprep.subr.bf16.mxu0 0
        %2095 = vmatpush1.bf16.msra.mxu0 0
        %2096 = vmatprep.subr.bf16.mxu0 0
        %2097 = vmatpush1.bf16.msra.mxu0 0
        %2098 = vmatprep.subr.bf16.mxu0 0
        %2099 = vmatpush1.bf16.msra.mxu0 0
        %2100 = vmatprep.subr.bf16.mxu0 0
        %2101 = vmatpush1.bf16.msra.mxu0 0
        %2102 = vmatprep.subr.bf16.mxu0 0
        %2103 = vmatpush1.bf16.msra.mxu0 0
        %2104 = vmatprep.subr.bf16.mxu0 0
        %2105 = vmatpush1.bf16.msra.mxu0 0
        %2106 = vmatprep.subr.bf16.mxu0 0
        %2107 = vmatpush1.bf16.msra.mxu0 0
        %2108 = vmatprep.subr.bf16.mxu0 0
        %2109 = vmatpush1.bf16.msra.mxu0 0
        %2110 = vmatprep.subr.bf16.mxu0 0
        %2111 = vmatpush1.bf16.msra.mxu0 0
        %2112 = vmatprep.subr.bf16.mxu0 0
        %2113 = vmatpush1.bf16.msra.mxu0 0
        %2114 = vmatprep.subr.bf16.mxu0 0
        %2115 = vmatpush1.bf16.msra.mxu0 0
        %2116 = vmatprep.subr.bf16.mxu0 0
        %2117 = vmatpush1.bf16.msra.mxu0 0
        %2118 = vmatprep.mubr.bf16.mxu0 0
        %2119 = vmatmul.mubr.bf16.gmra.mrb[0].mxu0 %v2034
        %v2120 = vpop.f32.mrb[0].mxu0
        %v2121 = vadd.f32 0.0, %v2120
        %v2122 = vpop.f32.mrb[0].mxu0
        %v2123 = vpop.f32.mrb[0].mxu0
        %v2124 = vpop.f32.mrb[0].mxu0
        %2125 = vdwg.mxu0
        %v2126 = vadd.f32 %v2025, %v2080
        %v2127 = vadd.f32 %v2026, %v2082
        %v2128 = vadd.f32 %v2027, %v2121
        %s2129 = scalar_lea.vmem [#allocation7], 28
        %v2130 = vld [vmem:[%s2129] sm:$0xf]
        %v2131 = vpack.c.bf16 %v1418, %v1418
        %v2132 = vpack.c.bf16 %v1417, %v1417
        %v2133 = vpack.c.bf16 %v1419, %v1419
        %v2135 = vsel %vm431, %v2130, 0
        %v2138 = vsel %vm435, %v2131, 0
        %v2141 = vsel %vm435, %v2132, 0
        %v2144 = vsel %vm435, %v2133, 0
        %2146 = vmatprep.subr.bf16.mxu0 %v2141
        %2147 = vmatpush1.bf16.msra.mxu0 %v2138
        %2148 = vmatprep.subr.bf16.mxu0 0
        %2149 = vmatpush1.bf16.msra.mxu0 0
        %2150 = vmatprep.subr.bf16.mxu0 0
        %2151 = vmatpush1.bf16.msra.mxu0 0
        %2152 = vmatprep.subr.bf16.mxu0 0
        %2153 = vmatpush1.bf16.msra.mxu0 0
        %2154 = vmatprep.subr.bf16.mxu0 0
        %2155 = vmatpush1.bf16.msra.mxu0 0
        %2156 = vmatprep.subr.bf16.mxu0 0
        %2157 = vmatpush1.bf16.msra.mxu0 0
        %2158 = vmatprep.subr.bf16.mxu0 0
        %2159 = vmatpush1.bf16.msra.mxu0 0
        %2160 = vmatprep.subr.bf16.mxu0 0
        %2161 = vmatpush1.bf16.msra.mxu0 0
        %2162 = vmatprep.subr.bf16.mxu0 0
        %2163 = vmatpush1.bf16.msra.mxu0 0
        %2164 = vmatprep.subr.bf16.mxu0 0
        %2165 = vmatpush1.bf16.msra.mxu0 0
        %2166 = vmatprep.subr.bf16.mxu0 0
        %2167 = vmatpush1.bf16.msra.mxu0 0
        %2168 = vmatprep.subr.bf16.mxu0 0
        %2169 = vmatpush1.bf16.msra.mxu0 0
        %2170 = vmatprep.subr.bf16.mxu0 0
        %2171 = vmatpush1.bf16.msra.mxu0 0
        %2172 = vmatprep.subr.bf16.mxu0 0
        %2173 = vmatpush1.bf16.msra.mxu0 0
        %2174 = vmatprep.subr.bf16.mxu0 0
        %2175 = vmatpush1.bf16.msra.mxu0 0
        %2176 = vmatprep.subr.bf16.mxu0 0
        %2177 = vmatpush1.bf16.msra.mxu0 0
        %2178 = vmatprep.mubr.bf16.mxu0 0
        %2179 = vmatmul.mubr.bf16.gmra.mrb[0].mxu0 %v2135
        %v2180 = vpop.f32.mrb[0].mxu0
        %v2181 = vadd.f32 0.0, %v2180
        %v2182 = vpop.f32.mrb[0].mxu0
        %v2183 = vadd.f32 0.0, %v2182
        %v2184 = vpop.f32.mrb[0].mxu0
        %v2185 = vpop.f32.mrb[0].mxu0
        %2186 = vdwg.mxu0
        %2187 = vmatprep.subr.bf16.mxu0 0
        %2188 = vmatpush1.bf16.msra.mxu0 %v2144
        %2189 = vmatprep.subr.bf16.mxu0 0
        %2190 = vmatpush1.bf16.msra.mxu0 0
        %2191 = vmatprep.subr.bf16.mxu0 0
        %2192 = vmatpush1.bf16.msra.mxu0 0
        %2193 = vmatprep.subr.bf16.mxu0 0
        %2194 = vmatpush1.bf16.msra.mxu0 0
        %2195 = vmatprep.subr.bf16.mxu0 0
        %2196 = vmatpush1.bf16.msra.mxu0 0
        %2197 = vmatprep.subr.bf16.mxu0 0
        %2198 = vmatpush1.bf16.msra.mxu0 0
        %2199 = vmatprep.subr.bf16.mxu0 0
        %2200 = vmatpush1.bf16.msra.mxu0 0
        %2201 = vmatprep.subr.bf16.mxu0 0
        %2202 = vmatpush1.bf16.msra.mxu0 0
        %2203 = vmatprep.subr.bf16.mxu0 0
        %2204 = vmatpush1.bf16.msra.mxu0 0
        %2205 = vmatprep.subr.bf16.mxu0 0
        %2206 = vmatpush1.bf16.msra.mxu0 0
        %2207 = vmatprep.subr.bf16.mxu0 0
        %2208 = vmatpush1.bf16.msra.mxu0 0
        %2209 = vmatprep.subr.bf16.mxu0 0
        %2210 = vmatpush1.bf16.msra.mxu0 0
        %2211 = vmatprep.subr.bf16.mxu0 0
        %2212 = vmatpush1.bf16.msra.mxu0 0
        %2213 = vmatprep.subr.bf16.mxu0 0
        %2214 = vmatpush1.bf16.msra.mxu0 0
        %2215 = vmatprep.subr.bf16.mxu0 0
        %2216 = vmatpush1.bf16.msra.mxu0 0
        %2217 = vmatprep.subr.bf16.mxu0 0
        %2218 = vmatpush1.bf16.msra.mxu0 0
        %2219 = vmatprep.mubr.bf16.mxu0 0
        %2220 = vmatmul.mubr.bf16.gmra.mrb[0].mxu0 %v2135
        %v2221 = vpop.f32.mrb[0].mxu0
        %v2222 = vadd.f32 0.0, %v2221
        %v2223 = vpop.f32.mrb[0].mxu0
        %v2224 = vpop.f32.mrb[0].mxu0
        %v2225 = vpop.f32.mrb[0].mxu0
        %2226 = vdwg.mxu0
        %v2227 = vadd.f32 %v2126, %v2181
        %v2228 = vadd.f32 %v2127, %v2183
        %v2229 = vadd.f32 %v2128, %v2222
        %s2230 = scalar_lea.vmem [#allocation7], 32
        %v2231 = vld [vmem:[%s2230] sm:$0xf]
        %v2232 = vpack.c.bf16 %v1427, %v1427
        %v2233 = vpack.c.bf16 %v1426, %v1426
        %v2234 = vpack.c.bf16 %v1428, %v1428
        %v2236 = vsel %vm431, %v2231, 0
        %v2239 = vsel %vm435, %v2232, 0
        %v2242 = vsel %vm435, %v2233, 0
        %v2245 = vsel %vm435, %v2234, 0
        %2247 = vmatprep.subr.bf16.mxu0 %v2242
        %2248 = vmatpush1.bf16.msra.mxu0 %v2239
        %2249 = vmatprep.subr.bf16.mxu0 0
        %2250 = vmatpush1.bf16.msra.mxu0 0
        %2251 = vmatprep.subr.bf16.mxu0 0
        %2252 = vmatpush1.bf16.msra.mxu0 0
        %2253 = vmatprep.subr.bf16.mxu0 0
        %2254 = vmatpush1.bf16.msra.mxu0 0
        %2255 = vmatprep.subr.bf16.mxu0 0
        %2256 = vmatpush1.bf16.msra.mxu0 0
        %2257 = vmatprep.subr.bf16.mxu0 0
        %2258 = vmatpush1.bf16.msra.mxu0 0
        %2259 = vmatprep.subr.bf16.mxu0 0
        %2260 = vmatpush1.bf16.msra.mxu0 0
        %2261 = vmatprep.subr.bf16.mxu0 0
        %2262 = vmatpush1.bf16.msra.mxu0 0
        %2263 = vmatprep.subr.bf16.mxu0 0
        %2264 = vmatpush1.bf16.msra.mxu0 0
        %2265 = vmatprep.subr.bf16.mxu0 0
        %2266 = vmatpush1.bf16.msra.mxu0 0
        %2267 = vmatprep.subr.bf16.mxu0 0
        %2268 = vmatpush1.bf16.msra.mxu0 0
        %2269 = vmatprep.subr.bf16.mxu0 0
        %2270 = vmatpush1.bf16.msra.mxu0 0
        %2271 = vmatprep.subr.bf16.mxu0 0
        %2272 = vmatpush1.bf16.msra.mxu0 0
        %2273 = vmatprep.subr.bf16.mxu0 0
        %2274 = vmatpush1.bf16.msra.mxu0 0
        %2275 = vmatprep.subr.bf16.mxu0 0
        %2276 = vmatpush1.bf16.msra.mxu0 0
        %2277 = vmatprep.subr.bf16.mxu0 0
        %2278 = vmatpush1.bf16.msra.mxu0 0
        %2279 = vmatprep.mubr.bf16.mxu0 0
        %2280 = vmatmul.mubr.bf16.gmra.mrb[0].mxu0 %v2236
        %v2281 = vpop.f32.mrb[0].mxu0
        %v2282 = vadd.f32 0.0, %v2281
        %v2283 = vpop.f32.mrb[0].mxu0
        %v2284 = vadd.f32 0.0, %v2283
        %v2285 = vpop.f32.mrb[0].mxu0
        %v2286 = vpop.f32.mrb[0].mxu0
        %2287 = vdwg.mxu0
        %2288 = vmatprep.subr.bf16.mxu0 0
        %2289 = vmatpush1.bf16.msra.mxu0 %v2245
        %2290 = vmatprep.subr.bf16.mxu0 0
        %2291 = vmatpush1.bf16.msra.mxu0 0
        %2292 = vmatprep.subr.bf16.mxu0 0
        %2293 = vmatpush1.bf16.msra.mxu0 0
        %2294 = vmatprep.subr.bf16.mxu0 0
        %2295 = vmatpush1.bf16.msra.mxu0 0
        %2296 = vmatprep.subr.bf16.mxu0 0
        %2297 = vmatpush1.bf16.msra.mxu0 0
        %2298 = vmatprep.subr.bf16.mxu0 0
        %2299 = vmatpush1.bf16.msra.mxu0 0
        %2300 = vmatprep.subr.bf16.mxu0 0
        %2301 = vmatpush1.bf16.msra.mxu0 0
        %2302 = vmatprep.subr.bf16.mxu0 0
        %2303 = vmatpush1.bf16.msra.mxu0 0
        %2304 = vmatprep.subr.bf16.mxu0 0
        %2305 = vmatpush1.bf16.msra.mxu0 0
        %2306 = vmatprep.subr.bf16.mxu0 0
        %2307 = vmatpush1.bf16.msra.mxu0 0
        %2308 = vmatprep.subr.bf16.mxu0 0
        %2309 = vmatpush1.bf16.msra.mxu0 0
        %2310 = vmatprep.subr.bf16.mxu0 0
        %2311 = vmatpush1.bf16.msra.mxu0 0
        %2312 = vmatprep.subr.bf16.mxu0 0
        %2313 = vmatpush1.bf16.msra.mxu0 0
        %2314 = vmatprep.subr.bf16.mxu0 0
        %2315 = vmatpush1.bf16.msra.mxu0 0
        %2316 = vmatprep.subr.bf16.mxu0 0
        %2317 = vmatpush1.bf16.msra.mxu0 0
        %2318 = vmatprep.subr.bf16.mxu0 0
        %2319 = vmatpush1.bf16.msra.mxu0 0
        %2320 = vmatprep.mubr.bf16.mxu0 0
        %2321 = vmatmul.mubr.bf16.gmra.mrb[0].mxu0 %v2236
        %v2322 = vpop.f32.mrb[0].mxu0
        %v2323 = vadd.f32 0.0, %v2322
        %v2324 = vpop.f32.mrb[0].mxu0
        %v2325 = vpop.f32.mrb[0].mxu0
        %v2326 = vpop.f32.mrb[0].mxu0
        %2327 = vdwg.mxu0
        %v2328 = vadd.f32 %v2227, %v2282
        %v2329 = vadd.f32 %v2228, %v2284
        %v2330 = vadd.f32 %v2229, %v2323
        %v2331 = vld [vmem:[#allocation10] sm:$0xff]
        %2333 = vset.pattern.permute.xlu0 0
        %2334 = vperm.xlu0 %2333, %v2331
        %v2335 = vpop.permute.xlu0 %2334
        %v2337 = vadd.f32 %v2328, %v2335
        %v2338 = vadd.f32 %v2329, %v2335
        %v2339 = vadd.f32 %v2330, %v2335
        %v2340 = vadd.f32 %v2337, %v336
        %v2341 = vadd.f32 %v2338, %v337
        %v2342 = vadd.f32 %v2339, %v338
        %v2343 = vmax.f32 %v2340, 0.0
        %v2344 = vmax.f32 %v2341, 0.0
        %v2345 = vmax.f32 %v2342, 0.0
        %2346 = vst [vmem:[%s334] sm:$0xff] %v2343
        %2347 = vst [vmem:[%s334 + $0x8] sm:$0xff] %v2344
        %2348 = vst [vmem:[%s334 + $0x10] sm:$0xff] %v2345
        %s2349 = sand.u32 %s165, 1
        %s2350 = scalar_lea.sflag [#allocation4], %s2349
        %s2351 = sand.u32 %s165, 1
        %s2352 = smul.addr %s2351, 24
        %s2353 = scalar_lea.vmem [#allocation13], %s2352
        // Predicated region
        $region69: #{tpu_custom_call.1} parent=43 // pred_check
          %p2354 = pneg %p175
        $region70: #{tpu_custom_call.1} parent=43 // pred_check_branch
          %2356 = sbr.rel (%p2354) target = $region72
        $region71: #{tpu_custom_call.1} parent=43 // pred_region
          %s2358 = ssub.s32 384, 384
          %2359 = vsyncadd %s2350, %s2358
          %s2360 = smul.addr %s26, 3
          %s2361 = smul.addr %s2360, 128
          %s2362 = scalar_lea.hbm %s6, %s2361
          %s2364 = sshll.u32 %s2353, 4
          %s2365 = int_to_ptr.vmem [resolvable:$true] %s2364
          %2367 = dma.vmem_to_hbm [thread:$0]  %s2365, 384, %s2362, %s2350
        $region72: #{tpu_custom_call.1} parent=43 // pred_fallthru
          _
      $region44: #{tpu_custom_call.1} parent=5 // pred_fallthru
        _
      %p2368 = scmp.le.s32.totalorder 2, %s21
      // Predicated region
      $region73: #{tpu_custom_call.1} parent=5 // pred_check
        %p2369 = pneg %p2368
      $region74: #{tpu_custom_call.1} parent=5 // pred_check_branch
        %2371 = sbr.rel (%p2369) target = $region76
      $region75: #{tpu_custom_call.1} parent=5 // pred_region
        %s2372 = ssub.s32 %s21, 2
        // Predicated region
        $region77: #{tpu_custom_call.1} parent=75 // pred_check
          %p2373 = pneg %p181
        $region78: #{tpu_custom_call.1} parent=75 // pred_check_branch
          %2375 = sbr.rel (%p2373) target = $region80
        $region79: #{tpu_custom_call.1} parent=75 // pred_region
          %s2376 = sand.u32 %s166, 1
          %s2377 = scalar_lea.sflag [#allocation4], %s2376
          %s2378 = sand.u32 %s166, 1
          %s2379 = smul.addr %s2378, 24
          %s2380 = scalar_lea.vmem [#allocation13], %s2379
          %2381 = dma.done %s2377, 384
        $region80: #{tpu_custom_call.1} parent=75 // pred_fallthru
          _
      $region76: #{tpu_custom_call.1} parent=5 // pred_fallthru
        _
    $region6: #{tpu_custom_call.1} parent=1 // loop_footer
      %s25 = sadd.s32 1, %s21
    $region7: #{tpu_custom_call.1} parent=1 // loop_footer_branch
      %20 = sbr.rel target = $region3
    $region8: #{tpu_custom_call.1} parent=1 // loop_exit
      _
    %2382 = vsyncpa [#allocation3], 1
    %s2383 = scalar_lea.sflag [#allocation3], 1
    %2384 = vsyncpa %s2383, 1
    %2385 = vsyncpa [#allocation6], 1
    %2386 = vsyncpa [#allocation9], 1
    %2387 = vsyncpa [#allocation12], 1
    %2388 = vsyncpa [#allocation4], 1
    %s2389 = scalar_lea.sflag [#allocation4], 1
    %2390 = vsyncpa %s2389, 1

</llo_original>
